<compile_context>
chip_gen: v7x
topology: tpu7x:2x2x1
jax: 0.10.0
libtpu: 0.0.40
codegen_flags: <defaults>
</compile_context>

<pallas_src>
import functools
import math

import jax
import jax.numpy as jnp
from jax import lax
from jax.experimental import pallas as pl
from jax.experimental.pallas import tpu as pltpu


def tts_kernel(
    # inputs
    emb_ref,        # (S*B, E)       bf16, time-major rows (s major, b minor)
    e_wih0_ref,     # (E, 4H)        bf16  (gate cols i,f,o,g)
    e_b0_ref,       # (1, 4H)        f32   (bih + bhh)
    e_whh0_ref,     # (H, 4H)        bf16
    e_w1_ref,       # (2H, 4H)       bf16  [Wih1; Whh1]
    e_b1_ref,       # (1, 4H)        f32
    d_w0_ref,       # (2H, 4H)       bf16  [Wih_d0; Whh_d0]
    d_b0_ref,       # (1, 4H)        f32
    d_w1_ref,       # (2H, 4H)       bf16  [Wih_d1; Whh_d1]
    d_b1_ref,       # (1, 4H)        f32
    w_att_d_ref,    # (1, H)         f32
    w_att_e_ref,    # (1, H)         f32
    b_att_ref,      # (1, 1)         f32
    w_spec_ref,     # (H, SPEC_PAD)  bf16 (zero-padded columns)
    b_spec_ref,     # (1, SPEC_PAD)  f32
    # outputs
    spec_out_ref,   # (T*B, SPEC_PAD) f32  lane-dense
    attn_out_ref,   # (T, B, S_PAD)   f32  lane-dense
    # scratch
    xw0_ref,        # (S, B, 4H)     f32  hoisted encoder layer-0 projection
    enc_ref,        # (S, B, H)      f32  encoder outputs, time-major
    ctx_ref,        # (T, B, H)      f32  decoder contexts
    *, S, B, E, H, T, S_PAD,
):
    f32 = jnp.float32
    bf16 = jnp.bfloat16

    # ---- hoist all loop-invariant weights out of the recurrences ----
    e_whh0 = e_whh0_ref[...]
    e_w1, e_b1 = e_w1_ref[...], e_b1_ref[...]
    d_w0, d_b0 = d_w0_ref[...], d_b0_ref[...]
    d_w1, d_b1 = d_w1_ref[...], d_b1_ref[...]
    w_att_d = w_att_d_ref[...]                                  # (1, H)
    w_att_e = w_att_e_ref[...]                                  # (1, H)
    b_att = b_att_ref[...]                                      # (1, 1)

    # encoder layer-0 input projection: one big MXU matmul, outside the loop,
    # stored (S, B, 4H) so the hot loop uses aligned first-axis indexing.
    xw0_ref[...] = (
        jnp.dot(emb_ref[...], e_wih0_ref[...], preferred_element_type=f32)
        + e_b0_ref[...]).reshape(S, B, 4 * H)

    def gates_to_hc(gates, c):
        # gate columns pre-permuted to (i, f, o, g) in the wrapper:
        # sigmoid over 3H lanes, tanh over H lanes only (halves EUP work).
        sig = jax.nn.sigmoid(gates[:, :3 * H])
        i = sig[:, 0 * H:1 * H]
        f = sig[:, 1 * H:2 * H]
        o = sig[:, 2 * H:3 * H]
        g = jnp.tanh(gates[:, 3 * H:])
        c_new = f * c + i * g
        h_new = o * jnp.tanh(c_new)
        return h_new, c_new

    zero_f = jnp.zeros((B, H), f32)
    zero_b = jnp.zeros((B, H), bf16)

    # ---------------- encoder: 2-layer LSTM over the sequence ----------------
    def enc_step(t, carry):
        h0, c0, h1, c1 = carry                                  # h bf16, c f32
        g0 = xw0_ref[t] + jnp.dot(h0, e_whh0, preferred_element_type=f32)
        h0n, c0n = gates_to_hc(g0, c0)
        h0b = h0n.astype(bf16)
        xh1 = jnp.concatenate([h0b, h1], axis=-1)               # (B, 2H) bf16
        g1 = jnp.dot(xh1, e_w1, preferred_element_type=f32) + e_b1
        h1n, c1n = gates_to_hc(g1, c1)
        enc_ref[t] = h1n                                        # (B, H) f32
        return (h0b, c0n, h1n.astype(bf16), c1n)

    lax.fori_loop(0, S, enc_step, (zero_b, zero_f, zero_b, zero_f),
                  unroll=min(S, 8))

    # encoder part of the attention logits, assembled ONCE in (B, S_PAD) lane
    # layout; padded source lanes get -1e30 so softmax assigns them 0.
    esc_cols = [jnp.sum(enc_ref[s] * w_att_e, axis=-1, keepdims=True)
                for s in range(S)]                              # S x (B, 1)
    if S_PAD > S:
        esc_cols.append(jnp.full((B, S_PAD - S), -1e30, dtype=f32))
    escore = jnp.concatenate(esc_cols, axis=-1) + b_att         # (B, S_PAD)

    # ---------------- decoder: max_frames attention steps ----------------
    def dec_step(t, carry):
        dh0, dc0, dh1, dc1, ctx_in = carry                      # h/ctx bf16, c f32
        xh0 = jnp.concatenate([ctx_in, dh0], axis=-1)           # (B, 2H) bf16
        g0 = jnp.dot(xh0, d_w0, preferred_element_type=f32) + d_b0
        dh0n, dc0n = gates_to_hc(g0, dc0)
        dh0b = dh0n.astype(bf16)
        xh1 = jnp.concatenate([dh0b, dh1], axis=-1)
        g1 = jnp.dot(xh1, d_w1, preferred_element_type=f32) + d_b1
        dh1n, dc1n = gates_to_hc(g1, dc1)

        # attention scores / softmax, all in lane-dense (B, S_PAD) layout
        dscore = jnp.sum(dh1n * w_att_d, axis=-1, keepdims=True)   # (B, 1)
        scores = escore + dscore                                   # (B, S_PAD)
        m = jnp.max(scores, axis=-1, keepdims=True)
        e = jnp.exp(scores - m)
        attn = e * pl.reciprocal(jnp.sum(e, axis=-1, keepdims=True), approx=True)
        attn_out_ref[t] = attn                                     # full-lane store

        # context[b, :] = sum_s attn[b, s] * enc[s, b, :]
        # VPU FMA accumulation in the time-major layout (B is tiny, MXU would
        # be <2% occupied; also removes the (B,S,H) relayout scratch).
        context = jnp.zeros((B, H), f32)
        for s in range(S):
            context = context + attn[:, s:s + 1] * enc_ref[s]
        ctx_ref[t] = context
        return (dh0b, dc0n, dh1n.astype(bf16), dc1n, context.astype(bf16))

    lax.fori_loop(0, T, dec_step, (zero_b, zero_f, zero_b, zero_f, zero_b),
                  unroll=min(T, 8))

    # ---- spectrogram head: ONE (T*B, H) @ (H, SPEC_PAD) matmul, lane-dense ----
    ctx_all = ctx_ref[...].reshape(T * B, H).astype(bf16)
    spec_out_ref[...] = (
        jnp.dot(ctx_all, w_spec_ref[...], preferred_element_type=f32)
        + b_spec_ref[...])


def init_params(key, V, E, H, SPEC):
    """Deterministic synthetic parameters mirroring the PyTorch module shapes."""
    ks = iter(jax.random.split(key, 40))

    def unif(shape, scale):
        return jax.random.uniform(next(ks), shape, jnp.float32, -scale, scale)

    kH = 1.0 / math.sqrt(H)
    p = {"embedding": jax.random.normal(next(ks), (V, E), jnp.float32)}

    def lstm_layer(in_size):
        return dict(wih=unif((4 * H, in_size), kH),
                    whh=unif((4 * H, H), kH),
                    bih=unif((4 * H,), kH),
                    bhh=unif((4 * H,), kH))

    p["enc_l0"] = lstm_layer(E)
    p["enc_l1"] = lstm_layer(H)
    p["dec_l0"] = lstm_layer(H)
    p["dec_l1"] = lstm_layer(H)

    k_att = 1.0 / math.sqrt(2 * H)
    p["attn_w"] = unif((1, 2 * H), k_att)
    p["attn_b"] = unif((1,), k_att)
    p["spec_w"] = unif((SPEC, H), kH)
    p["spec_b"] = unif((SPEC,), kH)
    p["stop_w"] = unif((1, H), kH)     # unused (see TODO(synk) at top)
    p["stop_b"] = unif((1,), kH)
    return p


def prefix_to_prefix_tts(x, params, max_frames):
    B, S = x.shape
    _, E = params["embedding"].shape
    H = params["enc_l0"]["whh"].shape[1]
    SPEC = params["spec_w"].shape[0]
    T = max_frames
    bf16, f32 = jnp.bfloat16, jnp.float32

    B_pad = ((B + 7) // 8) * 8            # full-sublane batch tiles
    S_pad = ((S + 127) // 128) * 128      # lane-dense attention output
    SPEC_pad = ((SPEC + 127) // 128) * 128  # lane-dense spectrogram output

    # embedding lookup (glue); pad batch, time-major rows (s major, b minor)
    emb = jnp.take(params["embedding"], x, axis=0)              # (B, S, E)
    emb = jnp.pad(emb, ((0, B_pad - B), (0, 0), (0, 0)))
    emb2d = jnp.transpose(emb, (1, 0, 2)).reshape(S * B_pad, E).astype(bf16)

    def reorder(w):
        # PyTorch gate blocks (i, f, g, o) along axis 0  ->  (i, f, o, g)
        i, f, g, o = jnp.split(w, 4, axis=0)
        return jnp.concatenate([i, f, o, g], axis=0)

    def fused_w(lp):   # stack [Wih; Whh] on the contraction axis (bf16 for MXU)
        return jnp.concatenate(
            [reorder(lp["wih"]).T, reorder(lp["whh"]).T], axis=0).astype(bf16)

    def fused_b(lp):
        return (reorder(lp["bih"]) + reorder(lp["bhh"])).reshape(1, 4 * H).astype(f32)

    e_wih0 = reorder(params["enc_l0"]["wih"]).T.astype(bf16)    # (E, 4H)
    e_whh0 = reorder(params["enc_l0"]["whh"]).T.astype(bf16)    # (H, 4H)
    e_b0 = fused_b(params["enc_l0"])

    attn_w = params["attn_w"]                                   # (1, 2H)
    w_att_d = attn_w[:, :H].astype(f32)                         # (1, H)
    w_att_e = attn_w[:, H:].astype(f32)                         # (1, H)
    b_att = params["attn_b"].reshape(1, 1).astype(f32)

    w_spec = jnp.pad(params["spec_w"].T,
                     ((0, 0), (0, SPEC_pad - SPEC))).astype(bf16)    # (H, SPEC_pad)
    b_spec = jnp.pad(params["spec_b"].reshape(1, SPEC),
                     ((0, 0), (0, SPEC_pad - SPEC))).astype(f32)     # (1, SPEC_pad)

    kernel = functools.partial(tts_kernel, S=S, B=B_pad, E=E, H=H, T=T, S_PAD=S_pad)
    vmem = pl.BlockSpec(memory_space=pltpu.MemorySpace.VMEM)

    spec_flat, attn_tbs = pl.pallas_call(
        kernel,
        out_shape=(
            jax.ShapeDtypeStruct((T * B_pad, SPEC_pad), f32),
            jax.ShapeDtypeStruct((T, B_pad, S_pad), f32),
        ),
        in_specs=[vmem] * 15,
        out_specs=(vmem, vmem),
        scratch_shapes=[
            pltpu.VMEM((S, B_pad, 4 * H), f32),   # hoisted layer-0 projection
            pltpu.VMEM((S, B_pad, H), f32),       # encoder outputs (time-major)
            pltpu.VMEM((T, B_pad, H), f32),       # decoder contexts
        ],
        compiler_params=pltpu.CompilerParams(
            # 64 MiB: fine on v5e/v6e (128 MiB physical); v7x needs a re-derived
            # streaming plan at production shapes (see TODO(synk) at top).
            vmem_limit_bytes=64 * 1024 * 1024),
    )(
        emb2d,
        e_wih0, e_b0, e_whh0,
        fused_w(params["enc_l1"]), fused_b(params["enc_l1"]),
        fused_w(params["dec_l0"]), fused_b(params["dec_l0"]),
        fused_w(params["dec_l1"]), fused_b(params["dec_l1"]),
        w_att_d, w_att_e, b_att,
        w_spec, b_spec,
    )

    # back to PyTorch conventions: (B, T, SPEC) and (B, T*S, 1)
    spec_tbs = spec_flat.reshape(T, B_pad, SPEC_pad)[:, :B, :SPEC]
    spectrograms = jnp.transpose(spec_tbs, (1, 0, 2))                  # (B, T, SPEC)
    attention = jnp.transpose(attn_tbs[:, :B, :S], (1, 0, 2)).reshape(B, T * S, 1)
    return spectrograms, attention


if __name__ == "__main__":
    # small shapes consistent with the module (vocab/embed/hidden/spec scaled down)
    V, E, H, SPEC = 32, 32, 32, 16
    B, S, T = 2, 8, 6

    key = jax.random.PRNGKey(0)
    pkey, xkey = jax.random.split(key)
    params = init_params(pkey, V, E, H, SPEC)
    x = jax.random.randint(xkey, (B, S), 0, V, dtype=jnp.int32)

    spectrograms, attention = prefix_to_prefix_tts(x, params, T)
    jax.block_until_ready((spectrograms, attention))

    assert spectrograms.shape == (B, T, SPEC)
    assert attention.shape == (B, T * S, 1)
    # attention weights are a softmax over the source sequence -> rows sum to ~1
    # (tolerance covers the approximate-reciprocal softmax denominator)
    sums = attention.reshape(B, T, S).sum(-1)
    assert bool(jnp.all(jnp.abs(sums - 1.0) < 5e-3))
    assert bool(jnp.all(jnp.isfinite(spectrograms)))

    print("KERNEL_OK")
</pallas_src>

<mosaic_0001>
module attributes {stable_mosaic.version = 11 : i64} {
  func.func @tts_kernel(%arg0: memref<64x32xbf16, #tpu.memory_space<vmem>>, %arg1: memref<32x128xbf16, #tpu.memory_space<vmem>>, %arg2: memref<1x128xf32, #tpu.memory_space<vmem>>, %arg3: memref<32x128xbf16, #tpu.memory_space<vmem>>, %arg4: memref<64x128xbf16, #tpu.memory_space<vmem>>, %arg5: memref<1x128xf32, #tpu.memory_space<vmem>>, %arg6: memref<64x128xbf16, #tpu.memory_space<vmem>>, %arg7: memref<1x128xf32, #tpu.memory_space<vmem>>, %arg8: memref<64x128xbf16, #tpu.memory_space<vmem>>, %arg9: memref<1x128xf32, #tpu.memory_space<vmem>>, %arg10: memref<1x32xf32, #tpu.memory_space<vmem>>, %arg11: memref<1x32xf32, #tpu.memory_space<vmem>>, %arg12: memref<1x1xf32, #tpu.memory_space<vmem>>, %arg13: memref<32x128xbf16, #tpu.memory_space<vmem>>, %arg14: memref<1x128xf32, #tpu.memory_space<vmem>>, %arg15: memref<48x128xf32, #tpu.memory_space<vmem>>, %arg16: memref<6x8x128xf32, #tpu.memory_space<vmem>>, %arg17: memref<8x8x128xf32, #tpu.memory_space<vmem>>, %arg18: memref<8x8x32xf32, #tpu.memory_space<vmem>>, %arg19: memref<6x8x32xf32, #tpu.memory_space<vmem>>) attributes {dimension_semantics = [], scalar_prefetch = 0 : i64, scratch_operands = 3 : i64, tpu.core_type = #tpu.core_type<tc>} {
    %c0 = arith.constant 0 : index
    %c0_0 = arith.constant 0 : index
    %0 = vector.load %arg3[%c0, %c0_0] : memref<32x128xbf16, #tpu.memory_space<vmem>>, vector<32x128xbf16>
    %c0_1 = arith.constant 0 : index
    %c0_2 = arith.constant 0 : index
    %1 = vector.load %arg4[%c0_1, %c0_2] : memref<64x128xbf16, #tpu.memory_space<vmem>>, vector<64x128xbf16>
    %c0_3 = arith.constant 0 : index
    %c0_4 = arith.constant 0 : index
    %2 = vector.load %arg5[%c0_3, %c0_4] : memref<1x128xf32, #tpu.memory_space<vmem>>, vector<1x128xf32>
    %c0_5 = arith.constant 0 : index
    %c0_6 = arith.constant 0 : index
    %3 = vector.load %arg6[%c0_5, %c0_6] : memref<64x128xbf16, #tpu.memory_space<vmem>>, vector<64x128xbf16>
    %c0_7 = arith.constant 0 : index
    %c0_8 = arith.constant 0 : index
    %4 = vector.load %arg7[%c0_7, %c0_8] : memref<1x128xf32, #tpu.memory_space<vmem>>, vector<1x128xf32>
    %c0_9 = arith.constant 0 : index
    %c0_10 = arith.constant 0 : index
    %5 = vector.load %arg8[%c0_9, %c0_10] : memref<64x128xbf16, #tpu.memory_space<vmem>>, vector<64x128xbf16>
    %c0_11 = arith.constant 0 : index
    %c0_12 = arith.constant 0 : index
    %6 = vector.load %arg9[%c0_11, %c0_12] : memref<1x128xf32, #tpu.memory_space<vmem>>, vector<1x128xf32>
    %c0_13 = arith.constant 0 : index
    %c0_14 = arith.constant 0 : index
    %7 = vector.load %arg10[%c0_13, %c0_14] : memref<1x32xf32, #tpu.memory_space<vmem>>, vector<1x32xf32>
    %c0_15 = arith.constant 0 : index
    %c0_16 = arith.constant 0 : index
    %8 = vector.load %arg11[%c0_15, %c0_16] : memref<1x32xf32, #tpu.memory_space<vmem>>, vector<1x32xf32>
    %c0_17 = arith.constant 0 : index
    %c0_18 = arith.constant 0 : index
    %9 = vector.load %arg12[%c0_17, %c0_18] : memref<1x1xf32, #tpu.memory_space<vmem>>, vector<1x1xf32>
    %c0_19 = arith.constant 0 : index
    %c0_20 = arith.constant 0 : index
    %10 = vector.load %arg0[%c0_19, %c0_20] : memref<64x32xbf16, #tpu.memory_space<vmem>>, vector<64x32xbf16>
    %c0_21 = arith.constant 0 : index
    %c0_22 = arith.constant 0 : index
    %11 = vector.load %arg1[%c0_21, %c0_22] : memref<32x128xbf16, #tpu.memory_space<vmem>>, vector<32x128xbf16>
    %cst = arith.constant dense<0.000000e+00> : vector<64x128xf32>
    %12 = tpu.matmul %10, %11, %cst {dimension_numbers = #tpu.dot_dimension_numbers<[1], [0], [0], [1], [0, 0, 1, 1], [], []>} : vector<64x32xbf16>, vector<32x128xbf16>, vector<64x128xf32> -> vector<64x128xf32>
    %c0_23 = arith.constant 0 : index
    %c0_24 = arith.constant 0 : index
    %13 = vector.load %arg2[%c0_23, %c0_24] : memref<1x128xf32, #tpu.memory_space<vmem>>, vector<1x128xf32>
    %14 = vector.broadcast %13 : vector<1x128xf32> to vector<64x128xf32>
    %15 = arith.addf %12, %14 : vector<64x128xf32>
    %16 = vector.shape_cast %15 : vector<64x128xf32> to vector<8x8x128xf32>
    %c0_25 = arith.constant 0 : index
    %c0_26 = arith.constant 0 : index
    %c0_27 = arith.constant 0 : index
    %17 = vector.load %arg17[%c0_25, %c0_26, %c0_27] : memref<8x8x128xf32, #tpu.memory_space<vmem>>, vector<8x8x128xf32>
    tpu.vector_store %arg17[%c0_25, %c0_26, %c0_27], %16 {strides = array<i32>} : memref<8x8x128xf32, #tpu.memory_space<vmem>>, vector<8x8x128xf32>,
    %cst_28 = arith.constant 0.000000e+00 : f32
    %18 = vector.broadcast %cst_28 : f32 to vector<8x32xf32>
    %cst_29 = arith.constant 0.000000e+00 : bf16
    %19 = vector.broadcast %cst_29 : bf16 to vector<8x32xbf16>
    %c0_i32 = arith.constant 0 : i32
    %20 = arith.index_cast %c0_i32 : i32 to index
    %c0_30 = arith.constant 0 : index
    %c0_31 = arith.constant 0 : index
    %21 = vector.load %arg17[%20, %c0_30, %c0_31] : memref<8x8x128xf32, #tpu.memory_space<vmem>>, vector<1x8x128xf32>
    %22 = vector.shape_cast %21 : vector<1x8x128xf32> to vector<8x128xf32>
    %cst_32 = arith.constant dense<0.000000e+00> : vector<8x128xf32>
    %23 = tpu.matmul %19, %0, %cst_32 {dimension_numbers = #tpu.dot_dimension_numbers<[1], [0], [0], [1], [0, 0, 1, 1], [], []>} : vector<8x32xbf16>, vector<32x128xbf16>, vector<8x128xf32> -> vector<8x128xf32>
    %24 = arith.addf %22, %23 : vector<8x128xf32>
    %25 = vector.extract_strided_slice %24 {offsets = [0, 0], sizes = [8, 96], strides = [1, 1]} : vector<8x128xf32> to vector<8x96xf32>
    %26 = arith.negf %25 : vector<8x96xf32>
    %27 = math.exp %26 : vector<8x96xf32>
    %cst_33 = arith.constant 1.000000e+00 : f32
    %28 = vector.broadcast %cst_33 : f32 to vector<8x96xf32>
    %29 = arith.addf %28, %27 : vector<8x96xf32>
    %30 = arith.divf %28, %29 : vector<8x96xf32>
    %31 = vector.extract_strided_slice %30 {offsets = [0, 0], sizes = [8, 32], strides = [1, 1]} : vector<8x96xf32> to vector<8x32xf32>
    %32 = vector.extract_strided_slice %30 {offsets = [0, 32], sizes = [8, 32], strides = [1, 1]} : vector<8x96xf32> to vector<8x32xf32>
    %33 = vector.extract_strided_slice %30 {offsets = [0, 64], sizes = [8, 32], strides = [1, 1]} : vector<8x96xf32> to vector<8x32xf32>
    %34 = vector.extract_strided_slice %24 {offsets = [0, 96], sizes = [8, 32], strides = [1, 1]} : vector<8x128xf32> to vector<8x32xf32>
    %35 = math.tanh %34 : vector<8x32xf32>
    %36 = arith.mulf %32, %18 : vector<8x32xf32>
    %37 = arith.mulf %31, %35 : vector<8x32xf32>
    %38 = arith.addf %36, %37 : vector<8x32xf32>
    %39 = math.tanh %38 : vector<8x32xf32>
    %40 = arith.mulf %33, %39 : vector<8x32xf32>
    %41 = arith.truncf %40 : vector<8x32xf32> to vector<8x32xbf16>
    %42 = tpu.concatenate %41, %19 in 1 : vector<8x32xbf16>, vector<8x32xbf16> -> vector<8x64xbf16>
    %cst_34 = arith.constant dense<0.000000e+00> : vector<8x128xf32>
    %43 = tpu.matmul %42, %1, %cst_34 {dimension_numbers = #tpu.dot_dimension_numbers<[1], [0], [0], [1], [0, 0, 1, 1], [], []>} : vector<8x64xbf16>, vector<64x128xbf16>, vector<8x128xf32> -> vector<8x128xf32>
    %44 = vector.broadcast %2 : vector<1x128xf32> to vector<8x128xf32>
    %45 = arith.addf %43, %44 : vector<8x128xf32>
    %46 = vector.extract_strided_slice %45 {offsets = [0, 0], sizes = [8, 96], strides = [1, 1]} : vector<8x128xf32> to vector<8x96xf32>
    %47 = arith.negf %46 : vector<8x96xf32>
    %48 = math.exp %47 : vector<8x96xf32>
    %cst_35 = arith.constant 1.000000e+00 : f32
    %49 = vector.broadcast %cst_35 : f32 to vector<8x96xf32>
    %50 = arith.addf %49, %48 : vector<8x96xf32>
    %51 = arith.divf %49, %50 : vector<8x96xf32>
    %52 = vector.extract_strided_slice %51 {offsets = [0, 0], sizes = [8, 32], strides = [1, 1]} : vector<8x96xf32> to vector<8x32xf32>
    %53 = vector.extract_strided_slice %51 {offsets = [0, 32], sizes = [8, 32], strides = [1, 1]} : vector<8x96xf32> to vector<8x32xf32>
    %54 = vector.extract_strided_slice %51 {offsets = [0, 64], sizes = [8, 32], strides = [1, 1]} : vector<8x96xf32> to vector<8x32xf32>
    %55 = vector.extract_strided_slice %45 {offsets = [0, 96], sizes = [8, 32], strides = [1, 1]} : vector<8x128xf32> to vector<8x32xf32>
    %56 = math.tanh %55 : vector<8x32xf32>
    %57 = arith.mulf %53, %18 : vector<8x32xf32>
    %58 = arith.mulf %52, %56 : vector<8x32xf32>
    %59 = arith.addf %57, %58 : vector<8x32xf32>
    %60 = math.tanh %59 : vector<8x32xf32>
    %61 = arith.mulf %54, %60 : vector<8x32xf32>
    %62 = arith.index_cast %c0_i32 : i32 to index
    %c0_36 = arith.constant 0 : index
    %c0_37 = arith.constant 0 : index
    %63 = vector.load %arg18[%62, %c0_36, %c0_37] : memref<8x8x32xf32, #tpu.memory_space<vmem>>, vector<1x8x32xf32>
    %64 = vector.shape_cast %63 : vector<1x8x32xf32> to vector<8x32xf32>
    %65 = vector.shape_cast %61 : vector<8x32xf32> to vector<1x8x32xf32>
    tpu.vector_store %arg18[%62, %c0_36, %c0_37], %65 {strides = array<i32>} : memref<8x8x32xf32, #tpu.memory_space<vmem>>, vector<1x8x32xf32>,
    %66 = arith.truncf %61 : vector<8x32xf32> to vector<8x32xbf16>
    %c1_i32 = arith.constant 1 : i32
    %67 = arith.index_cast %c1_i32 : i32 to index
    %c0_38 = arith.constant 0 : index
    %c0_39 = arith.constant 0 : index
    %68 = vector.load %arg17[%67, %c0_38, %c0_39] : memref<8x8x128xf32, #tpu.memory_space<vmem>>, vector<1x8x128xf32>
    %69 = vector.shape_cast %68 : vector<1x8x128xf32> to vector<8x128xf32>
    %cst_40 = arith.constant dense<0.000000e+00> : vector<8x128xf32>
    %70 = tpu.matmul %41, %0, %cst_40 {dimension_numbers = #tpu.dot_dimension_numbers<[1], [0], [0], [1], [0, 0, 1, 1], [], []>} : vector<8x32xbf16>, vector<32x128xbf16>, vector<8x128xf32> -> vector<8x128xf32>
    %71 = arith.addf %69, %70 : vector<8x128xf32>
    %72 = vector.extract_strided_slice %71 {offsets = [0, 0], sizes = [8, 96], strides = [1, 1]} : vector<8x128xf32> to vector<8x96xf32>
    %73 = arith.negf %72 : vector<8x96xf32>
    %74 = math.exp %73 : vector<8x96xf32>
    %cst_41 = arith.constant 1.000000e+00 : f32
    %75 = vector.broadcast %cst_41 : f32 to vector<8x96xf32>
    %76 = arith.addf %75, %74 : vector<8x96xf32>
    %77 = arith.divf %75, %76 : vector<8x96xf32>
    %78 = vector.extract_strided_slice %77 {offsets = [0, 0], sizes = [8, 32], strides = [1, 1]} : vector<8x96xf32> to vector<8x32xf32>
    %79 = vector.extract_strided_slice %77 {offsets = [0, 32], sizes = [8, 32], strides = [1, 1]} : vector<8x96xf32> to vector<8x32xf32>
    %80 = vector.extract_strided_slice %77 {offsets = [0, 64], sizes = [8, 32], strides = [1, 1]} : vector<8x96xf32> to vector<8x32xf32>
    %81 = vector.extract_strided_slice %71 {offsets = [0, 96], sizes = [8, 32], strides = [1, 1]} : vector<8x128xf32> to vector<8x32xf32>
    %82 = math.tanh %81 : vector<8x32xf32>
    %83 = arith.mulf %79, %38 : vector<8x32xf32>
    %84 = arith.mulf %78, %82 : vector<8x32xf32>
    %85 = arith.addf %83, %84 : vector<8x32xf32>
    %86 = math.tanh %85 : vector<8x32xf32>
    %87 = arith.mulf %80, %86 : vector<8x32xf32>
    %88 = arith.truncf %87 : vector<8x32xf32> to vector<8x32xbf16>
    %89 = tpu.concatenate %88, %66 in 1 : vector<8x32xbf16>, vector<8x32xbf16> -> vector<8x64xbf16>
    %cst_42 = arith.constant dense<0.000000e+00> : vector<8x128xf32>
    %90 = tpu.matmul %89, %1, %cst_42 {dimension_numbers = #tpu.dot_dimension_numbers<[1], [0], [0], [1], [0, 0, 1, 1], [], []>} : vector<8x64xbf16>, vector<64x128xbf16>, vector<8x128xf32> -> vector<8x128xf32>
    %91 = vector.broadcast %2 : vector<1x128xf32> to vector<8x128xf32>
    %92 = arith.addf %90, %91 : vector<8x128xf32>
    %93 = vector.extract_strided_slice %92 {offsets = [0, 0], sizes = [8, 96], strides = [1, 1]} : vector<8x128xf32> to vector<8x96xf32>
    %94 = arith.negf %93 : vector<8x96xf32>
    %95 = math.exp %94 : vector<8x96xf32>
    %cst_43 = arith.constant 1.000000e+00 : f32
    %96 = vector.broadcast %cst_43 : f32 to vector<8x96xf32>
    %97 = arith.addf %96, %95 : vector<8x96xf32>
    %98 = arith.divf %96, %97 : vector<8x96xf32>
    %99 = vector.extract_strided_slice %98 {offsets = [0, 0], sizes = [8, 32], strides = [1, 1]} : vector<8x96xf32> to vector<8x32xf32>
    %100 = vector.extract_strided_slice %98 {offsets = [0, 32], sizes = [8, 32], strides = [1, 1]} : vector<8x96xf32> to vector<8x32xf32>
    %101 = vector.extract_strided_slice %98 {offsets = [0, 64], sizes = [8, 32], strides = [1, 1]} : vector<8x96xf32> to vector<8x32xf32>
    %102 = vector.extract_strided_slice %92 {offsets = [0, 96], sizes = [8, 32], strides = [1, 1]} : vector<8x128xf32> to vector<8x32xf32>
    %103 = math.tanh %102 : vector<8x32xf32>
    %104 = arith.mulf %100, %59 : vector<8x32xf32>
    %105 = arith.mulf %99, %103 : vector<8x32xf32>
    %106 = arith.addf %104, %105 : vector<8x32xf32>
    %107 = math.tanh %106 : vector<8x32xf32>
    %108 = arith.mulf %101, %107 : vector<8x32xf32>
    %109 = arith.index_cast %c1_i32 : i32 to index
    %c0_44 = arith.constant 0 : index
    %c0_45 = arith.constant 0 : index
    %110 = vector.load %arg18[%109, %c0_44, %c0_45] : memref<8x8x32xf32, #tpu.memory_space<vmem>>, vector<1x8x32xf32>
    %111 = vector.shape_cast %110 : vector<1x8x32xf32> to vector<8x32xf32>
    %112 = vector.shape_cast %108 : vector<8x32xf32> to vector<1x8x32xf32>
    tpu.vector_store %arg18[%109, %c0_44, %c0_45], %112 {strides = array<i32>} : memref<8x8x32xf32, #tpu.memory_space<vmem>>, vector<1x8x32xf32>,
    %113 = arith.truncf %108 : vector<8x32xf32> to vector<8x32xbf16>
    %c2_i32 = arith.constant 2 : i32
    %114 = arith.index_cast %c2_i32 : i32 to index
    %c0_46 = arith.constant 0 : index
    %c0_47 = arith.constant 0 : index
    %115 = vector.load %arg17[%114, %c0_46, %c0_47] : memref<8x8x128xf32, #tpu.memory_space<vmem>>, vector<1x8x128xf32>
    %116 = vector.shape_cast %115 : vector<1x8x128xf32> to vector<8x128xf32>
    %cst_48 = arith.constant dense<0.000000e+00> : vector<8x128xf32>
    %117 = tpu.matmul %88, %0, %cst_48 {dimension_numbers = #tpu.dot_dimension_numbers<[1], [0], [0], [1], [0, 0, 1, 1], [], []>} : vector<8x32xbf16>, vector<32x128xbf16>, vector<8x128xf32> -> vector<8x128xf32>
    %118 = arith.addf %116, %117 : vector<8x128xf32>
    %119 = vector.extract_strided_slice %118 {offsets = [0, 0], sizes = [8, 96], strides = [1, 1]} : vector<8x128xf32> to vector<8x96xf32>
    %120 = arith.negf %119 : vector<8x96xf32>
    %121 = math.exp %120 : vector<8x96xf32>
    %cst_49 = arith.constant 1.000000e+00 : f32
    %122 = vector.broadcast %cst_49 : f32 to vector<8x96xf32>
    %123 = arith.addf %122, %121 : vector<8x96xf32>
    %124 = arith.divf %122, %123 : vector<8x96xf32>
    %125 = vector.extract_strided_slice %124 {offsets = [0, 0], sizes = [8, 32], strides = [1, 1]} : vector<8x96xf32> to vector<8x32xf32>
    %126 = vector.extract_strided_slice %124 {offsets = [0, 32], sizes = [8, 32], strides = [1, 1]} : vector<8x96xf32> to vector<8x32xf32>
    %127 = vector.extract_strided_slice %124 {offsets = [0, 64], sizes = [8, 32], strides = [1, 1]} : vector<8x96xf32> to vector<8x32xf32>
    %128 = vector.extract_strided_slice %118 {offsets = [0, 96], sizes = [8, 32], strides = [1, 1]} : vector<8x128xf32> to vector<8x32xf32>
    %129 = math.tanh %128 : vector<8x32xf32>
    %130 = arith.mulf %126, %85 : vector<8x32xf32>
    %131 = arith.mulf %125, %129 : vector<8x32xf32>
    %132 = arith.addf %130, %131 : vector<8x32xf32>
    %133 = math.tanh %132 : vector<8x32xf32>
    %134 = arith.mulf %127, %133 : vector<8x32xf32>
    %135 = arith.truncf %134 : vector<8x32xf32> to vector<8x32xbf16>
    %136 = tpu.concatenate %135, %113 in 1 : vector<8x32xbf16>, vector<8x32xbf16> -> vector<8x64xbf16>
    %cst_50 = arith.constant dense<0.000000e+00> : vector<8x128xf32>
    %137 = tpu.matmul %136, %1, %cst_50 {dimension_numbers = #tpu.dot_dimension_numbers<[1], [0], [0], [1], [0, 0, 1, 1], [], []>} : vector<8x64xbf16>, vector<64x128xbf16>, vector<8x128xf32> -> vector<8x128xf32>
    %138 = vector.broadcast %2 : vector<1x128xf32> to vector<8x128xf32>
    %139 = arith.addf %137, %138 : vector<8x128xf32>
    %140 = vector.extract_strided_slice %139 {offsets = [0, 0], sizes = [8, 96], strides = [1, 1]} : vector<8x128xf32> to vector<8x96xf32>
    %141 = arith.negf %140 : vector<8x96xf32>
    %142 = math.exp %141 : vector<8x96xf32>
    %cst_51 = arith.constant 1.000000e+00 : f32
    %143 = vector.broadcast %cst_51 : f32 to vector<8x96xf32>
    %144 = arith.addf %143, %142 : vector<8x96xf32>
    %145 = arith.divf %143, %144 : vector<8x96xf32>
    %146 = vector.extract_strided_slice %145 {offsets = [0, 0], sizes = [8, 32], strides = [1, 1]} : vector<8x96xf32> to vector<8x32xf32>
    %147 = vector.extract_strided_slice %145 {offsets = [0, 32], sizes = [8, 32], strides = [1, 1]} : vector<8x96xf32> to vector<8x32xf32>
    %148 = vector.extract_strided_slice %145 {offsets = [0, 64], sizes = [8, 32], strides = [1, 1]} : vector<8x96xf32> to vector<8x32xf32>
    %149 = vector.extract_strided_slice %139 {offsets = [0, 96], sizes = [8, 32], strides = [1, 1]} : vector<8x128xf32> to vector<8x32xf32>
    %150 = math.tanh %149 : vector<8x32xf32>
    %151 = arith.mulf %147, %106 : vector<8x32xf32>
    %152 = arith.mulf %146, %150 : vector<8x32xf32>
    %153 = arith.addf %151, %152 : vector<8x32xf32>
    %154 = math.tanh %153 : vector<8x32xf32>
    %155 = arith.mulf %148, %154 : vector<8x32xf32>
    %156 = arith.index_cast %c2_i32 : i32 to index
    %c0_52 = arith.constant 0 : index
    %c0_53 = arith.constant 0 : index
    %157 = vector.load %arg18[%156, %c0_52, %c0_53] : memref<8x8x32xf32, #tpu.memory_space<vmem>>, vector<1x8x32xf32>
    %158 = vector.shape_cast %157 : vector<1x8x32xf32> to vector<8x32xf32>
    %159 = vector.shape_cast %155 : vector<8x32xf32> to vector<1x8x32xf32>
    tpu.vector_store %arg18[%156, %c0_52, %c0_53], %159 {strides = array<i32>} : memref<8x8x32xf32, #tpu.memory_space<vmem>>, vector<1x8x32xf32>,
    %160 = arith.truncf %155 : vector<8x32xf32> to vector<8x32xbf16>
    %c3_i32 = arith.constant 3 : i32
    %161 = arith.index_cast %c3_i32 : i32 to index
    %c0_54 = arith.constant 0 : index
    %c0_55 = arith.constant 0 : index
    %162 = vector.load %arg17[%161, %c0_54, %c0_55] : memref<8x8x128xf32, #tpu.memory_space<vmem>>, vector<1x8x128xf32>
    %163 = vector.shape_cast %162 : vector<1x8x128xf32> to vector<8x128xf32>
    %cst_56 = arith.constant dense<0.000000e+00> : vector<8x128xf32>
    %164 = tpu.matmul %135, %0, %cst_56 {dimension_numbers = #tpu.dot_dimension_numbers<[1], [0], [0], [1], [0, 0, 1, 1], [], []>} : vector<8x32xbf16>, vector<32x128xbf16>, vector<8x128xf32> -> vector<8x128xf32>
    %165 = arith.addf %163, %164 : vector<8x128xf32>
    %166 = vector.extract_strided_slice %165 {offsets = [0, 0], sizes = [8, 96], strides = [1, 1]} : vector<8x128xf32> to vector<8x96xf32>
    %167 = arith.negf %166 : vector<8x96xf32>
    %168 = math.exp %167 : vector<8x96xf32>
    %cst_57 = arith.constant 1.000000e+00 : f32
    %169 = vector.broadcast %cst_57 : f32 to vector<8x96xf32>
    %170 = arith.addf %169, %168 : vector<8x96xf32>
    %171 = arith.divf %169, %170 : vector<8x96xf32>
    %172 = vector.extract_strided_slice %171 {offsets = [0, 0], sizes = [8, 32], strides = [1, 1]} : vector<8x96xf32> to vector<8x32xf32>
    %173 = vector.extract_strided_slice %171 {offsets = [0, 32], sizes = [8, 32], strides = [1, 1]} : vector<8x96xf32> to vector<8x32xf32>
    %174 = vector.extract_strided_slice %171 {offsets = [0, 64], sizes = [8, 32], strides = [1, 1]} : vector<8x96xf32> to vector<8x32xf32>
    %175 = vector.extract_strided_slice %165 {offsets = [0, 96], sizes = [8, 32], strides = [1, 1]} : vector<8x128xf32> to vector<8x32xf32>
    %176 = math.tanh %175 : vector<8x32xf32>
    %177 = arith.mulf %173, %132 : vector<8x32xf32>
    %178 = arith.mulf %172, %176 : vector<8x32xf32>
    %179 = arith.addf %177, %178 : vector<8x32xf32>
    %180 = math.tanh %179 : vector<8x32xf32>
    %181 = arith.mulf %174, %180 : vector<8x32xf32>
    %182 = arith.truncf %181 : vector<8x32xf32> to vector<8x32xbf16>
    %183 = tpu.concatenate %182, %160 in 1 : vector<8x32xbf16>, vector<8x32xbf16> -> vector<8x64xbf16>
    %cst_58 = arith.constant dense<0.000000e+00> : vector<8x128xf32>
    %184 = tpu.matmul %183, %1, %cst_58 {dimension_numbers = #tpu.dot_dimension_numbers<[1], [0], [0], [1], [0, 0, 1, 1], [], []>} : vector<8x64xbf16>, vector<64x128xbf16>, vector<8x128xf32> -> vector<8x128xf32>
    %185 = vector.broadcast %2 : vector<1x128xf32> to vector<8x128xf32>
    %186 = arith.addf %184, %185 : vector<8x128xf32>
    %187 = vector.extract_strided_slice %186 {offsets = [0, 0], sizes = [8, 96], strides = [1, 1]} : vector<8x128xf32> to vector<8x96xf32>
    %188 = arith.negf %187 : vector<8x96xf32>
    %189 = math.exp %188 : vector<8x96xf32>
    %cst_59 = arith.constant 1.000000e+00 : f32
    %190 = vector.broadcast %cst_59 : f32 to vector<8x96xf32>
    %191 = arith.addf %190, %189 : vector<8x96xf32>
    %192 = arith.divf %190, %191 : vector<8x96xf32>
    %193 = vector.extract_strided_slice %192 {offsets = [0, 0], sizes = [8, 32], strides = [1, 1]} : vector<8x96xf32> to vector<8x32xf32>
    %194 = vector.extract_strided_slice %192 {offsets = [0, 32], sizes = [8, 32], strides = [1, 1]} : vector<8x96xf32> to vector<8x32xf32>
    %195 = vector.extract_strided_slice %192 {offsets = [0, 64], sizes = [8, 32], strides = [1, 1]} : vector<8x96xf32> to vector<8x32xf32>
    %196 = vector.extract_strided_slice %186 {offsets = [0, 96], sizes = [8, 32], strides = [1, 1]} : vector<8x128xf32> to vector<8x32xf32>
    %197 = math.tanh %196 : vector<8x32xf32>
    %198 = arith.mulf %194, %153 : vector<8x32xf32>
    %199 = arith.mulf %193, %197 : vector<8x32xf32>
    %200 = arith.addf %198, %199 : vector<8x32xf32>
    %201 = math.tanh %200 : vector<8x32xf32>
    %202 = arith.mulf %195, %201 : vector<8x32xf32>
    %203 = arith.index_cast %c3_i32 : i32 to index
    %c0_60 = arith.constant 0 : index
    %c0_61 = arith.constant 0 : index
    %204 = vector.load %arg18[%203, %c0_60, %c0_61] : memref<8x8x32xf32, #tpu.memory_space<vmem>>, vector<1x8x32xf32>
    %205 = vector.shape_cast %204 : vector<1x8x32xf32> to vector<8x32xf32>
    %206 = vector.shape_cast %202 : vector<8x32xf32> to vector<1x8x32xf32>
    tpu.vector_store %arg18[%203, %c0_60, %c0_61], %206 {strides = array<i32>} : memref<8x8x32xf32, #tpu.memory_space<vmem>>, vector<1x8x32xf32>,
    %207 = arith.truncf %202 : vector<8x32xf32> to vector<8x32xbf16>
    %c4_i32 = arith.constant 4 : i32
    %208 = arith.index_cast %c4_i32 : i32 to index
    %c0_62 = arith.constant 0 : index
    %c0_63 = arith.constant 0 : index
    %209 = vector.load %arg17[%208, %c0_62, %c0_63] : memref<8x8x128xf32, #tpu.memory_space<vmem>>, vector<1x8x128xf32>
    %210 = vector.shape_cast %209 : vector<1x8x128xf32> to vector<8x128xf32>
    %cst_64 = arith.constant dense<0.000000e+00> : vector<8x128xf32>
    %211 = tpu.matmul %182, %0, %cst_64 {dimension_numbers = #tpu.dot_dimension_numbers<[1], [0], [0], [1], [0, 0, 1, 1], [], []>} : vector<8x32xbf16>, vector<32x128xbf16>, vector<8x128xf32> -> vector<8x128xf32>
    %212 = arith.addf %210, %211 : vector<8x128xf32>
    %213 = vector.extract_strided_slice %212 {offsets = [0, 0], sizes = [8, 96], strides = [1, 1]} : vector<8x128xf32> to vector<8x96xf32>
    %214 = arith.negf %213 : vector<8x96xf32>
    %215 = math.exp %214 : vector<8x96xf32>
    %cst_65 = arith.constant 1.000000e+00 : f32
    %216 = vector.broadcast %cst_65 : f32 to vector<8x96xf32>
    %217 = arith.addf %216, %215 : vector<8x96xf32>
    %218 = arith.divf %216, %217 : vector<8x96xf32>
    %219 = vector.extract_strided_slice %218 {offsets = [0, 0], sizes = [8, 32], strides = [1, 1]} : vector<8x96xf32> to vector<8x32xf32>
    %220 = vector.extract_strided_slice %218 {offsets = [0, 32], sizes = [8, 32], strides = [1, 1]} : vector<8x96xf32> to vector<8x32xf32>
    %221 = vector.extract_strided_slice %218 {offsets = [0, 64], sizes = [8, 32], strides = [1, 1]} : vector<8x96xf32> to vector<8x32xf32>
    %222 = vector.extract_strided_slice %212 {offsets = [0, 96], sizes = [8, 32], strides = [1, 1]} : vector<8x128xf32> to vector<8x32xf32>
    %223 = math.tanh %222 : vector<8x32xf32>
    %224 = arith.mulf %220, %179 : vector<8x32xf32>
    %225 = arith.mulf %219, %223 : vector<8x32xf32>
    %226 = arith.addf %224, %225 : vector<8x32xf32>
    %227 = math.tanh %226 : vector<8x32xf32>
    %228 = arith.mulf %221, %227 : vector<8x32xf32>
    %229 = arith.truncf %228 : vector<8x32xf32> to vector<8x32xbf16>
    %230 = tpu.concatenate %229, %207 in 1 : vector<8x32xbf16>, vector<8x32xbf16> -> vector<8x64xbf16>
    %cst_66 = arith.constant dense<0.000000e+00> : vector<8x128xf32>
    %231 = tpu.matmul %230, %1, %cst_66 {dimension_numbers = #tpu.dot_dimension_numbers<[1], [0], [0], [1], [0, 0, 1, 1], [], []>} : vector<8x64xbf16>, vector<64x128xbf16>, vector<8x128xf32> -> vector<8x128xf32>
    %232 = vector.broadcast %2 : vector<1x128xf32> to vector<8x128xf32>
    %233 = arith.addf %231, %232 : vector<8x128xf32>
    %234 = vector.extract_strided_slice %233 {offsets = [0, 0], sizes = [8, 96], strides = [1, 1]} : vector<8x128xf32> to vector<8x96xf32>
    %235 = arith.negf %234 : vector<8x96xf32>
    %236 = math.exp %235 : vector<8x96xf32>
    %cst_67 = arith.constant 1.000000e+00 : f32
    %237 = vector.broadcast %cst_67 : f32 to vector<8x96xf32>
    %238 = arith.addf %237, %236 : vector<8x96xf32>
    %239 = arith.divf %237, %238 : vector<8x96xf32>
    %240 = vector.extract_strided_slice %239 {offsets = [0, 0], sizes = [8, 32], strides = [1, 1]} : vector<8x96xf32> to vector<8x32xf32>
    %241 = vector.extract_strided_slice %239 {offsets = [0, 32], sizes = [8, 32], strides = [1, 1]} : vector<8x96xf32> to vector<8x32xf32>
    %242 = vector.extract_strided_slice %239 {offsets = [0, 64], sizes = [8, 32], strides = [1, 1]} : vector<8x96xf32> to vector<8x32xf32>
    %243 = vector.extract_strided_slice %233 {offsets = [0, 96], sizes = [8, 32], strides = [1, 1]} : vector<8x128xf32> to vector<8x32xf32>
    %244 = math.tanh %243 : vector<8x32xf32>
    %245 = arith.mulf %241, %200 : vector<8x32xf32>
    %246 = arith.mulf %240, %244 : vector<8x32xf32>
    %247 = arith.addf %245, %246 : vector<8x32xf32>
    %248 = math.tanh %247 : vector<8x32xf32>
    %249 = arith.mulf %242, %248 : vector<8x32xf32>
    %250 = arith.index_cast %c4_i32 : i32 to index
    %c0_68 = arith.constant 0 : index
    %c0_69 = arith.constant 0 : index
    %251 = vector.load %arg18[%250, %c0_68, %c0_69] : memref<8x8x32xf32, #tpu.memory_space<vmem>>, vector<1x8x32xf32>
    %252 = vector.shape_cast %251 : vector<1x8x32xf32> to vector<8x32xf32>
    %253 = vector.shape_cast %249 : vector<8x32xf32> to vector<1x8x32xf32>
    tpu.vector_store %arg18[%250, %c0_68, %c0_69], %253 {strides = array<i32>} : memref<8x8x32xf32, #tpu.memory_space<vmem>>, vector<1x8x32xf32>,
    %254 = arith.truncf %249 : vector<8x32xf32> to vector<8x32xbf16>
    %c5_i32 = arith.constant 5 : i32
    %255 = arith.index_cast %c5_i32 : i32 to index
    %c0_70 = arith.constant 0 : index
    %c0_71 = arith.constant 0 : index
    %256 = vector.load %arg17[%255, %c0_70, %c0_71] : memref<8x8x128xf32, #tpu.memory_space<vmem>>, vector<1x8x128xf32>
    %257 = vector.shape_cast %256 : vector<1x8x128xf32> to vector<8x128xf32>
    %cst_72 = arith.constant dense<0.000000e+00> : vector<8x128xf32>
    %258 = tpu.matmul %229, %0, %cst_72 {dimension_numbers = #tpu.dot_dimension_numbers<[1], [0], [0], [1], [0, 0, 1, 1], [], []>} : vector<8x32xbf16>, vector<32x128xbf16>, vector<8x128xf32> -> vector<8x128xf32>
    %259 = arith.addf %257, %258 : vector<8x128xf32>
    %260 = vector.extract_strided_slice %259 {offsets = [0, 0], sizes = [8, 96], strides = [1, 1]} : vector<8x128xf32> to vector<8x96xf32>
    %261 = arith.negf %260 : vector<8x96xf32>
    %262 = math.exp %261 : vector<8x96xf32>
    %cst_73 = arith.constant 1.000000e+00 : f32
    %263 = vector.broadcast %cst_73 : f32 to vector<8x96xf32>
    %264 = arith.addf %263, %262 : vector<8x96xf32>
    %265 = arith.divf %263, %264 : vector<8x96xf32>
    %266 = vector.extract_strided_slice %265 {offsets = [0, 0], sizes = [8, 32], strides = [1, 1]} : vector<8x96xf32> to vector<8x32xf32>
    %267 = vector.extract_strided_slice %265 {offsets = [0, 32], sizes = [8, 32], strides = [1, 1]} : vector<8x96xf32> to vector<8x32xf32>
    %268 = vector.extract_strided_slice %265 {offsets = [0, 64], sizes = [8, 32], strides = [1, 1]} : vector<8x96xf32> to vector<8x32xf32>
    %269 = vector.extract_strided_slice %259 {offsets = [0, 96], sizes = [8, 32], strides = [1, 1]} : vector<8x128xf32> to vector<8x32xf32>
    %270 = math.tanh %269 : vector<8x32xf32>
    %271 = arith.mulf %267, %226 : vector<8x32xf32>
    %272 = arith.mulf %266, %270 : vector<8x32xf32>
    %273 = arith.addf %271, %272 : vector<8x32xf32>
    %274 = math.tanh %273 : vector<8x32xf32>
    %275 = arith.mulf %268, %274 : vector<8x32xf32>
    %276 = arith.truncf %275 : vector<8x32xf32> to vector<8x32xbf16>
    %277 = tpu.concatenate %276, %254 in 1 : vector<8x32xbf16>, vector<8x32xbf16> -> vector<8x64xbf16>
    %cst_74 = arith.constant dense<0.000000e+00> : vector<8x128xf32>
    %278 = tpu.matmul %277, %1, %cst_74 {dimension_numbers = #tpu.dot_dimension_numbers<[1], [0], [0], [1], [0, 0, 1, 1], [], []>} : vector<8x64xbf16>, vector<64x128xbf16>, vector<8x128xf32> -> vector<8x128xf32>
    %279 = vector.broadcast %2 : vector<1x128xf32> to vector<8x128xf32>
    %280 = arith.addf %278, %279 : vector<8x128xf32>
    %281 = vector.extract_strided_slice %280 {offsets = [0, 0], sizes = [8, 96], strides = [1, 1]} : vector<8x128xf32> to vector<8x96xf32>
    %282 = arith.negf %281 : vector<8x96xf32>
    %283 = math.exp %282 : vector<8x96xf32>
    %cst_75 = arith.constant 1.000000e+00 : f32
    %284 = vector.broadcast %cst_75 : f32 to vector<8x96xf32>
    %285 = arith.addf %284, %283 : vector<8x96xf32>
    %286 = arith.divf %284, %285 : vector<8x96xf32>
    %287 = vector.extract_strided_slice %286 {offsets = [0, 0], sizes = [8, 32], strides = [1, 1]} : vector<8x96xf32> to vector<8x32xf32>
    %288 = vector.extract_strided_slice %286 {offsets = [0, 32], sizes = [8, 32], strides = [1, 1]} : vector<8x96xf32> to vector<8x32xf32>
    %289 = vector.extract_strided_slice %286 {offsets = [0, 64], sizes = [8, 32], strides = [1, 1]} : vector<8x96xf32> to vector<8x32xf32>
    %290 = vector.extract_strided_slice %280 {offsets = [0, 96], sizes = [8, 32], strides = [1, 1]} : vector<8x128xf32> to vector<8x32xf32>
    %291 = math.tanh %290 : vector<8x32xf32>
    %292 = arith.mulf %288, %247 : vector<8x32xf32>
    %293 = arith.mulf %287, %291 : vector<8x32xf32>
    %294 = arith.addf %292, %293 : vector<8x32xf32>
    %295 = math.tanh %294 : vector<8x32xf32>
    %296 = arith.mulf %289, %295 : vector<8x32xf32>
    %297 = arith.index_cast %c5_i32 : i32 to index
    %c0_76 = arith.constant 0 : index
    %c0_77 = arith.constant 0 : index
    %298 = vector.load %arg18[%297, %c0_76, %c0_77] : memref<8x8x32xf32, #tpu.memory_space<vmem>>, vector<1x8x32xf32>
    %299 = vector.shape_cast %298 : vector<1x8x32xf32> to vector<8x32xf32>
    %300 = vector.shape_cast %296 : vector<8x32xf32> to vector<1x8x32xf32>
    tpu.vector_store %arg18[%297, %c0_76, %c0_77], %300 {strides = array<i32>} : memref<8x8x32xf32, #tpu.memory_space<vmem>>, vector<1x8x32xf32>,
    %301 = arith.truncf %296 : vector<8x32xf32> to vector<8x32xbf16>
    %c6_i32 = arith.constant 6 : i32
    %302 = arith.index_cast %c6_i32 : i32 to index
    %c0_78 = arith.constant 0 : index
    %c0_79 = arith.constant 0 : index
    %303 = vector.load %arg17[%302, %c0_78, %c0_79] : memref<8x8x128xf32, #tpu.memory_space<vmem>>, vector<1x8x128xf32>
    %304 = vector.shape_cast %303 : vector<1x8x128xf32> to vector<8x128xf32>
    %cst_80 = arith.constant dense<0.000000e+00> : vector<8x128xf32>
    %305 = tpu.matmul %276, %0, %cst_80 {dimension_numbers = #tpu.dot_dimension_numbers<[1], [0], [0], [1], [0, 0, 1, 1], [], []>} : vector<8x32xbf16>, vector<32x128xbf16>, vector<8x128xf32> -> vector<8x128xf32>
    %306 = arith.addf %304, %305 : vector<8x128xf32>
    %307 = vector.extract_strided_slice %306 {offsets = [0, 0], sizes = [8, 96], strides = [1, 1]} : vector<8x128xf32> to vector<8x96xf32>
    %308 = arith.negf %307 : vector<8x96xf32>
    %309 = math.exp %308 : vector<8x96xf32>
    %cst_81 = arith.constant 1.000000e+00 : f32
    %310 = vector.broadcast %cst_81 : f32 to vector<8x96xf32>
    %311 = arith.addf %310, %309 : vector<8x96xf32>
    %312 = arith.divf %310, %311 : vector<8x96xf32>
    %313 = vector.extract_strided_slice %312 {offsets = [0, 0], sizes = [8, 32], strides = [1, 1]} : vector<8x96xf32> to vector<8x32xf32>
    %314 = vector.extract_strided_slice %312 {offsets = [0, 32], sizes = [8, 32], strides = [1, 1]} : vector<8x96xf32> to vector<8x32xf32>
    %315 = vector.extract_strided_slice %312 {offsets = [0, 64], sizes = [8, 32], strides = [1, 1]} : vector<8x96xf32> to vector<8x32xf32>
    %316 = vector.extract_strided_slice %306 {offsets = [0, 96], sizes = [8, 32], strides = [1, 1]} : vector<8x128xf32> to vector<8x32xf32>
    %317 = math.tanh %316 : vector<8x32xf32>
    %318 = arith.mulf %314, %273 : vector<8x32xf32>
    %319 = arith.mulf %313, %317 : vector<8x32xf32>
    %320 = arith.addf %318, %319 : vector<8x32xf32>
    %321 = math.tanh %320 : vector<8x32xf32>
    %322 = arith.mulf %315, %321 : vector<8x32xf32>
    %323 = arith.truncf %322 : vector<8x32xf32> to vector<8x32xbf16>
    %324 = tpu.concatenate %323, %301 in 1 : vector<8x32xbf16>, vector<8x32xbf16> -> vector<8x64xbf16>
    %cst_82 = arith.constant dense<0.000000e+00> : vector<8x128xf32>
    %325 = tpu.matmul %324, %1, %cst_82 {dimension_numbers = #tpu.dot_dimension_numbers<[1], [0], [0], [1], [0, 0, 1, 1], [], []>} : vector<8x64xbf16>, vector<64x128xbf16>, vector<8x128xf32> -> vector<8x128xf32>
    %326 = vector.broadcast %2 : vector<1x128xf32> to vector<8x128xf32>
    %327 = arith.addf %325, %326 : vector<8x128xf32>
    %328 = vector.extract_strided_slice %327 {offsets = [0, 0], sizes = [8, 96], strides = [1, 1]} : vector<8x128xf32> to vector<8x96xf32>
    %329 = arith.negf %328 : vector<8x96xf32>
    %330 = math.exp %329 : vector<8x96xf32>
    %cst_83 = arith.constant 1.000000e+00 : f32
    %331 = vector.broadcast %cst_83 : f32 to vector<8x96xf32>
    %332 = arith.addf %331, %330 : vector<8x96xf32>
    %333 = arith.divf %331, %332 : vector<8x96xf32>
    %334 = vector.extract_strided_slice %333 {offsets = [0, 0], sizes = [8, 32], strides = [1, 1]} : vector<8x96xf32> to vector<8x32xf32>
    %335 = vector.extract_strided_slice %333 {offsets = [0, 32], sizes = [8, 32], strides = [1, 1]} : vector<8x96xf32> to vector<8x32xf32>
    %336 = vector.extract_strided_slice %333 {offsets = [0, 64], sizes = [8, 32], strides = [1, 1]} : vector<8x96xf32> to vector<8x32xf32>
    %337 = vector.extract_strided_slice %327 {offsets = [0, 96], sizes = [8, 32], strides = [1, 1]} : vector<8x128xf32> to vector<8x32xf32>
    %338 = math.tanh %337 : vector<8x32xf32>
    %339 = arith.mulf %335, %294 : vector<8x32xf32>
    %340 = arith.mulf %334, %338 : vector<8x32xf32>
    %341 = arith.addf %339, %340 : vector<8x32xf32>
    %342 = math.tanh %341 : vector<8x32xf32>
    %343 = arith.mulf %336, %342 : vector<8x32xf32>
    %344 = arith.index_cast %c6_i32 : i32 to index
    %c0_84 = arith.constant 0 : index
    %c0_85 = arith.constant 0 : index
    %345 = vector.load %arg18[%344, %c0_84, %c0_85] : memref<8x8x32xf32, #tpu.memory_space<vmem>>, vector<1x8x32xf32>
    %346 = vector.shape_cast %345 : vector<1x8x32xf32> to vector<8x32xf32>
    %347 = vector.shape_cast %343 : vector<8x32xf32> to vector<1x8x32xf32>
    tpu.vector_store %arg18[%344, %c0_84, %c0_85], %347 {strides = array<i32>} : memref<8x8x32xf32, #tpu.memory_space<vmem>>, vector<1x8x32xf32>,
    %348 = arith.truncf %343 : vector<8x32xf32> to vector<8x32xbf16>
    %c7_i32 = arith.constant 7 : i32
    %349 = arith.index_cast %c7_i32 : i32 to index
    %c0_86 = arith.constant 0 : index
    %c0_87 = arith.constant 0 : index
    %350 = vector.load %arg17[%349, %c0_86, %c0_87] : memref<8x8x128xf32, #tpu.memory_space<vmem>>, vector<1x8x128xf32>
    %351 = vector.shape_cast %350 : vector<1x8x128xf32> to vector<8x128xf32>
    %cst_88 = arith.constant dense<0.000000e+00> : vector<8x128xf32>
    %352 = tpu.matmul %323, %0, %cst_88 {dimension_numbers = #tpu.dot_dimension_numbers<[1], [0], [0], [1], [0, 0, 1, 1], [], []>} : vector<8x32xbf16>, vector<32x128xbf16>, vector<8x128xf32> -> vector<8x128xf32>
    %353 = arith.addf %351, %352 : vector<8x128xf32>
    %354 = vector.extract_strided_slice %353 {offsets = [0, 0], sizes = [8, 96], strides = [1, 1]} : vector<8x128xf32> to vector<8x96xf32>
    %355 = arith.negf %354 : vector<8x96xf32>
    %356 = math.exp %355 : vector<8x96xf32>
    %cst_89 = arith.constant 1.000000e+00 : f32
    %357 = vector.broadcast %cst_89 : f32 to vector<8x96xf32>
    %358 = arith.addf %357, %356 : vector<8x96xf32>
    %359 = arith.divf %357, %358 : vector<8x96xf32>
    %360 = vector.extract_strided_slice %359 {offsets = [0, 0], sizes = [8, 32], strides = [1, 1]} : vector<8x96xf32> to vector<8x32xf32>
    %361 = vector.extract_strided_slice %359 {offsets = [0, 32], sizes = [8, 32], strides = [1, 1]} : vector<8x96xf32> to vector<8x32xf32>
    %362 = vector.extract_strided_slice %359 {offsets = [0, 64], sizes = [8, 32], strides = [1, 1]} : vector<8x96xf32> to vector<8x32xf32>
    %363 = vector.extract_strided_slice %353 {offsets = [0, 96], sizes = [8, 32], strides = [1, 1]} : vector<8x128xf32> to vector<8x32xf32>
    %364 = math.tanh %363 : vector<8x32xf32>
    %365 = arith.mulf %361, %320 : vector<8x32xf32>
    %366 = arith.mulf %360, %364 : vector<8x32xf32>
    %367 = arith.addf %365, %366 : vector<8x32xf32>
    %368 = math.tanh %367 : vector<8x32xf32>
    %369 = arith.mulf %362, %368 : vector<8x32xf32>
    %370 = arith.truncf %369 : vector<8x32xf32> to vector<8x32xbf16>
    %371 = tpu.concatenate %370, %348 in 1 : vector<8x32xbf16>, vector<8x32xbf16> -> vector<8x64xbf16>
    %cst_90 = arith.constant dense<0.000000e+00> : vector<8x128xf32>
    %372 = tpu.matmul %371, %1, %cst_90 {dimension_numbers = #tpu.dot_dimension_numbers<[1], [0], [0], [1], [0, 0, 1, 1], [], []>} : vector<8x64xbf16>, vector<64x128xbf16>, vector<8x128xf32> -> vector<8x128xf32>
    %373 = vector.broadcast %2 : vector<1x128xf32> to vector<8x128xf32>
    %374 = arith.addf %372, %373 : vector<8x128xf32>
    %375 = vector.extract_strided_slice %374 {offsets = [0, 0], sizes = [8, 96], strides = [1, 1]} : vector<8x128xf32> to vector<8x96xf32>
    %376 = arith.negf %375 : vector<8x96xf32>
    %377 = math.exp %376 : vector<8x96xf32>
    %cst_91 = arith.constant 1.000000e+00 : f32
    %378 = vector.broadcast %cst_91 : f32 to vector<8x96xf32>
    %379 = arith.addf %378, %377 : vector<8x96xf32>
    %380 = arith.divf %378, %379 : vector<8x96xf32>
    %381 = vector.extract_strided_slice %380 {offsets = [0, 0], sizes = [8, 32], strides = [1, 1]} : vector<8x96xf32> to vector<8x32xf32>
    %382 = vector.extract_strided_slice %380 {offsets = [0, 32], sizes = [8, 32], strides = [1, 1]} : vector<8x96xf32> to vector<8x32xf32>
    %383 = vector.extract_strided_slice %380 {offsets = [0, 64], sizes = [8, 32], strides = [1, 1]} : vector<8x96xf32> to vector<8x32xf32>
    %384 = vector.extract_strided_slice %374 {offsets = [0, 96], sizes = [8, 32], strides = [1, 1]} : vector<8x128xf32> to vector<8x32xf32>
    %385 = math.tanh %384 : vector<8x32xf32>
    %386 = arith.mulf %382, %341 : vector<8x32xf32>
    %387 = arith.mulf %381, %385 : vector<8x32xf32>
    %388 = arith.addf %386, %387 : vector<8x32xf32>
    %389 = math.tanh %388 : vector<8x32xf32>
    %390 = arith.mulf %383, %389 : vector<8x32xf32>
    %391 = arith.index_cast %c7_i32 : i32 to index
    %c0_92 = arith.constant 0 : index
    %c0_93 = arith.constant 0 : index
    %392 = vector.load %arg18[%391, %c0_92, %c0_93] : memref<8x8x32xf32, #tpu.memory_space<vmem>>, vector<1x8x32xf32>
    %393 = vector.shape_cast %392 : vector<1x8x32xf32> to vector<8x32xf32>
    %394 = vector.shape_cast %390 : vector<8x32xf32> to vector<1x8x32xf32>
    tpu.vector_store %arg18[%391, %c0_92, %c0_93], %394 {strides = array<i32>} : memref<8x8x32xf32, #tpu.memory_space<vmem>>, vector<1x8x32xf32>,
    %395 = arith.truncf %390 : vector<8x32xf32> to vector<8x32xbf16>
    %c8_i32 = arith.constant 8 : i32
    %c0_94 = arith.constant 0 : index
    %c0_95 = arith.constant 0 : index
    %c0_96 = arith.constant 0 : index
    %396 = vector.load %arg18[%c0_94, %c0_95, %c0_96] : memref<8x8x32xf32, #tpu.memory_space<vmem>>, vector<1x8x32xf32>
    %397 = vector.shape_cast %396 : vector<1x8x32xf32> to vector<8x32xf32>
    %398 = vector.broadcast %8 : vector<1x32xf32> to vector<8x32xf32>
    %399 = arith.mulf %397, %398 : vector<8x32xf32>
    %cst_97 = arith.constant dense<0.000000e+00> : vector<8xf32>
    %400 = vector.multi_reduction <add>, %399, %cst_97 [1] : vector<8x32xf32> to vector<8xf32>
    %401 = vector.shape_cast %400 : vector<8xf32> to vector<8x1xf32>
    %c1 = arith.constant 1 : index
    %c0_98 = arith.constant 0 : index
    %c0_99 = arith.constant 0 : index
    %402 = vector.load %arg18[%c1, %c0_98, %c0_99] : memref<8x8x32xf32, #tpu.memory_space<vmem>>, vector<1x8x32xf32>
    %403 = vector.shape_cast %402 : vector<1x8x32xf32> to vector<8x32xf32>
    %404 = vector.broadcast %8 : vector<1x32xf32> to vector<8x32xf32>
    %405 = arith.mulf %403, %404 : vector<8x32xf32>
    %cst_100 = arith.constant dense<0.000000e+00> : vector<8xf32>
    %406 = vector.multi_reduction <add>, %405, %cst_100 [1] : vector<8x32xf32> to vector<8xf32>
    %407 = vector.shape_cast %406 : vector<8xf32> to vector<8x1xf32>
    %c2 = arith.constant 2 : index
    %c0_101 = arith.constant 0 : index
    %c0_102 = arith.constant 0 : index
    %408 = vector.load %arg18[%c2, %c0_101, %c0_102] : memref<8x8x32xf32, #tpu.memory_space<vmem>>, vector<1x8x32xf32>
    %409 = vector.shape_cast %408 : vector<1x8x32xf32> to vector<8x32xf32>
    %410 = vector.broadcast %8 : vector<1x32xf32> to vector<8x32xf32>
    %411 = arith.mulf %409, %410 : vector<8x32xf32>
    %cst_103 = arith.constant dense<0.000000e+00> : vector<8xf32>
    %412 = vector.multi_reduction <add>, %411, %cst_103 [1] : vector<8x32xf32> to vector<8xf32>
    %413 = vector.shape_cast %412 : vector<8xf32> to vector<8x1xf32>
    %c3 = arith.constant 3 : index
    %c0_104 = arith.constant 0 : index
    %c0_105 = arith.constant 0 : index
    %414 = vector.load %arg18[%c3, %c0_104, %c0_105] : memref<8x8x32xf32, #tpu.memory_space<vmem>>, vector<1x8x32xf32>
    %415 = vector.shape_cast %414 : vector<1x8x32xf32> to vector<8x32xf32>
    %416 = vector.broadcast %8 : vector<1x32xf32> to vector<8x32xf32>
    %417 = arith.mulf %415, %416 : vector<8x32xf32>
    %cst_106 = arith.constant dense<0.000000e+00> : vector<8xf32>
    %418 = vector.multi_reduction <add>, %417, %cst_106 [1] : vector<8x32xf32> to vector<8xf32>
    %419 = vector.shape_cast %418 : vector<8xf32> to vector<8x1xf32>
    %c4 = arith.constant 4 : index
    %c0_107 = arith.constant 0 : index
    %c0_108 = arith.constant 0 : index
    %420 = vector.load %arg18[%c4, %c0_107, %c0_108] : memref<8x8x32xf32, #tpu.memory_space<vmem>>, vector<1x8x32xf32>
    %421 = vector.shape_cast %420 : vector<1x8x32xf32> to vector<8x32xf32>
    %422 = vector.broadcast %8 : vector<1x32xf32> to vector<8x32xf32>
    %423 = arith.mulf %421, %422 : vector<8x32xf32>
    %cst_109 = arith.constant dense<0.000000e+00> : vector<8xf32>
    %424 = vector.multi_reduction <add>, %423, %cst_109 [1] : vector<8x32xf32> to vector<8xf32>
    %425 = vector.shape_cast %424 : vector<8xf32> to vector<8x1xf32>
    %c5 = arith.constant 5 : index
    %c0_110 = arith.constant 0 : index
    %c0_111 = arith.constant 0 : index
    %426 = vector.load %arg18[%c5, %c0_110, %c0_111] : memref<8x8x32xf32, #tpu.memory_space<vmem>>, vector<1x8x32xf32>
    %427 = vector.shape_cast %426 : vector<1x8x32xf32> to vector<8x32xf32>
    %428 = vector.broadcast %8 : vector<1x32xf32> to vector<8x32xf32>
    %429 = arith.mulf %427, %428 : vector<8x32xf32>
    %cst_112 = arith.constant dense<0.000000e+00> : vector<8xf32>
    %430 = vector.multi_reduction <add>, %429, %cst_112 [1] : vector<8x32xf32> to vector<8xf32>
    %431 = vector.shape_cast %430 : vector<8xf32> to vector<8x1xf32>
    %c6 = arith.constant 6 : index
    %c0_113 = arith.constant 0 : index
    %c0_114 = arith.constant 0 : index
    %432 = vector.load %arg18[%c6, %c0_113, %c0_114] : memref<8x8x32xf32, #tpu.memory_space<vmem>>, vector<1x8x32xf32>
    %433 = vector.shape_cast %432 : vector<1x8x32xf32> to vector<8x32xf32>
    %434 = vector.broadcast %8 : vector<1x32xf32> to vector<8x32xf32>
    %435 = arith.mulf %433, %434 : vector<8x32xf32>
    %cst_115 = arith.constant dense<0.000000e+00> : vector<8xf32>
    %436 = vector.multi_reduction <add>, %435, %cst_115 [1] : vector<8x32xf32> to vector<8xf32>
    %437 = vector.shape_cast %436 : vector<8xf32> to vector<8x1xf32>
    %c7 = arith.constant 7 : index
    %c0_116 = arith.constant 0 : index
    %c0_117 = arith.constant 0 : index
    %438 = vector.load %arg18[%c7, %c0_116, %c0_117] : memref<8x8x32xf32, #tpu.memory_space<vmem>>, vector<1x8x32xf32>
    %439 = vector.shape_cast %438 : vector<1x8x32xf32> to vector<8x32xf32>
    %440 = vector.broadcast %8 : vector<1x32xf32> to vector<8x32xf32>
    %441 = arith.mulf %439, %440 : vector<8x32xf32>
    %cst_118 = arith.constant dense<0.000000e+00> : vector<8xf32>
    %442 = vector.multi_reduction <add>, %441, %cst_118 [1] : vector<8x32xf32> to vector<8xf32>
    %443 = vector.shape_cast %442 : vector<8xf32> to vector<8x1xf32>
    %cst_119 = arith.constant -1.000000e+30 : f32
    %444 = vector.broadcast %cst_119 : f32 to vector<8x120xf32>
    %445 = tpu.concatenate %401, %407, %413, %419, %425, %431, %437, %443, %444 in 1 : vector<8x1xf32>, vector<8x1xf32>, vector<8x1xf32>, vector<8x1xf32>, vector<8x1xf32>, vector<8x1xf32>, vector<8x1xf32>, vector<8x1xf32>, vector<8x120xf32> -> vector<8x128xf32>
    %446 = vector.broadcast %9 : vector<1x1xf32> to vector<8x128xf32>
    %447 = arith.addf %445, %446 : vector<8x128xf32>
    %c0_i32_120 = arith.constant 0 : i32
    %448 = tpu.concatenate %19, %19 in 1 : vector<8x32xbf16>, vector<8x32xbf16> -> vector<8x64xbf16>
    %cst_121 = arith.constant dense<0.000000e+00> : vector<8x128xf32>
    %449 = tpu.matmul %448, %3, %cst_121 {dimension_numbers = #tpu.dot_dimension_numbers<[1], [0], [0], [1], [0, 0, 1, 1], [], []>} : vector<8x64xbf16>, vector<64x128xbf16>, vector<8x128xf32> -> vector<8x128xf32>
    %450 = vector.broadcast %4 : vector<1x128xf32> to vector<8x128xf32>
    %451 = arith.addf %449, %450 : vector<8x128xf32>
    %452 = vector.extract_strided_slice %451 {offsets = [0, 0], sizes = [8, 96], strides = [1, 1]} : vector<8x128xf32> to vector<8x96xf32>
    %453 = arith.negf %452 : vector<8x96xf32>
    %454 = math.exp %453 : vector<8x96xf32>
    %cst_122 = arith.constant 1.000000e+00 : f32
    %455 = vector.broadcast %cst_122 : f32 to vector<8x96xf32>
    %456 = arith.addf %455, %454 : vector<8x96xf32>
    %457 = arith.divf %455, %456 : vector<8x96xf32>
    %458 = vector.extract_strided_slice %457 {offsets = [0, 0], sizes = [8, 32], strides = [1, 1]} : vector<8x96xf32> to vector<8x32xf32>
    %459 = vector.extract_strided_slice %457 {offsets = [0, 32], sizes = [8, 32], strides = [1, 1]} : vector<8x96xf32> to vector<8x32xf32>
    %460 = vector.extract_strided_slice %457 {offsets = [0, 64], sizes = [8, 32], strides = [1, 1]} : vector<8x96xf32> to vector<8x32xf32>
    %461 = vector.extract_strided_slice %451 {offsets = [0, 96], sizes = [8, 32], strides = [1, 1]} : vector<8x128xf32> to vector<8x32xf32>
    %462 = math.tanh %461 : vector<8x32xf32>
    %463 = arith.mulf %459, %18 : vector<8x32xf32>
    %464 = arith.mulf %458, %462 : vector<8x32xf32>
    %465 = arith.addf %463, %464 : vector<8x32xf32>
    %466 = math.tanh %465 : vector<8x32xf32>
    %467 = arith.mulf %460, %466 : vector<8x32xf32>
    %468 = arith.truncf %467 : vector<8x32xf32> to vector<8x32xbf16>
    %469 = tpu.concatenate %468, %19 in 1 : vector<8x32xbf16>, vector<8x32xbf16> -> vector<8x64xbf16>
    %cst_123 = arith.constant dense<0.000000e+00> : vector<8x128xf32>
    %470 = tpu.matmul %469, %5, %cst_123 {dimension_numbers = #tpu.dot_dimension_numbers<[1], [0], [0], [1], [0, 0, 1, 1], [], []>} : vector<8x64xbf16>, vector<64x128xbf16>, vector<8x128xf32> -> vector<8x128xf32>
    %471 = vector.broadcast %6 : vector<1x128xf32> to vector<8x128xf32>
    %472 = arith.addf %470, %471 : vector<8x128xf32>
    %473 = vector.extract_strided_slice %472 {offsets = [0, 0], sizes = [8, 96], strides = [1, 1]} : vector<8x128xf32> to vector<8x96xf32>
    %474 = arith.negf %473 : vector<8x96xf32>
    %475 = math.exp %474 : vector<8x96xf32>
    %cst_124 = arith.constant 1.000000e+00 : f32
    %476 = vector.broadcast %cst_124 : f32 to vector<8x96xf32>
    %477 = arith.addf %476, %475 : vector<8x96xf32>
    %478 = arith.divf %476, %477 : vector<8x96xf32>
    %479 = vector.extract_strided_slice %478 {offsets = [0, 0], sizes = [8, 32], strides = [1, 1]} : vector<8x96xf32> to vector<8x32xf32>
    %480 = vector.extract_strided_slice %478 {offsets = [0, 32], sizes = [8, 32], strides = [1, 1]} : vector<8x96xf32> to vector<8x32xf32>
    %481 = vector.extract_strided_slice %478 {offsets = [0, 64], sizes = [8, 32], strides = [1, 1]} : vector<8x96xf32> to vector<8x32xf32>
    %482 = vector.extract_strided_slice %472 {offsets = [0, 96], sizes = [8, 32], strides = [1, 1]} : vector<8x128xf32> to vector<8x32xf32>
    %483 = math.tanh %482 : vector<8x32xf32>
    %484 = arith.mulf %480, %18 : vector<8x32xf32>
    %485 = arith.mulf %479, %483 : vector<8x32xf32>
    %486 = arith.addf %484, %485 : vector<8x32xf32>
    %487 = math.tanh %486 : vector<8x32xf32>
    %488 = arith.mulf %481, %487 : vector<8x32xf32>
    %489 = vector.broadcast %7 : vector<1x32xf32> to vector<8x32xf32>
    %490 = arith.mulf %488, %489 : vector<8x32xf32>
    %cst_125 = arith.constant dense<0.000000e+00> : vector<8xf32>
    %491 = vector.multi_reduction <add>, %490, %cst_125 [1] : vector<8x32xf32> to vector<8xf32>
    %492 = vector.shape_cast %491 : vector<8xf32> to vector<8x1xf32>
    %493 = vector.broadcast %492 : vector<8x1xf32> to vector<8x128xf32>
    %494 = arith.addf %447, %493 : vector<8x128xf32>
    %cst_126 = arith.constant dense<0xFF800000> : vector<8xf32>
    %495 = vector.multi_reduction <maximumf>, %494, %cst_126 [1] : vector<8x128xf32> to vector<8xf32>
    %496 = vector.shape_cast %495 : vector<8xf32> to vector<8x1xf32>
    %497 = vector.broadcast %496 : vector<8x1xf32> to vector<8x128xf32>
    %498 = arith.subf %494, %497 : vector<8x128xf32>
    %499 = math.exp %498 : vector<8x128xf32>
    %cst_127 = arith.constant dense<0.000000e+00> : vector<8xf32>
    %500 = vector.multi_reduction <add>, %499, %cst_127 [1] : vector<8x128xf32> to vector<8xf32>
    %501 = vector.shape_cast %500 : vector<8xf32> to vector<8x1xf32>
    %502 = tpu.reciprocal %501 {approx = true} : vector<8x1xf32> -> vector<8x1xf32>
    %503 = vector.broadcast %502 : vector<8x1xf32> to vector<8x128xf32>
    %504 = arith.mulf %499, %503 : vector<8x128xf32>
    %505 = arith.index_cast %c0_i32_120 : i32 to index
    %c0_128 = arith.constant 0 : index
    %c0_129 = arith.constant 0 : index
    %506 = vector.load %arg16[%505, %c0_128, %c0_129] : memref<6x8x128xf32, #tpu.memory_space<vmem>>, vector<1x8x128xf32>
    %507 = vector.shape_cast %506 : vector<1x8x128xf32> to vector<8x128xf32>
    %508 = vector.shape_cast %504 : vector<8x128xf32> to vector<1x8x128xf32>
    tpu.vector_store %arg16[%505, %c0_128, %c0_129], %508 {strides = array<i32>} : memref<6x8x128xf32, #tpu.memory_space<vmem>>, vector<1x8x128xf32>,
    %cst_130 = arith.constant 0.000000e+00 : f32
    %509 = vector.broadcast %cst_130 : f32 to vector<8x32xf32>
    %510 = vector.extract_strided_slice %504 {offsets = [0, 0], sizes = [8, 1], strides = [1, 1]} : vector<8x128xf32> to vector<8x1xf32>
    %c0_131 = arith.constant 0 : index
    %c0_132 = arith.constant 0 : index
    %c0_133 = arith.constant 0 : index
    %511 = vector.load %arg18[%c0_131, %c0_132, %c0_133] : memref<8x8x32xf32, #tpu.memory_space<vmem>>, vector<1x8x32xf32>
    %512 = vector.shape_cast %511 : vector<1x8x32xf32> to vector<8x32xf32>
    %513 = vector.broadcast %510 : vector<8x1xf32> to vector<8x32xf32>
    %514 = arith.mulf %513, %512 : vector<8x32xf32>
    %515 = arith.addf %509, %514 : vector<8x32xf32>
    %516 = vector.extract_strided_slice %504 {offsets = [0, 1], sizes = [8, 1], strides = [1, 1]} : vector<8x128xf32> to vector<8x1xf32>
    %c1_134 = arith.constant 1 : index
    %c0_135 = arith.constant 0 : index
    %c0_136 = arith.constant 0 : index
    %517 = vector.load %arg18[%c1_134, %c0_135, %c0_136] : memref<8x8x32xf32, #tpu.memory_space<vmem>>, vector<1x8x32xf32>
    %518 = vector.shape_cast %517 : vector<1x8x32xf32> to vector<8x32xf32>
    %519 = vector.broadcast %516 : vector<8x1xf32> to vector<8x32xf32>
    %520 = arith.mulf %519, %518 : vector<8x32xf32>
    %521 = arith.addf %515, %520 : vector<8x32xf32>
    %522 = vector.extract_strided_slice %504 {offsets = [0, 2], sizes = [8, 1], strides = [1, 1]} : vector<8x128xf32> to vector<8x1xf32>
    %c2_137 = arith.constant 2 : index
    %c0_138 = arith.constant 0 : index
    %c0_139 = arith.constant 0 : index
    %523 = vector.load %arg18[%c2_137, %c0_138, %c0_139] : memref<8x8x32xf32, #tpu.memory_space<vmem>>, vector<1x8x32xf32>
    %524 = vector.shape_cast %523 : vector<1x8x32xf32> to vector<8x32xf32>
    %525 = vector.broadcast %522 : vector<8x1xf32> to vector<8x32xf32>
    %526 = arith.mulf %525, %524 : vector<8x32xf32>
    %527 = arith.addf %521, %526 : vector<8x32xf32>
    %528 = vector.extract_strided_slice %504 {offsets = [0, 3], sizes = [8, 1], strides = [1, 1]} : vector<8x128xf32> to vector<8x1xf32>
    %c3_140 = arith.constant 3 : index
    %c0_141 = arith.constant 0 : index
    %c0_142 = arith.constant 0 : index
    %529 = vector.load %arg18[%c3_140, %c0_141, %c0_142] : memref<8x8x32xf32, #tpu.memory_space<vmem>>, vector<1x8x32xf32>
    %530 = vector.shape_cast %529 : vector<1x8x32xf32> to vector<8x32xf32>
    %531 = vector.broadcast %528 : vector<8x1xf32> to vector<8x32xf32>
    %532 = arith.mulf %531, %530 : vector<8x32xf32>
    %533 = arith.addf %527, %532 : vector<8x32xf32>
    %534 = vector.extract_strided_slice %504 {offsets = [0, 4], sizes = [8, 1], strides = [1, 1]} : vector<8x128xf32> to vector<8x1xf32>
    %c4_143 = arith.constant 4 : index
    %c0_144 = arith.constant 0 : index
    %c0_145 = arith.constant 0 : index
    %535 = vector.load %arg18[%c4_143, %c0_144, %c0_145] : memref<8x8x32xf32, #tpu.memory_space<vmem>>, vector<1x8x32xf32>
    %536 = vector.shape_cast %535 : vector<1x8x32xf32> to vector<8x32xf32>
    %537 = vector.broadcast %534 : vector<8x1xf32> to vector<8x32xf32>
    %538 = arith.mulf %537, %536 : vector<8x32xf32>
    %539 = arith.addf %533, %538 : vector<8x32xf32>
    %540 = vector.extract_strided_slice %504 {offsets = [0, 5], sizes = [8, 1], strides = [1, 1]} : vector<8x128xf32> to vector<8x1xf32>
    %c5_146 = arith.constant 5 : index
    %c0_147 = arith.constant 0 : index
    %c0_148 = arith.constant 0 : index
    %541 = vector.load %arg18[%c5_146, %c0_147, %c0_148] : memref<8x8x32xf32, #tpu.memory_space<vmem>>, vector<1x8x32xf32>
    %542 = vector.shape_cast %541 : vector<1x8x32xf32> to vector<8x32xf32>
    %543 = vector.broadcast %540 : vector<8x1xf32> to vector<8x32xf32>
    %544 = arith.mulf %543, %542 : vector<8x32xf32>
    %545 = arith.addf %539, %544 : vector<8x32xf32>
    %546 = vector.extract_strided_slice %504 {offsets = [0, 6], sizes = [8, 1], strides = [1, 1]} : vector<8x128xf32> to vector<8x1xf32>
    %c6_149 = arith.constant 6 : index
    %c0_150 = arith.constant 0 : index
    %c0_151 = arith.constant 0 : index
    %547 = vector.load %arg18[%c6_149, %c0_150, %c0_151] : memref<8x8x32xf32, #tpu.memory_space<vmem>>, vector<1x8x32xf32>
    %548 = vector.shape_cast %547 : vector<1x8x32xf32> to vector<8x32xf32>
    %549 = vector.broadcast %546 : vector<8x1xf32> to vector<8x32xf32>
    %550 = arith.mulf %549, %548 : vector<8x32xf32>
    %551 = arith.addf %545, %550 : vector<8x32xf32>
    %552 = vector.extract_strided_slice %504 {offsets = [0, 7], sizes = [8, 1], strides = [1, 1]} : vector<8x128xf32> to vector<8x1xf32>
    %c7_152 = arith.constant 7 : index
    %c0_153 = arith.constant 0 : index
    %c0_154 = arith.constant 0 : index
    %553 = vector.load %arg18[%c7_152, %c0_153, %c0_154] : memref<8x8x32xf32, #tpu.memory_space<vmem>>, vector<1x8x32xf32>
    %554 = vector.shape_cast %553 : vector<1x8x32xf32> to vector<8x32xf32>
    %555 = vector.broadcast %552 : vector<8x1xf32> to vector<8x32xf32>
    %556 = arith.mulf %555, %554 : vector<8x32xf32>
    %557 = arith.addf %551, %556 : vector<8x32xf32>
    %558 = arith.index_cast %c0_i32_120 : i32 to index
    %c0_155 = arith.constant 0 : index
    %c0_156 = arith.constant 0 : index
    %559 = vector.load %arg19[%558, %c0_155, %c0_156] : memref<6x8x32xf32, #tpu.memory_space<vmem>>, vector<1x8x32xf32>
    %560 = vector.shape_cast %559 : vector<1x8x32xf32> to vector<8x32xf32>
    %561 = vector.shape_cast %557 : vector<8x32xf32> to vector<1x8x32xf32>
    tpu.vector_store %arg19[%558, %c0_155, %c0_156], %561 {strides = array<i32>} : memref<6x8x32xf32, #tpu.memory_space<vmem>>, vector<1x8x32xf32>,
    %562 = arith.truncf %488 : vector<8x32xf32> to vector<8x32xbf16>
    %563 = arith.truncf %557 : vector<8x32xf32> to vector<8x32xbf16>
    %c1_i32_157 = arith.constant 1 : i32
    %564 = tpu.concatenate %563, %468 in 1 : vector<8x32xbf16>, vector<8x32xbf16> -> vector<8x64xbf16>
    %cst_158 = arith.constant dense<0.000000e+00> : vector<8x128xf32>
    %565 = tpu.matmul %564, %3, %cst_158 {dimension_numbers = #tpu.dot_dimension_numbers<[1], [0], [0], [1], [0, 0, 1, 1], [], []>} : vector<8x64xbf16>, vector<64x128xbf16>, vector<8x128xf32> -> vector<8x128xf32>
    %566 = vector.broadcast %4 : vector<1x128xf32> to vector<8x128xf32>
    %567 = arith.addf %565, %566 : vector<8x128xf32>
    %568 = vector.extract_strided_slice %567 {offsets = [0, 0], sizes = [8, 96], strides = [1, 1]} : vector<8x128xf32> to vector<8x96xf32>
    %569 = arith.negf %568 : vector<8x96xf32>
    %570 = math.exp %569 : vector<8x96xf32>
    %cst_159 = arith.constant 1.000000e+00 : f32
    %571 = vector.broadcast %cst_159 : f32 to vector<8x96xf32>
    %572 = arith.addf %571, %570 : vector<8x96xf32>
    %573 = arith.divf %571, %572 : vector<8x96xf32>
    %574 = vector.extract_strided_slice %573 {offsets = [0, 0], sizes = [8, 32], strides = [1, 1]} : vector<8x96xf32> to vector<8x32xf32>
    %575 = vector.extract_strided_slice %573 {offsets = [0, 32], sizes = [8, 32], strides = [1, 1]} : vector<8x96xf32> to vector<8x32xf32>
    %576 = vector.extract_strided_slice %573 {offsets = [0, 64], sizes = [8, 32], strides = [1, 1]} : vector<8x96xf32> to vector<8x32xf32>
    %577 = vector.extract_strided_slice %567 {offsets = [0, 96], sizes = [8, 32], strides = [1, 1]} : vector<8x128xf32> to vector<8x32xf32>
    %578 = math.tanh %577 : vector<8x32xf32>
    %579 = arith.mulf %575, %465 : vector<8x32xf32>
    %580 = arith.mulf %574, %578 : vector<8x32xf32>
    %581 = arith.addf %579, %580 : vector<8x32xf32>
    %582 = math.tanh %581 : vector<8x32xf32>
    %583 = arith.mulf %576, %582 : vector<8x32xf32>
    %584 = arith.truncf %583 : vector<8x32xf32> to vector<8x32xbf16>
    %585 = tpu.concatenate %584, %562 in 1 : vector<8x32xbf16>, vector<8x32xbf16> -> vector<8x64xbf16>
    %cst_160 = arith.constant dense<0.000000e+00> : vector<8x128xf32>
    %586 = tpu.matmul %585, %5, %cst_160 {dimension_numbers = #tpu.dot_dimension_numbers<[1], [0], [0], [1], [0, 0, 1, 1], [], []>} : vector<8x64xbf16>, vector<64x128xbf16>, vector<8x128xf32> -> vector<8x128xf32>
    %587 = vector.broadcast %6 : vector<1x128xf32> to vector<8x128xf32>
    %588 = arith.addf %586, %587 : vector<8x128xf32>
    %589 = vector.extract_strided_slice %588 {offsets = [0, 0], sizes = [8, 96], strides = [1, 1]} : vector<8x128xf32> to vector<8x96xf32>
    %590 = arith.negf %589 : vector<8x96xf32>
    %591 = math.exp %590 : vector<8x96xf32>
    %cst_161 = arith.constant 1.000000e+00 : f32
    %592 = vector.broadcast %cst_161 : f32 to vector<8x96xf32>
    %593 = arith.addf %592, %591 : vector<8x96xf32>
    %594 = arith.divf %592, %593 : vector<8x96xf32>
    %595 = vector.extract_strided_slice %594 {offsets = [0, 0], sizes = [8, 32], strides = [1, 1]} : vector<8x96xf32> to vector<8x32xf32>
    %596 = vector.extract_strided_slice %594 {offsets = [0, 32], sizes = [8, 32], strides = [1, 1]} : vector<8x96xf32> to vector<8x32xf32>
    %597 = vector.extract_strided_slice %594 {offsets = [0, 64], sizes = [8, 32], strides = [1, 1]} : vector<8x96xf32> to vector<8x32xf32>
    %598 = vector.extract_strided_slice %588 {offsets = [0, 96], sizes = [8, 32], strides = [1, 1]} : vector<8x128xf32> to vector<8x32xf32>
    %599 = math.tanh %598 : vector<8x32xf32>
    %600 = arith.mulf %596, %486 : vector<8x32xf32>
    %601 = arith.mulf %595, %599 : vector<8x32xf32>
    %602 = arith.addf %600, %601 : vector<8x32xf32>
    %603 = math.tanh %602 : vector<8x32xf32>
    %604 = arith.mulf %597, %603 : vector<8x32xf32>
    %605 = vector.broadcast %7 : vector<1x32xf32> to vector<8x32xf32>
    %606 = arith.mulf %604, %605 : vector<8x32xf32>
    %cst_162 = arith.constant dense<0.000000e+00> : vector<8xf32>
    %607 = vector.multi_reduction <add>, %606, %cst_162 [1] : vector<8x32xf32> to vector<8xf32>
    %608 = vector.shape_cast %607 : vector<8xf32> to vector<8x1xf32>
    %609 = vector.broadcast %608 : vector<8x1xf32> to vector<8x128xf32>
    %610 = arith.addf %447, %609 : vector<8x128xf32>
    %cst_163 = arith.constant dense<0xFF800000> : vector<8xf32>
    %611 = vector.multi_reduction <maximumf>, %610, %cst_163 [1] : vector<8x128xf32> to vector<8xf32>
    %612 = vector.shape_cast %611 : vector<8xf32> to vector<8x1xf32>
    %613 = vector.broadcast %612 : vector<8x1xf32> to vector<8x128xf32>
    %614 = arith.subf %610, %613 : vector<8x128xf32>
    %615 = math.exp %614 : vector<8x128xf32>
    %cst_164 = arith.constant dense<0.000000e+00> : vector<8xf32>
    %616 = vector.multi_reduction <add>, %615, %cst_164 [1] : vector<8x128xf32> to vector<8xf32>
    %617 = vector.shape_cast %616 : vector<8xf32> to vector<8x1xf32>
    %618 = tpu.reciprocal %617 {approx = true} : vector<8x1xf32> -> vector<8x1xf32>
    %619 = vector.broadcast %618 : vector<8x1xf32> to vector<8x128xf32>
    %620 = arith.mulf %615, %619 : vector<8x128xf32>
    %621 = arith.index_cast %c1_i32_157 : i32 to index
    %c0_165 = arith.constant 0 : index
    %c0_166 = arith.constant 0 : index
    %622 = vector.load %arg16[%621, %c0_165, %c0_166] : memref<6x8x128xf32, #tpu.memory_space<vmem>>, vector<1x8x128xf32>
    %623 = vector.shape_cast %622 : vector<1x8x128xf32> to vector<8x128xf32>
    %624 = vector.shape_cast %620 : vector<8x128xf32> to vector<1x8x128xf32>
    tpu.vector_store %arg16[%621, %c0_165, %c0_166], %624 {strides = array<i32>} : memref<6x8x128xf32, #tpu.memory_space<vmem>>, vector<1x8x128xf32>,
    %cst_167 = arith.constant 0.000000e+00 : f32
    %625 = vector.broadcast %cst_167 : f32 to vector<8x32xf32>
    %626 = vector.extract_strided_slice %620 {offsets = [0, 0], sizes = [8, 1], strides = [1, 1]} : vector<8x128xf32> to vector<8x1xf32>
    %c0_168 = arith.constant 0 : index
    %c0_169 = arith.constant 0 : index
    %c0_170 = arith.constant 0 : index
    %627 = vector.load %arg18[%c0_168, %c0_169, %c0_170] : memref<8x8x32xf32, #tpu.memory_space<vmem>>, vector<1x8x32xf32>
    %628 = vector.shape_cast %627 : vector<1x8x32xf32> to vector<8x32xf32>
    %629 = vector.broadcast %626 : vector<8x1xf32> to vector<8x32xf32>
    %630 = arith.mulf %629, %628 : vector<8x32xf32>
    %631 = arith.addf %625, %630 : vector<8x32xf32>
    %632 = vector.extract_strided_slice %620 {offsets = [0, 1], sizes = [8, 1], strides = [1, 1]} : vector<8x128xf32> to vector<8x1xf32>
    %c1_171 = arith.constant 1 : index
    %c0_172 = arith.constant 0 : index
    %c0_173 = arith.constant 0 : index
    %633 = vector.load %arg18[%c1_171, %c0_172, %c0_173] : memref<8x8x32xf32, #tpu.memory_space<vmem>>, vector<1x8x32xf32>
    %634 = vector.shape_cast %633 : vector<1x8x32xf32> to vector<8x32xf32>
    %635 = vector.broadcast %632 : vector<8x1xf32> to vector<8x32xf32>
    %636 = arith.mulf %635, %634 : vector<8x32xf32>
    %637 = arith.addf %631, %636 : vector<8x32xf32>
    %638 = vector.extract_strided_slice %620 {offsets = [0, 2], sizes = [8, 1], strides = [1, 1]} : vector<8x128xf32> to vector<8x1xf32>
    %c2_174 = arith.constant 2 : index
    %c0_175 = arith.constant 0 : index
    %c0_176 = arith.constant 0 : index
    %639 = vector.load %arg18[%c2_174, %c0_175, %c0_176] : memref<8x8x32xf32, #tpu.memory_space<vmem>>, vector<1x8x32xf32>
    %640 = vector.shape_cast %639 : vector<1x8x32xf32> to vector<8x32xf32>
    %641 = vector.broadcast %638 : vector<8x1xf32> to vector<8x32xf32>
    %642 = arith.mulf %641, %640 : vector<8x32xf32>
    %643 = arith.addf %637, %642 : vector<8x32xf32>
    %644 = vector.extract_strided_slice %620 {offsets = [0, 3], sizes = [8, 1], strides = [1, 1]} : vector<8x128xf32> to vector<8x1xf32>
    %c3_177 = arith.constant 3 : index
    %c0_178 = arith.constant 0 : index
    %c0_179 = arith.constant 0 : index
    %645 = vector.load %arg18[%c3_177, %c0_178, %c0_179] : memref<8x8x32xf32, #tpu.memory_space<vmem>>, vector<1x8x32xf32>
    %646 = vector.shape_cast %645 : vector<1x8x32xf32> to vector<8x32xf32>
    %647 = vector.broadcast %644 : vector<8x1xf32> to vector<8x32xf32>
    %648 = arith.mulf %647, %646 : vector<8x32xf32>
    %649 = arith.addf %643, %648 : vector<8x32xf32>
    %650 = vector.extract_strided_slice %620 {offsets = [0, 4], sizes = [8, 1], strides = [1, 1]} : vector<8x128xf32> to vector<8x1xf32>
    %c4_180 = arith.constant 4 : index
    %c0_181 = arith.constant 0 : index
    %c0_182 = arith.constant 0 : index
    %651 = vector.load %arg18[%c4_180, %c0_181, %c0_182] : memref<8x8x32xf32, #tpu.memory_space<vmem>>, vector<1x8x32xf32>
    %652 = vector.shape_cast %651 : vector<1x8x32xf32> to vector<8x32xf32>
    %653 = vector.broadcast %650 : vector<8x1xf32> to vector<8x32xf32>
    %654 = arith.mulf %653, %652 : vector<8x32xf32>
    %655 = arith.addf %649, %654 : vector<8x32xf32>
    %656 = vector.extract_strided_slice %620 {offsets = [0, 5], sizes = [8, 1], strides = [1, 1]} : vector<8x128xf32> to vector<8x1xf32>
    %c5_183 = arith.constant 5 : index
    %c0_184 = arith.constant 0 : index
    %c0_185 = arith.constant 0 : index
    %657 = vector.load %arg18[%c5_183, %c0_184, %c0_185] : memref<8x8x32xf32, #tpu.memory_space<vmem>>, vector<1x8x32xf32>
    %658 = vector.shape_cast %657 : vector<1x8x32xf32> to vector<8x32xf32>
    %659 = vector.broadcast %656 : vector<8x1xf32> to vector<8x32xf32>
    %660 = arith.mulf %659, %658 : vector<8x32xf32>
    %661 = arith.addf %655, %660 : vector<8x32xf32>
    %662 = vector.extract_strided_slice %620 {offsets = [0, 6], sizes = [8, 1], strides = [1, 1]} : vector<8x128xf32> to vector<8x1xf32>
    %c6_186 = arith.constant 6 : index
    %c0_187 = arith.constant 0 : index
    %c0_188 = arith.constant 0 : index
    %663 = vector.load %arg18[%c6_186, %c0_187, %c0_188] : memref<8x8x32xf32, #tpu.memory_space<vmem>>, vector<1x8x32xf32>
    %664 = vector.shape_cast %663 : vector<1x8x32xf32> to vector<8x32xf32>
    %665 = vector.broadcast %662 : vector<8x1xf32> to vector<8x32xf32>
    %666 = arith.mulf %665, %664 : vector<8x32xf32>
    %667 = arith.addf %661, %666 : vector<8x32xf32>
    %668 = vector.extract_strided_slice %620 {offsets = [0, 7], sizes = [8, 1], strides = [1, 1]} : vector<8x128xf32> to vector<8x1xf32>
    %c7_189 = arith.constant 7 : index
    %c0_190 = arith.constant 0 : index
    %c0_191 = arith.constant 0 : index
    %669 = vector.load %arg18[%c7_189, %c0_190, %c0_191] : memref<8x8x32xf32, #tpu.memory_space<vmem>>, vector<1x8x32xf32>
    %670 = vector.shape_cast %669 : vector<1x8x32xf32> to vector<8x32xf32>
    %671 = vector.broadcast %668 : vector<8x1xf32> to vector<8x32xf32>
    %672 = arith.mulf %671, %670 : vector<8x32xf32>
    %673 = arith.addf %667, %672 : vector<8x32xf32>
    %674 = arith.index_cast %c1_i32_157 : i32 to index
    %c0_192 = arith.constant 0 : index
    %c0_193 = arith.constant 0 : index
    %675 = vector.load %arg19[%674, %c0_192, %c0_193] : memref<6x8x32xf32, #tpu.memory_space<vmem>>, vector<1x8x32xf32>
    %676 = vector.shape_cast %675 : vector<1x8x32xf32> to vector<8x32xf32>
    %677 = vector.shape_cast %673 : vector<8x32xf32> to vector<1x8x32xf32>
    tpu.vector_store %arg19[%674, %c0_192, %c0_193], %677 {strides = array<i32>} : memref<6x8x32xf32, #tpu.memory_space<vmem>>, vector<1x8x32xf32>,
    %678 = arith.truncf %604 : vector<8x32xf32> to vector<8x32xbf16>
    %679 = arith.truncf %673 : vector<8x32xf32> to vector<8x32xbf16>
    %c2_i32_194 = arith.constant 2 : i32
    %680 = tpu.concatenate %679, %584 in 1 : vector<8x32xbf16>, vector<8x32xbf16> -> vector<8x64xbf16>
    %cst_195 = arith.constant dense<0.000000e+00> : vector<8x128xf32>
    %681 = tpu.matmul %680, %3, %cst_195 {dimension_numbers = #tpu.dot_dimension_numbers<[1], [0], [0], [1], [0, 0, 1, 1], [], []>} : vector<8x64xbf16>, vector<64x128xbf16>, vector<8x128xf32> -> vector<8x128xf32>
    %682 = vector.broadcast %4 : vector<1x128xf32> to vector<8x128xf32>
    %683 = arith.addf %681, %682 : vector<8x128xf32>
    %684 = vector.extract_strided_slice %683 {offsets = [0, 0], sizes = [8, 96], strides = [1, 1]} : vector<8x128xf32> to vector<8x96xf32>
    %685 = arith.negf %684 : vector<8x96xf32>
    %686 = math.exp %685 : vector<8x96xf32>
    %cst_196 = arith.constant 1.000000e+00 : f32
    %687 = vector.broadcast %cst_196 : f32 to vector<8x96xf32>
    %688 = arith.addf %687, %686 : vector<8x96xf32>
    %689 = arith.divf %687, %688 : vector<8x96xf32>
    %690 = vector.extract_strided_slice %689 {offsets = [0, 0], sizes = [8, 32], strides = [1, 1]} : vector<8x96xf32> to vector<8x32xf32>
    %691 = vector.extract_strided_slice %689 {offsets = [0, 32], sizes = [8, 32], strides = [1, 1]} : vector<8x96xf32> to vector<8x32xf32>
    %692 = vector.extract_strided_slice %689 {offsets = [0, 64], sizes = [8, 32], strides = [1, 1]} : vector<8x96xf32> to vector<8x32xf32>
    %693 = vector.extract_strided_slice %683 {offsets = [0, 96], sizes = [8, 32], strides = [1, 1]} : vector<8x128xf32> to vector<8x32xf32>
    %694 = math.tanh %693 : vector<8x32xf32>
    %695 = arith.mulf %691, %581 : vector<8x32xf32>
    %696 = arith.mulf %690, %694 : vector<8x32xf32>
    %697 = arith.addf %695, %696 : vector<8x32xf32>
    %698 = math.tanh %697 : vector<8x32xf32>
    %699 = arith.mulf %692, %698 : vector<8x32xf32>
    %700 = arith.truncf %699 : vector<8x32xf32> to vector<8x32xbf16>
    %701 = tpu.concatenate %700, %678 in 1 : vector<8x32xbf16>, vector<8x32xbf16> -> vector<8x64xbf16>
    %cst_197 = arith.constant dense<0.000000e+00> : vector<8x128xf32>
    %702 = tpu.matmul %701, %5, %cst_197 {dimension_numbers = #tpu.dot_dimension_numbers<[1], [0], [0], [1], [0, 0, 1, 1], [], []>} : vector<8x64xbf16>, vector<64x128xbf16>, vector<8x128xf32> -> vector<8x128xf32>
    %703 = vector.broadcast %6 : vector<1x128xf32> to vector<8x128xf32>
    %704 = arith.addf %702, %703 : vector<8x128xf32>
    %705 = vector.extract_strided_slice %704 {offsets = [0, 0], sizes = [8, 96], strides = [1, 1]} : vector<8x128xf32> to vector<8x96xf32>
    %706 = arith.negf %705 : vector<8x96xf32>
    %707 = math.exp %706 : vector<8x96xf32>
    %cst_198 = arith.constant 1.000000e+00 : f32
    %708 = vector.broadcast %cst_198 : f32 to vector<8x96xf32>
    %709 = arith.addf %708, %707 : vector<8x96xf32>
    %710 = arith.divf %708, %709 : vector<8x96xf32>
    %711 = vector.extract_strided_slice %710 {offsets = [0, 0], sizes = [8, 32], strides = [1, 1]} : vector<8x96xf32> to vector<8x32xf32>
    %712 = vector.extract_strided_slice %710 {offsets = [0, 32], sizes = [8, 32], strides = [1, 1]} : vector<8x96xf32> to vector<8x32xf32>
    %713 = vector.extract_strided_slice %710 {offsets = [0, 64], sizes = [8, 32], strides = [1, 1]} : vector<8x96xf32> to vector<8x32xf32>
    %714 = vector.extract_strided_slice %704 {offsets = [0, 96], sizes = [8, 32], strides = [1, 1]} : vector<8x128xf32> to vector<8x32xf32>
    %715 = math.tanh %714 : vector<8x32xf32>
    %716 = arith.mulf %712, %602 : vector<8x32xf32>
    %717 = arith.mulf %711, %715 : vector<8x32xf32>
    %718 = arith.addf %716, %717 : vector<8x32xf32>
    %719 = math.tanh %718 : vector<8x32xf32>
    %720 = arith.mulf %713, %719 : vector<8x32xf32>
    %721 = vector.broadcast %7 : vector<1x32xf32> to vector<8x32xf32>
    %722 = arith.mulf %720, %721 : vector<8x32xf32>
    %cst_199 = arith.constant dense<0.000000e+00> : vector<8xf32>
    %723 = vector.multi_reduction <add>, %722, %cst_199 [1] : vector<8x32xf32> to vector<8xf32>
    %724 = vector.shape_cast %723 : vector<8xf32> to vector<8x1xf32>
    %725 = vector.broadcast %724 : vector<8x1xf32> to vector<8x128xf32>
    %726 = arith.addf %447, %725 : vector<8x128xf32>
    %cst_200 = arith.constant dense<0xFF800000> : vector<8xf32>
    %727 = vector.multi_reduction <maximumf>, %726, %cst_200 [1] : vector<8x128xf32> to vector<8xf32>
    %728 = vector.shape_cast %727 : vector<8xf32> to vector<8x1xf32>
    %729 = vector.broadcast %728 : vector<8x1xf32> to vector<8x128xf32>
    %730 = arith.subf %726, %729 : vector<8x128xf32>
    %731 = math.exp %730 : vector<8x128xf32>
    %cst_201 = arith.constant dense<0.000000e+00> : vector<8xf32>
    %732 = vector.multi_reduction <add>, %731, %cst_201 [1] : vector<8x128xf32> to vector<8xf32>
    %733 = vector.shape_cast %732 : vector<8xf32> to vector<8x1xf32>
    %734 = tpu.reciprocal %733 {approx = true} : vector<8x1xf32> -> vector<8x1xf32>
    %735 = vector.broadcast %734 : vector<8x1xf32> to vector<8x128xf32>
    %736 = arith.mulf %731, %735 : vector<8x128xf32>
    %737 = arith.index_cast %c2_i32_194 : i32 to index
    %c0_202 = arith.constant 0 : index
    %c0_203 = arith.constant 0 : index
    %738 = vector.load %arg16[%737, %c0_202, %c0_203] : memref<6x8x128xf32, #tpu.memory_space<vmem>>, vector<1x8x128xf32>
    %739 = vector.shape_cast %738 : vector<1x8x128xf32> to vector<8x128xf32>
    %740 = vector.shape_cast %736 : vector<8x128xf32> to vector<1x8x128xf32>
    tpu.vector_store %arg16[%737, %c0_202, %c0_203], %740 {strides = array<i32>} : memref<6x8x128xf32, #tpu.memory_space<vmem>>, vector<1x8x128xf32>,
    %cst_204 = arith.constant 0.000000e+00 : f32
    %741 = vector.broadcast %cst_204 : f32 to vector<8x32xf32>
    %742 = vector.extract_strided_slice %736 {offsets = [0, 0], sizes = [8, 1], strides = [1, 1]} : vector<8x128xf32> to vector<8x1xf32>
    %c0_205 = arith.constant 0 : index
    %c0_206 = arith.constant 0 : index
    %c0_207 = arith.constant 0 : index
    %743 = vector.load %arg18[%c0_205, %c0_206, %c0_207] : memref<8x8x32xf32, #tpu.memory_space<vmem>>, vector<1x8x32xf32>
    %744 = vector.shape_cast %743 : vector<1x8x32xf32> to vector<8x32xf32>
    %745 = vector.broadcast %742 : vector<8x1xf32> to vector<8x32xf32>
    %746 = arith.mulf %745, %744 : vector<8x32xf32>
    %747 = arith.addf %741, %746 : vector<8x32xf32>
    %748 = vector.extract_strided_slice %736 {offsets = [0, 1], sizes = [8, 1], strides = [1, 1]} : vector<8x128xf32> to vector<8x1xf32>
    %c1_208 = arith.constant 1 : index
    %c0_209 = arith.constant 0 : index
    %c0_210 = arith.constant 0 : index
    %749 = vector.load %arg18[%c1_208, %c0_209, %c0_210] : memref<8x8x32xf32, #tpu.memory_space<vmem>>, vector<1x8x32xf32>
    %750 = vector.shape_cast %749 : vector<1x8x32xf32> to vector<8x32xf32>
    %751 = vector.broadcast %748 : vector<8x1xf32> to vector<8x32xf32>
    %752 = arith.mulf %751, %750 : vector<8x32xf32>
    %753 = arith.addf %747, %752 : vector<8x32xf32>
    %754 = vector.extract_strided_slice %736 {offsets = [0, 2], sizes = [8, 1], strides = [1, 1]} : vector<8x128xf32> to vector<8x1xf32>
    %c2_211 = arith.constant 2 : index
    %c0_212 = arith.constant 0 : index
    %c0_213 = arith.constant 0 : index
    %755 = vector.load %arg18[%c2_211, %c0_212, %c0_213] : memref<8x8x32xf32, #tpu.memory_space<vmem>>, vector<1x8x32xf32>
    %756 = vector.shape_cast %755 : vector<1x8x32xf32> to vector<8x32xf32>
    %757 = vector.broadcast %754 : vector<8x1xf32> to vector<8x32xf32>
    %758 = arith.mulf %757, %756 : vector<8x32xf32>
    %759 = arith.addf %753, %758 : vector<8x32xf32>
    %760 = vector.extract_strided_slice %736 {offsets = [0, 3], sizes = [8, 1], strides = [1, 1]} : vector<8x128xf32> to vector<8x1xf32>
    %c3_214 = arith.constant 3 : index
    %c0_215 = arith.constant 0 : index
    %c0_216 = arith.constant 0 : index
    %761 = vector.load %arg18[%c3_214, %c0_215, %c0_216] : memref<8x8x32xf32, #tpu.memory_space<vmem>>, vector<1x8x32xf32>
    %762 = vector.shape_cast %761 : vector<1x8x32xf32> to vector<8x32xf32>
    %763 = vector.broadcast %760 : vector<8x1xf32> to vector<8x32xf32>
    %764 = arith.mulf %763, %762 : vector<8x32xf32>
    %765 = arith.addf %759, %764 : vector<8x32xf32>
    %766 = vector.extract_strided_slice %736 {offsets = [0, 4], sizes = [8, 1], strides = [1, 1]} : vector<8x128xf32> to vector<8x1xf32>
    %c4_217 = arith.constant 4 : index
    %c0_218 = arith.constant 0 : index
    %c0_219 = arith.constant 0 : index
    %767 = vector.load %arg18[%c4_217, %c0_218, %c0_219] : memref<8x8x32xf32, #tpu.memory_space<vmem>>, vector<1x8x32xf32>
    %768 = vector.shape_cast %767 : vector<1x8x32xf32> to vector<8x32xf32>
    %769 = vector.broadcast %766 : vector<8x1xf32> to vector<8x32xf32>
    %770 = arith.mulf %769, %768 : vector<8x32xf32>
    %771 = arith.addf %765, %770 : vector<8x32xf32>
    %772 = vector.extract_strided_slice %736 {offsets = [0, 5], sizes = [8, 1], strides = [1, 1]} : vector<8x128xf32> to vector<8x1xf32>
    %c5_220 = arith.constant 5 : index
    %c0_221 = arith.constant 0 : index
    %c0_222 = arith.constant 0 : index
    %773 = vector.load %arg18[%c5_220, %c0_221, %c0_222] : memref<8x8x32xf32, #tpu.memory_space<vmem>>, vector<1x8x32xf32>
    %774 = vector.shape_cast %773 : vector<1x8x32xf32> to vector<8x32xf32>
    %775 = vector.broadcast %772 : vector<8x1xf32> to vector<8x32xf32>
    %776 = arith.mulf %775, %774 : vector<8x32xf32>
    %777 = arith.addf %771, %776 : vector<8x32xf32>
    %778 = vector.extract_strided_slice %736 {offsets = [0, 6], sizes = [8, 1], strides = [1, 1]} : vector<8x128xf32> to vector<8x1xf32>
    %c6_223 = arith.constant 6 : index
    %c0_224 = arith.constant 0 : index
    %c0_225 = arith.constant 0 : index
    %779 = vector.load %arg18[%c6_223, %c0_224, %c0_225] : memref<8x8x32xf32, #tpu.memory_space<vmem>>, vector<1x8x32xf32>
    %780 = vector.shape_cast %779 : vector<1x8x32xf32> to vector<8x32xf32>
    %781 = vector.broadcast %778 : vector<8x1xf32> to vector<8x32xf32>
    %782 = arith.mulf %781, %780 : vector<8x32xf32>
    %783 = arith.addf %777, %782 : vector<8x32xf32>
    %784 = vector.extract_strided_slice %736 {offsets = [0, 7], sizes = [8, 1], strides = [1, 1]} : vector<8x128xf32> to vector<8x1xf32>
    %c7_226 = arith.constant 7 : index
    %c0_227 = arith.constant 0 : index
    %c0_228 = arith.constant 0 : index
    %785 = vector.load %arg18[%c7_226, %c0_227, %c0_228] : memref<8x8x32xf32, #tpu.memory_space<vmem>>, vector<1x8x32xf32>
    %786 = vector.shape_cast %785 : vector<1x8x32xf32> to vector<8x32xf32>
    %787 = vector.broadcast %784 : vector<8x1xf32> to vector<8x32xf32>
    %788 = arith.mulf %787, %786 : vector<8x32xf32>
    %789 = arith.addf %783, %788 : vector<8x32xf32>
    %790 = arith.index_cast %c2_i32_194 : i32 to index
    %c0_229 = arith.constant 0 : index
    %c0_230 = arith.constant 0 : index
    %791 = vector.load %arg19[%790, %c0_229, %c0_230] : memref<6x8x32xf32, #tpu.memory_space<vmem>>, vector<1x8x32xf32>
    %792 = vector.shape_cast %791 : vector<1x8x32xf32> to vector<8x32xf32>
    %793 = vector.shape_cast %789 : vector<8x32xf32> to vector<1x8x32xf32>
    tpu.vector_store %arg19[%790, %c0_229, %c0_230], %793 {strides = array<i32>} : memref<6x8x32xf32, #tpu.memory_space<vmem>>, vector<1x8x32xf32>,
    %794 = arith.truncf %720 : vector<8x32xf32> to vector<8x32xbf16>
    %795 = arith.truncf %789 : vector<8x32xf32> to vector<8x32xbf16>
    %c3_i32_231 = arith.constant 3 : i32
    %796 = tpu.concatenate %795, %700 in 1 : vector<8x32xbf16>, vector<8x32xbf16> -> vector<8x64xbf16>
    %cst_232 = arith.constant dense<0.000000e+00> : vector<8x128xf32>
    %797 = tpu.matmul %796, %3, %cst_232 {dimension_numbers = #tpu.dot_dimension_numbers<[1], [0], [0], [1], [0, 0, 1, 1], [], []>} : vector<8x64xbf16>, vector<64x128xbf16>, vector<8x128xf32> -> vector<8x128xf32>
    %798 = vector.broadcast %4 : vector<1x128xf32> to vector<8x128xf32>
    %799 = arith.addf %797, %798 : vector<8x128xf32>
    %800 = vector.extract_strided_slice %799 {offsets = [0, 0], sizes = [8, 96], strides = [1, 1]} : vector<8x128xf32> to vector<8x96xf32>
    %801 = arith.negf %800 : vector<8x96xf32>
    %802 = math.exp %801 : vector<8x96xf32>
    %cst_233 = arith.constant 1.000000e+00 : f32
    %803 = vector.broadcast %cst_233 : f32 to vector<8x96xf32>
    %804 = arith.addf %803, %802 : vector<8x96xf32>
    %805 = arith.divf %803, %804 : vector<8x96xf32>
    %806 = vector.extract_strided_slice %805 {offsets = [0, 0], sizes = [8, 32], strides = [1, 1]} : vector<8x96xf32> to vector<8x32xf32>
    %807 = vector.extract_strided_slice %805 {offsets = [0, 32], sizes = [8, 32], strides = [1, 1]} : vector<8x96xf32> to vector<8x32xf32>
    %808 = vector.extract_strided_slice %805 {offsets = [0, 64], sizes = [8, 32], strides = [1, 1]} : vector<8x96xf32> to vector<8x32xf32>
    %809 = vector.extract_strided_slice %799 {offsets = [0, 96], sizes = [8, 32], strides = [1, 1]} : vector<8x128xf32> to vector<8x32xf32>
    %810 = math.tanh %809 : vector<8x32xf32>
    %811 = arith.mulf %807, %697 : vector<8x32xf32>
    %812 = arith.mulf %806, %810 : vector<8x32xf32>
    %813 = arith.addf %811, %812 : vector<8x32xf32>
    %814 = math.tanh %813 : vector<8x32xf32>
    %815 = arith.mulf %808, %814 : vector<8x32xf32>
    %816 = arith.truncf %815 : vector<8x32xf32> to vector<8x32xbf16>
    %817 = tpu.concatenate %816, %794 in 1 : vector<8x32xbf16>, vector<8x32xbf16> -> vector<8x64xbf16>
    %cst_234 = arith.constant dense<0.000000e+00> : vector<8x128xf32>
    %818 = tpu.matmul %817, %5, %cst_234 {dimension_numbers = #tpu.dot_dimension_numbers<[1], [0], [0], [1], [0, 0, 1, 1], [], []>} : vector<8x64xbf16>, vector<64x128xbf16>, vector<8x128xf32> -> vector<8x128xf32>
    %819 = vector.broadcast %6 : vector<1x128xf32> to vector<8x128xf32>
    %820 = arith.addf %818, %819 : vector<8x128xf32>
    %821 = vector.extract_strided_slice %820 {offsets = [0, 0], sizes = [8, 96], strides = [1, 1]} : vector<8x128xf32> to vector<8x96xf32>
    %822 = arith.negf %821 : vector<8x96xf32>
    %823 = math.exp %822 : vector<8x96xf32>
    %cst_235 = arith.constant 1.000000e+00 : f32
    %824 = vector.broadcast %cst_235 : f32 to vector<8x96xf32>
    %825 = arith.addf %824, %823 : vector<8x96xf32>
    %826 = arith.divf %824, %825 : vector<8x96xf32>
    %827 = vector.extract_strided_slice %826 {offsets = [0, 0], sizes = [8, 32], strides = [1, 1]} : vector<8x96xf32> to vector<8x32xf32>
    %828 = vector.extract_strided_slice %826 {offsets = [0, 32], sizes = [8, 32], strides = [1, 1]} : vector<8x96xf32> to vector<8x32xf32>
    %829 = vector.extract_strided_slice %826 {offsets = [0, 64], sizes = [8, 32], strides = [1, 1]} : vector<8x96xf32> to vector<8x32xf32>
    %830 = vector.extract_strided_slice %820 {offsets = [0, 96], sizes = [8, 32], strides = [1, 1]} : vector<8x128xf32> to vector<8x32xf32>
    %831 = math.tanh %830 : vector<8x32xf32>
    %832 = arith.mulf %828, %718 : vector<8x32xf32>
    %833 = arith.mulf %827, %831 : vector<8x32xf32>
    %834 = arith.addf %832, %833 : vector<8x32xf32>
    %835 = math.tanh %834 : vector<8x32xf32>
    %836 = arith.mulf %829, %835 : vector<8x32xf32>
    %837 = vector.broadcast %7 : vector<1x32xf32> to vector<8x32xf32>
    %838 = arith.mulf %836, %837 : vector<8x32xf32>
    %cst_236 = arith.constant dense<0.000000e+00> : vector<8xf32>
    %839 = vector.multi_reduction <add>, %838, %cst_236 [1] : vector<8x32xf32> to vector<8xf32>
    %840 = vector.shape_cast %839 : vector<8xf32> to vector<8x1xf32>
    %841 = vector.broadcast %840 : vector<8x1xf32> to vector<8x128xf32>
    %842 = arith.addf %447, %841 : vector<8x128xf32>
    %cst_237 = arith.constant dense<0xFF800000> : vector<8xf32>
    %843 = vector.multi_reduction <maximumf>, %842, %cst_237 [1] : vector<8x128xf32> to vector<8xf32>
    %844 = vector.shape_cast %843 : vector<8xf32> to vector<8x1xf32>
    %845 = vector.broadcast %844 : vector<8x1xf32> to vector<8x128xf32>
    %846 = arith.subf %842, %845 : vector<8x128xf32>
    %847 = math.exp %846 : vector<8x128xf32>
    %cst_238 = arith.constant dense<0.000000e+00> : vector<8xf32>
    %848 = vector.multi_reduction <add>, %847, %cst_238 [1] : vector<8x128xf32> to vector<8xf32>
    %849 = vector.shape_cast %848 : vector<8xf32> to vector<8x1xf32>
    %850 = tpu.reciprocal %849 {approx = true} : vector<8x1xf32> -> vector<8x1xf32>
    %851 = vector.broadcast %850 : vector<8x1xf32> to vector<8x128xf32>
    %852 = arith.mulf %847, %851 : vector<8x128xf32>
    %853 = arith.index_cast %c3_i32_231 : i32 to index
    %c0_239 = arith.constant 0 : index
    %c0_240 = arith.constant 0 : index
    %854 = vector.load %arg16[%853, %c0_239, %c0_240] : memref<6x8x128xf32, #tpu.memory_space<vmem>>, vector<1x8x128xf32>
    %855 = vector.shape_cast %854 : vector<1x8x128xf32> to vector<8x128xf32>
    %856 = vector.shape_cast %852 : vector<8x128xf32> to vector<1x8x128xf32>
    tpu.vector_store %arg16[%853, %c0_239, %c0_240], %856 {strides = array<i32>} : memref<6x8x128xf32, #tpu.memory_space<vmem>>, vector<1x8x128xf32>,
    %cst_241 = arith.constant 0.000000e+00 : f32
    %857 = vector.broadcast %cst_241 : f32 to vector<8x32xf32>
    %858 = vector.extract_strided_slice %852 {offsets = [0, 0], sizes = [8, 1], strides = [1, 1]} : vector<8x128xf32> to vector<8x1xf32>
    %c0_242 = arith.constant 0 : index
    %c0_243 = arith.constant 0 : index
    %c0_244 = arith.constant 0 : index
    %859 = vector.load %arg18[%c0_242, %c0_243, %c0_244] : memref<8x8x32xf32, #tpu.memory_space<vmem>>, vector<1x8x32xf32>
    %860 = vector.shape_cast %859 : vector<1x8x32xf32> to vector<8x32xf32>
    %861 = vector.broadcast %858 : vector<8x1xf32> to vector<8x32xf32>
    %862 = arith.mulf %861, %860 : vector<8x32xf32>
    %863 = arith.addf %857, %862 : vector<8x32xf32>
    %864 = vector.extract_strided_slice %852 {offsets = [0, 1], sizes = [8, 1], strides = [1, 1]} : vector<8x128xf32> to vector<8x1xf32>
    %c1_245 = arith.constant 1 : index
    %c0_246 = arith.constant 0 : index
    %c0_247 = arith.constant 0 : index
    %865 = vector.load %arg18[%c1_245, %c0_246, %c0_247] : memref<8x8x32xf32, #tpu.memory_space<vmem>>, vector<1x8x32xf32>
    %866 = vector.shape_cast %865 : vector<1x8x32xf32> to vector<8x32xf32>
    %867 = vector.broadcast %864 : vector<8x1xf32> to vector<8x32xf32>
    %868 = arith.mulf %867, %866 : vector<8x32xf32>
    %869 = arith.addf %863, %868 : vector<8x32xf32>
    %870 = vector.extract_strided_slice %852 {offsets = [0, 2], sizes = [8, 1], strides = [1, 1]} : vector<8x128xf32> to vector<8x1xf32>
    %c2_248 = arith.constant 2 : index
    %c0_249 = arith.constant 0 : index
    %c0_250 = arith.constant 0 : index
    %871 = vector.load %arg18[%c2_248, %c0_249, %c0_250] : memref<8x8x32xf32, #tpu.memory_space<vmem>>, vector<1x8x32xf32>
    %872 = vector.shape_cast %871 : vector<1x8x32xf32> to vector<8x32xf32>
    %873 = vector.broadcast %870 : vector<8x1xf32> to vector<8x32xf32>
    %874 = arith.mulf %873, %872 : vector<8x32xf32>
    %875 = arith.addf %869, %874 : vector<8x32xf32>
    %876 = vector.extract_strided_slice %852 {offsets = [0, 3], sizes = [8, 1], strides = [1, 1]} : vector<8x128xf32> to vector<8x1xf32>
    %c3_251 = arith.constant 3 : index
    %c0_252 = arith.constant 0 : index
    %c0_253 = arith.constant 0 : index
    %877 = vector.load %arg18[%c3_251, %c0_252, %c0_253] : memref<8x8x32xf32, #tpu.memory_space<vmem>>, vector<1x8x32xf32>
    %878 = vector.shape_cast %877 : vector<1x8x32xf32> to vector<8x32xf32>
    %879 = vector.broadcast %876 : vector<8x1xf32> to vector<8x32xf32>
    %880 = arith.mulf %879, %878 : vector<8x32xf32>
    %881 = arith.addf %875, %880 : vector<8x32xf32>
    %882 = vector.extract_strided_slice %852 {offsets = [0, 4], sizes = [8, 1], strides = [1, 1]} : vector<8x128xf32> to vector<8x1xf32>
    %c4_254 = arith.constant 4 : index
    %c0_255 = arith.constant 0 : index
    %c0_256 = arith.constant 0 : index
    %883 = vector.load %arg18[%c4_254, %c0_255, %c0_256] : memref<8x8x32xf32, #tpu.memory_space<vmem>>, vector<1x8x32xf32>
    %884 = vector.shape_cast %883 : vector<1x8x32xf32> to vector<8x32xf32>
    %885 = vector.broadcast %882 : vector<8x1xf32> to vector<8x32xf32>
    %886 = arith.mulf %885, %884 : vector<8x32xf32>
    %887 = arith.addf %881, %886 : vector<8x32xf32>
    %888 = vector.extract_strided_slice %852 {offsets = [0, 5], sizes = [8, 1], strides = [1, 1]} : vector<8x128xf32> to vector<8x1xf32>
    %c5_257 = arith.constant 5 : index
    %c0_258 = arith.constant 0 : index
    %c0_259 = arith.constant 0 : index
    %889 = vector.load %arg18[%c5_257, %c0_258, %c0_259] : memref<8x8x32xf32, #tpu.memory_space<vmem>>, vector<1x8x32xf32>
    %890 = vector.shape_cast %889 : vector<1x8x32xf32> to vector<8x32xf32>
    %891 = vector.broadcast %888 : vector<8x1xf32> to vector<8x32xf32>
    %892 = arith.mulf %891, %890 : vector<8x32xf32>
    %893 = arith.addf %887, %892 : vector<8x32xf32>
    %894 = vector.extract_strided_slice %852 {offsets = [0, 6], sizes = [8, 1], strides = [1, 1]} : vector<8x128xf32> to vector<8x1xf32>
    %c6_260 = arith.constant 6 : index
    %c0_261 = arith.constant 0 : index
    %c0_262 = arith.constant 0 : index
    %895 = vector.load %arg18[%c6_260, %c0_261, %c0_262] : memref<8x8x32xf32, #tpu.memory_space<vmem>>, vector<1x8x32xf32>
    %896 = vector.shape_cast %895 : vector<1x8x32xf32> to vector<8x32xf32>
    %897 = vector.broadcast %894 : vector<8x1xf32> to vector<8x32xf32>
    %898 = arith.mulf %897, %896 : vector<8x32xf32>
    %899 = arith.addf %893, %898 : vector<8x32xf32>
    %900 = vector.extract_strided_slice %852 {offsets = [0, 7], sizes = [8, 1], strides = [1, 1]} : vector<8x128xf32> to vector<8x1xf32>
    %c7_263 = arith.constant 7 : index
    %c0_264 = arith.constant 0 : index
    %c0_265 = arith.constant 0 : index
    %901 = vector.load %arg18[%c7_263, %c0_264, %c0_265] : memref<8x8x32xf32, #tpu.memory_space<vmem>>, vector<1x8x32xf32>
    %902 = vector.shape_cast %901 : vector<1x8x32xf32> to vector<8x32xf32>
    %903 = vector.broadcast %900 : vector<8x1xf32> to vector<8x32xf32>
    %904 = arith.mulf %903, %902 : vector<8x32xf32>
    %905 = arith.addf %899, %904 : vector<8x32xf32>
    %906 = arith.index_cast %c3_i32_231 : i32 to index
    %c0_266 = arith.constant 0 : index
    %c0_267 = arith.constant 0 : index
    %907 = vector.load %arg19[%906, %c0_266, %c0_267] : memref<6x8x32xf32, #tpu.memory_space<vmem>>, vector<1x8x32xf32>
    %908 = vector.shape_cast %907 : vector<1x8x32xf32> to vector<8x32xf32>
    %909 = vector.shape_cast %905 : vector<8x32xf32> to vector<1x8x32xf32>
    tpu.vector_store %arg19[%906, %c0_266, %c0_267], %909 {strides = array<i32>} : memref<6x8x32xf32, #tpu.memory_space<vmem>>, vector<1x8x32xf32>,
    %910 = arith.truncf %836 : vector<8x32xf32> to vector<8x32xbf16>
    %911 = arith.truncf %905 : vector<8x32xf32> to vector<8x32xbf16>
    %c4_i32_268 = arith.constant 4 : i32
    %912 = tpu.concatenate %911, %816 in 1 : vector<8x32xbf16>, vector<8x32xbf16> -> vector<8x64xbf16>
    %cst_269 = arith.constant dense<0.000000e+00> : vector<8x128xf32>
    %913 = tpu.matmul %912, %3, %cst_269 {dimension_numbers = #tpu.dot_dimension_numbers<[1], [0], [0], [1], [0, 0, 1, 1], [], []>} : vector<8x64xbf16>, vector<64x128xbf16>, vector<8x128xf32> -> vector<8x128xf32>
    %914 = vector.broadcast %4 : vector<1x128xf32> to vector<8x128xf32>
    %915 = arith.addf %913, %914 : vector<8x128xf32>
    %916 = vector.extract_strided_slice %915 {offsets = [0, 0], sizes = [8, 96], strides = [1, 1]} : vector<8x128xf32> to vector<8x96xf32>
    %917 = arith.negf %916 : vector<8x96xf32>
    %918 = math.exp %917 : vector<8x96xf32>
    %cst_270 = arith.constant 1.000000e+00 : f32
    %919 = vector.broadcast %cst_270 : f32 to vector<8x96xf32>
    %920 = arith.addf %919, %918 : vector<8x96xf32>
    %921 = arith.divf %919, %920 : vector<8x96xf32>
    %922 = vector.extract_strided_slice %921 {offsets = [0, 0], sizes = [8, 32], strides = [1, 1]} : vector<8x96xf32> to vector<8x32xf32>
    %923 = vector.extract_strided_slice %921 {offsets = [0, 32], sizes = [8, 32], strides = [1, 1]} : vector<8x96xf32> to vector<8x32xf32>
    %924 = vector.extract_strided_slice %921 {offsets = [0, 64], sizes = [8, 32], strides = [1, 1]} : vector<8x96xf32> to vector<8x32xf32>
    %925 = vector.extract_strided_slice %915 {offsets = [0, 96], sizes = [8, 32], strides = [1, 1]} : vector<8x128xf32> to vector<8x32xf32>
    %926 = math.tanh %925 : vector<8x32xf32>
    %927 = arith.mulf %923, %813 : vector<8x32xf32>
    %928 = arith.mulf %922, %926 : vector<8x32xf32>
    %929 = arith.addf %927, %928 : vector<8x32xf32>
    %930 = math.tanh %929 : vector<8x32xf32>
    %931 = arith.mulf %924, %930 : vector<8x32xf32>
    %932 = arith.truncf %931 : vector<8x32xf32> to vector<8x32xbf16>
    %933 = tpu.concatenate %932, %910 in 1 : vector<8x32xbf16>, vector<8x32xbf16> -> vector<8x64xbf16>
    %cst_271 = arith.constant dense<0.000000e+00> : vector<8x128xf32>
    %934 = tpu.matmul %933, %5, %cst_271 {dimension_numbers = #tpu.dot_dimension_numbers<[1], [0], [0], [1], [0, 0, 1, 1], [], []>} : vector<8x64xbf16>, vector<64x128xbf16>, vector<8x128xf32> -> vector<8x128xf32>
    %935 = vector.broadcast %6 : vector<1x128xf32> to vector<8x128xf32>
    %936 = arith.addf %934, %935 : vector<8x128xf32>
    %937 = vector.extract_strided_slice %936 {offsets = [0, 0], sizes = [8, 96], strides = [1, 1]} : vector<8x128xf32> to vector<8x96xf32>
    %938 = arith.negf %937 : vector<8x96xf32>
    %939 = math.exp %938 : vector<8x96xf32>
    %cst_272 = arith.constant 1.000000e+00 : f32
    %940 = vector.broadcast %cst_272 : f32 to vector<8x96xf32>
    %941 = arith.addf %940, %939 : vector<8x96xf32>
    %942 = arith.divf %940, %941 : vector<8x96xf32>
    %943 = vector.extract_strided_slice %942 {offsets = [0, 0], sizes = [8, 32], strides = [1, 1]} : vector<8x96xf32> to vector<8x32xf32>
    %944 = vector.extract_strided_slice %942 {offsets = [0, 32], sizes = [8, 32], strides = [1, 1]} : vector<8x96xf32> to vector<8x32xf32>
    %945 = vector.extract_strided_slice %942 {offsets = [0, 64], sizes = [8, 32], strides = [1, 1]} : vector<8x96xf32> to vector<8x32xf32>
    %946 = vector.extract_strided_slice %936 {offsets = [0, 96], sizes = [8, 32], strides = [1, 1]} : vector<8x128xf32> to vector<8x32xf32>
    %947 = math.tanh %946 : vector<8x32xf32>
    %948 = arith.mulf %944, %834 : vector<8x32xf32>
    %949 = arith.mulf %943, %947 : vector<8x32xf32>
    %950 = arith.addf %948, %949 : vector<8x32xf32>
    %951 = math.tanh %950 : vector<8x32xf32>
    %952 = arith.mulf %945, %951 : vector<8x32xf32>
    %953 = vector.broadcast %7 : vector<1x32xf32> to vector<8x32xf32>
    %954 = arith.mulf %952, %953 : vector<8x32xf32>
    %cst_273 = arith.constant dense<0.000000e+00> : vector<8xf32>
    %955 = vector.multi_reduction <add>, %954, %cst_273 [1] : vector<8x32xf32> to vector<8xf32>
    %956 = vector.shape_cast %955 : vector<8xf32> to vector<8x1xf32>
    %957 = vector.broadcast %956 : vector<8x1xf32> to vector<8x128xf32>
    %958 = arith.addf %447, %957 : vector<8x128xf32>
    %cst_274 = arith.constant dense<0xFF800000> : vector<8xf32>
    %959 = vector.multi_reduction <maximumf>, %958, %cst_274 [1] : vector<8x128xf32> to vector<8xf32>
    %960 = vector.shape_cast %959 : vector<8xf32> to vector<8x1xf32>
    %961 = vector.broadcast %960 : vector<8x1xf32> to vector<8x128xf32>
    %962 = arith.subf %958, %961 : vector<8x128xf32>
    %963 = math.exp %962 : vector<8x128xf32>
    %cst_275 = arith.constant dense<0.000000e+00> : vector<8xf32>
    %964 = vector.multi_reduction <add>, %963, %cst_275 [1] : vector<8x128xf32> to vector<8xf32>
    %965 = vector.shape_cast %964 : vector<8xf32> to vector<8x1xf32>
    %966 = tpu.reciprocal %965 {approx = true} : vector<8x1xf32> -> vector<8x1xf32>
    %967 = vector.broadcast %966 : vector<8x1xf32> to vector<8x128xf32>
    %968 = arith.mulf %963, %967 : vector<8x128xf32>
    %969 = arith.index_cast %c4_i32_268 : i32 to index
    %c0_276 = arith.constant 0 : index
    %c0_277 = arith.constant 0 : index
    %970 = vector.load %arg16[%969, %c0_276, %c0_277] : memref<6x8x128xf32, #tpu.memory_space<vmem>>, vector<1x8x128xf32>
    %971 = vector.shape_cast %970 : vector<1x8x128xf32> to vector<8x128xf32>
    %972 = vector.shape_cast %968 : vector<8x128xf32> to vector<1x8x128xf32>
    tpu.vector_store %arg16[%969, %c0_276, %c0_277], %972 {strides = array<i32>} : memref<6x8x128xf32, #tpu.memory_space<vmem>>, vector<1x8x128xf32>,
    %cst_278 = arith.constant 0.000000e+00 : f32
    %973 = vector.broadcast %cst_278 : f32 to vector<8x32xf32>
    %974 = vector.extract_strided_slice %968 {offsets = [0, 0], sizes = [8, 1], strides = [1, 1]} : vector<8x128xf32> to vector<8x1xf32>
    %c0_279 = arith.constant 0 : index
    %c0_280 = arith.constant 0 : index
    %c0_281 = arith.constant 0 : index
    %975 = vector.load %arg18[%c0_279, %c0_280, %c0_281] : memref<8x8x32xf32, #tpu.memory_space<vmem>>, vector<1x8x32xf32>
    %976 = vector.shape_cast %975 : vector<1x8x32xf32> to vector<8x32xf32>
    %977 = vector.broadcast %974 : vector<8x1xf32> to vector<8x32xf32>
    %978 = arith.mulf %977, %976 : vector<8x32xf32>
    %979 = arith.addf %973, %978 : vector<8x32xf32>
    %980 = vector.extract_strided_slice %968 {offsets = [0, 1], sizes = [8, 1], strides = [1, 1]} : vector<8x128xf32> to vector<8x1xf32>
    %c1_282 = arith.constant 1 : index
    %c0_283 = arith.constant 0 : index
    %c0_284 = arith.constant 0 : index
    %981 = vector.load %arg18[%c1_282, %c0_283, %c0_284] : memref<8x8x32xf32, #tpu.memory_space<vmem>>, vector<1x8x32xf32>
    %982 = vector.shape_cast %981 : vector<1x8x32xf32> to vector<8x32xf32>
    %983 = vector.broadcast %980 : vector<8x1xf32> to vector<8x32xf32>
    %984 = arith.mulf %983, %982 : vector<8x32xf32>
    %985 = arith.addf %979, %984 : vector<8x32xf32>
    %986 = vector.extract_strided_slice %968 {offsets = [0, 2], sizes = [8, 1], strides = [1, 1]} : vector<8x128xf32> to vector<8x1xf32>
    %c2_285 = arith.constant 2 : index
    %c0_286 = arith.constant 0 : index
    %c0_287 = arith.constant 0 : index
    %987 = vector.load %arg18[%c2_285, %c0_286, %c0_287] : memref<8x8x32xf32, #tpu.memory_space<vmem>>, vector<1x8x32xf32>
    %988 = vector.shape_cast %987 : vector<1x8x32xf32> to vector<8x32xf32>
    %989 = vector.broadcast %986 : vector<8x1xf32> to vector<8x32xf32>
    %990 = arith.mulf %989, %988 : vector<8x32xf32>
    %991 = arith.addf %985, %990 : vector<8x32xf32>
    %992 = vector.extract_strided_slice %968 {offsets = [0, 3], sizes = [8, 1], strides = [1, 1]} : vector<8x128xf32> to vector<8x1xf32>
    %c3_288 = arith.constant 3 : index
    %c0_289 = arith.constant 0 : index
    %c0_290 = arith.constant 0 : index
    %993 = vector.load %arg18[%c3_288, %c0_289, %c0_290] : memref<8x8x32xf32, #tpu.memory_space<vmem>>, vector<1x8x32xf32>
    %994 = vector.shape_cast %993 : vector<1x8x32xf32> to vector<8x32xf32>
    %995 = vector.broadcast %992 : vector<8x1xf32> to vector<8x32xf32>
    %996 = arith.mulf %995, %994 : vector<8x32xf32>
    %997 = arith.addf %991, %996 : vector<8x32xf32>
    %998 = vector.extract_strided_slice %968 {offsets = [0, 4], sizes = [8, 1], strides = [1, 1]} : vector<8x128xf32> to vector<8x1xf32>
    %c4_291 = arith.constant 4 : index
    %c0_292 = arith.constant 0 : index
    %c0_293 = arith.constant 0 : index
    %999 = vector.load %arg18[%c4_291, %c0_292, %c0_293] : memref<8x8x32xf32, #tpu.memory_space<vmem>>, vector<1x8x32xf32>
    %1000 = vector.shape_cast %999 : vector<1x8x32xf32> to vector<8x32xf32>
    %1001 = vector.broadcast %998 : vector<8x1xf32> to vector<8x32xf32>
    %1002 = arith.mulf %1001, %1000 : vector<8x32xf32>
    %1003 = arith.addf %997, %1002 : vector<8x32xf32>
    %1004 = vector.extract_strided_slice %968 {offsets = [0, 5], sizes = [8, 1], strides = [1, 1]} : vector<8x128xf32> to vector<8x1xf32>
    %c5_294 = arith.constant 5 : index
    %c0_295 = arith.constant 0 : index
    %c0_296 = arith.constant 0 : index
    %1005 = vector.load %arg18[%c5_294, %c0_295, %c0_296] : memref<8x8x32xf32, #tpu.memory_space<vmem>>, vector<1x8x32xf32>
    %1006 = vector.shape_cast %1005 : vector<1x8x32xf32> to vector<8x32xf32>
    %1007 = vector.broadcast %1004 : vector<8x1xf32> to vector<8x32xf32>
    %1008 = arith.mulf %1007, %1006 : vector<8x32xf32>
    %1009 = arith.addf %1003, %1008 : vector<8x32xf32>
    %1010 = vector.extract_strided_slice %968 {offsets = [0, 6], sizes = [8, 1], strides = [1, 1]} : vector<8x128xf32> to vector<8x1xf32>
    %c6_297 = arith.constant 6 : index
    %c0_298 = arith.constant 0 : index
    %c0_299 = arith.constant 0 : index
    %1011 = vector.load %arg18[%c6_297, %c0_298, %c0_299] : memref<8x8x32xf32, #tpu.memory_space<vmem>>, vector<1x8x32xf32>
    %1012 = vector.shape_cast %1011 : vector<1x8x32xf32> to vector<8x32xf32>
    %1013 = vector.broadcast %1010 : vector<8x1xf32> to vector<8x32xf32>
    %1014 = arith.mulf %1013, %1012 : vector<8x32xf32>
    %1015 = arith.addf %1009, %1014 : vector<8x32xf32>
    %1016 = vector.extract_strided_slice %968 {offsets = [0, 7], sizes = [8, 1], strides = [1, 1]} : vector<8x128xf32> to vector<8x1xf32>
    %c7_300 = arith.constant 7 : index
    %c0_301 = arith.constant 0 : index
    %c0_302 = arith.constant 0 : index
    %1017 = vector.load %arg18[%c7_300, %c0_301, %c0_302] : memref<8x8x32xf32, #tpu.memory_space<vmem>>, vector<1x8x32xf32>
    %1018 = vector.shape_cast %1017 : vector<1x8x32xf32> to vector<8x32xf32>
    %1019 = vector.broadcast %1016 : vector<8x1xf32> to vector<8x32xf32>
    %1020 = arith.mulf %1019, %1018 : vector<8x32xf32>
    %1021 = arith.addf %1015, %1020 : vector<8x32xf32>
    %1022 = arith.index_cast %c4_i32_268 : i32 to index
    %c0_303 = arith.constant 0 : index
    %c0_304 = arith.constant 0 : index
    %1023 = vector.load %arg19[%1022, %c0_303, %c0_304] : memref<6x8x32xf32, #tpu.memory_space<vmem>>, vector<1x8x32xf32>
    %1024 = vector.shape_cast %1023 : vector<1x8x32xf32> to vector<8x32xf32>
    %1025 = vector.shape_cast %1021 : vector<8x32xf32> to vector<1x8x32xf32>
    tpu.vector_store %arg19[%1022, %c0_303, %c0_304], %1025 {strides = array<i32>} : memref<6x8x32xf32, #tpu.memory_space<vmem>>, vector<1x8x32xf32>,
    %1026 = arith.truncf %952 : vector<8x32xf32> to vector<8x32xbf16>
    %1027 = arith.truncf %1021 : vector<8x32xf32> to vector<8x32xbf16>
    %c5_i32_305 = arith.constant 5 : i32
    %1028 = tpu.concatenate %1027, %932 in 1 : vector<8x32xbf16>, vector<8x32xbf16> -> vector<8x64xbf16>
    %cst_306 = arith.constant dense<0.000000e+00> : vector<8x128xf32>
    %1029 = tpu.matmul %1028, %3, %cst_306 {dimension_numbers = #tpu.dot_dimension_numbers<[1], [0], [0], [1], [0, 0, 1, 1], [], []>} : vector<8x64xbf16>, vector<64x128xbf16>, vector<8x128xf32> -> vector<8x128xf32>
    %1030 = vector.broadcast %4 : vector<1x128xf32> to vector<8x128xf32>
    %1031 = arith.addf %1029, %1030 : vector<8x128xf32>
    %1032 = vector.extract_strided_slice %1031 {offsets = [0, 0], sizes = [8, 96], strides = [1, 1]} : vector<8x128xf32> to vector<8x96xf32>
    %1033 = arith.negf %1032 : vector<8x96xf32>
    %1034 = math.exp %1033 : vector<8x96xf32>
    %cst_307 = arith.constant 1.000000e+00 : f32
    %1035 = vector.broadcast %cst_307 : f32 to vector<8x96xf32>
    %1036 = arith.addf %1035, %1034 : vector<8x96xf32>
    %1037 = arith.divf %1035, %1036 : vector<8x96xf32>
    %1038 = vector.extract_strided_slice %1037 {offsets = [0, 0], sizes = [8, 32], strides = [1, 1]} : vector<8x96xf32> to vector<8x32xf32>
    %1039 = vector.extract_strided_slice %1037 {offsets = [0, 32], sizes = [8, 32], strides = [1, 1]} : vector<8x96xf32> to vector<8x32xf32>
    %1040 = vector.extract_strided_slice %1037 {offsets = [0, 64], sizes = [8, 32], strides = [1, 1]} : vector<8x96xf32> to vector<8x32xf32>
    %1041 = vector.extract_strided_slice %1031 {offsets = [0, 96], sizes = [8, 32], strides = [1, 1]} : vector<8x128xf32> to vector<8x32xf32>
    %1042 = math.tanh %1041 : vector<8x32xf32>
    %1043 = arith.mulf %1039, %929 : vector<8x32xf32>
    %1044 = arith.mulf %1038, %1042 : vector<8x32xf32>
    %1045 = arith.addf %1043, %1044 : vector<8x32xf32>
    %1046 = math.tanh %1045 : vector<8x32xf32>
    %1047 = arith.mulf %1040, %1046 : vector<8x32xf32>
    %1048 = arith.truncf %1047 : vector<8x32xf32> to vector<8x32xbf16>
    %1049 = tpu.concatenate %1048, %1026 in 1 : vector<8x32xbf16>, vector<8x32xbf16> -> vector<8x64xbf16>
    %cst_308 = arith.constant dense<0.000000e+00> : vector<8x128xf32>
    %1050 = tpu.matmul %1049, %5, %cst_308 {dimension_numbers = #tpu.dot_dimension_numbers<[1], [0], [0], [1], [0, 0, 1, 1], [], []>} : vector<8x64xbf16>, vector<64x128xbf16>, vector<8x128xf32> -> vector<8x128xf32>
    %1051 = vector.broadcast %6 : vector<1x128xf32> to vector<8x128xf32>
    %1052 = arith.addf %1050, %1051 : vector<8x128xf32>
    %1053 = vector.extract_strided_slice %1052 {offsets = [0, 0], sizes = [8, 96], strides = [1, 1]} : vector<8x128xf32> to vector<8x96xf32>
    %1054 = arith.negf %1053 : vector<8x96xf32>
    %1055 = math.exp %1054 : vector<8x96xf32>
    %cst_309 = arith.constant 1.000000e+00 : f32
    %1056 = vector.broadcast %cst_309 : f32 to vector<8x96xf32>
    %1057 = arith.addf %1056, %1055 : vector<8x96xf32>
    %1058 = arith.divf %1056, %1057 : vector<8x96xf32>
    %1059 = vector.extract_strided_slice %1058 {offsets = [0, 0], sizes = [8, 32], strides = [1, 1]} : vector<8x96xf32> to vector<8x32xf32>
    %1060 = vector.extract_strided_slice %1058 {offsets = [0, 32], sizes = [8, 32], strides = [1, 1]} : vector<8x96xf32> to vector<8x32xf32>
    %1061 = vector.extract_strided_slice %1058 {offsets = [0, 64], sizes = [8, 32], strides = [1, 1]} : vector<8x96xf32> to vector<8x32xf32>
    %1062 = vector.extract_strided_slice %1052 {offsets = [0, 96], sizes = [8, 32], strides = [1, 1]} : vector<8x128xf32> to vector<8x32xf32>
    %1063 = math.tanh %1062 : vector<8x32xf32>
    %1064 = arith.mulf %1060, %950 : vector<8x32xf32>
    %1065 = arith.mulf %1059, %1063 : vector<8x32xf32>
    %1066 = arith.addf %1064, %1065 : vector<8x32xf32>
    %1067 = math.tanh %1066 : vector<8x32xf32>
    %1068 = arith.mulf %1061, %1067 : vector<8x32xf32>
    %1069 = vector.broadcast %7 : vector<1x32xf32> to vector<8x32xf32>
    %1070 = arith.mulf %1068, %1069 : vector<8x32xf32>
    %cst_310 = arith.constant dense<0.000000e+00> : vector<8xf32>
    %1071 = vector.multi_reduction <add>, %1070, %cst_310 [1] : vector<8x32xf32> to vector<8xf32>
    %1072 = vector.shape_cast %1071 : vector<8xf32> to vector<8x1xf32>
    %1073 = vector.broadcast %1072 : vector<8x1xf32> to vector<8x128xf32>
    %1074 = arith.addf %447, %1073 : vector<8x128xf32>
    %cst_311 = arith.constant dense<0xFF800000> : vector<8xf32>
    %1075 = vector.multi_reduction <maximumf>, %1074, %cst_311 [1] : vector<8x128xf32> to vector<8xf32>
    %1076 = vector.shape_cast %1075 : vector<8xf32> to vector<8x1xf32>
    %1077 = vector.broadcast %1076 : vector<8x1xf32> to vector<8x128xf32>
    %1078 = arith.subf %1074, %1077 : vector<8x128xf32>
    %1079 = math.exp %1078 : vector<8x128xf32>
    %cst_312 = arith.constant dense<0.000000e+00> : vector<8xf32>
    %1080 = vector.multi_reduction <add>, %1079, %cst_312 [1] : vector<8x128xf32> to vector<8xf32>
    %1081 = vector.shape_cast %1080 : vector<8xf32> to vector<8x1xf32>
    %1082 = tpu.reciprocal %1081 {approx = true} : vector<8x1xf32> -> vector<8x1xf32>
    %1083 = vector.broadcast %1082 : vector<8x1xf32> to vector<8x128xf32>
    %1084 = arith.mulf %1079, %1083 : vector<8x128xf32>
    %1085 = arith.index_cast %c5_i32_305 : i32 to index
    %c0_313 = arith.constant 0 : index
    %c0_314 = arith.constant 0 : index
    %1086 = vector.load %arg16[%1085, %c0_313, %c0_314] : memref<6x8x128xf32, #tpu.memory_space<vmem>>, vector<1x8x128xf32>
    %1087 = vector.shape_cast %1086 : vector<1x8x128xf32> to vector<8x128xf32>
    %1088 = vector.shape_cast %1084 : vector<8x128xf32> to vector<1x8x128xf32>
    tpu.vector_store %arg16[%1085, %c0_313, %c0_314], %1088 {strides = array<i32>} : memref<6x8x128xf32, #tpu.memory_space<vmem>>, vector<1x8x128xf32>,
    %cst_315 = arith.constant 0.000000e+00 : f32
    %1089 = vector.broadcast %cst_315 : f32 to vector<8x32xf32>
    %1090 = vector.extract_strided_slice %1084 {offsets = [0, 0], sizes = [8, 1], strides = [1, 1]} : vector<8x128xf32> to vector<8x1xf32>
    %c0_316 = arith.constant 0 : index
    %c0_317 = arith.constant 0 : index
    %c0_318 = arith.constant 0 : index
    %1091 = vector.load %arg18[%c0_316, %c0_317, %c0_318] : memref<8x8x32xf32, #tpu.memory_space<vmem>>, vector<1x8x32xf32>
    %1092 = vector.shape_cast %1091 : vector<1x8x32xf32> to vector<8x32xf32>
    %1093 = vector.broadcast %1090 : vector<8x1xf32> to vector<8x32xf32>
    %1094 = arith.mulf %1093, %1092 : vector<8x32xf32>
    %1095 = arith.addf %1089, %1094 : vector<8x32xf32>
    %1096 = vector.extract_strided_slice %1084 {offsets = [0, 1], sizes = [8, 1], strides = [1, 1]} : vector<8x128xf32> to vector<8x1xf32>
    %c1_319 = arith.constant 1 : index
    %c0_320 = arith.constant 0 : index
    %c0_321 = arith.constant 0 : index
    %1097 = vector.load %arg18[%c1_319, %c0_320, %c0_321] : memref<8x8x32xf32, #tpu.memory_space<vmem>>, vector<1x8x32xf32>
    %1098 = vector.shape_cast %1097 : vector<1x8x32xf32> to vector<8x32xf32>
    %1099 = vector.broadcast %1096 : vector<8x1xf32> to vector<8x32xf32>
    %1100 = arith.mulf %1099, %1098 : vector<8x32xf32>
    %1101 = arith.addf %1095, %1100 : vector<8x32xf32>
    %1102 = vector.extract_strided_slice %1084 {offsets = [0, 2], sizes = [8, 1], strides = [1, 1]} : vector<8x128xf32> to vector<8x1xf32>
    %c2_322 = arith.constant 2 : index
    %c0_323 = arith.constant 0 : index
    %c0_324 = arith.constant 0 : index
    %1103 = vector.load %arg18[%c2_322, %c0_323, %c0_324] : memref<8x8x32xf32, #tpu.memory_space<vmem>>, vector<1x8x32xf32>
    %1104 = vector.shape_cast %1103 : vector<1x8x32xf32> to vector<8x32xf32>
    %1105 = vector.broadcast %1102 : vector<8x1xf32> to vector<8x32xf32>
    %1106 = arith.mulf %1105, %1104 : vector<8x32xf32>
    %1107 = arith.addf %1101, %1106 : vector<8x32xf32>
    %1108 = vector.extract_strided_slice %1084 {offsets = [0, 3], sizes = [8, 1], strides = [1, 1]} : vector<8x128xf32> to vector<8x1xf32>
    %c3_325 = arith.constant 3 : index
    %c0_326 = arith.constant 0 : index
    %c0_327 = arith.constant 0 : index
    %1109 = vector.load %arg18[%c3_325, %c0_326, %c0_327] : memref<8x8x32xf32, #tpu.memory_space<vmem>>, vector<1x8x32xf32>
    %1110 = vector.shape_cast %1109 : vector<1x8x32xf32> to vector<8x32xf32>
    %1111 = vector.broadcast %1108 : vector<8x1xf32> to vector<8x32xf32>
    %1112 = arith.mulf %1111, %1110 : vector<8x32xf32>
    %1113 = arith.addf %1107, %1112 : vector<8x32xf32>
    %1114 = vector.extract_strided_slice %1084 {offsets = [0, 4], sizes = [8, 1], strides = [1, 1]} : vector<8x128xf32> to vector<8x1xf32>
    %c4_328 = arith.constant 4 : index
    %c0_329 = arith.constant 0 : index
    %c0_330 = arith.constant 0 : index
    %1115 = vector.load %arg18[%c4_328, %c0_329, %c0_330] : memref<8x8x32xf32, #tpu.memory_space<vmem>>, vector<1x8x32xf32>
    %1116 = vector.shape_cast %1115 : vector<1x8x32xf32> to vector<8x32xf32>
    %1117 = vector.broadcast %1114 : vector<8x1xf32> to vector<8x32xf32>
    %1118 = arith.mulf %1117, %1116 : vector<8x32xf32>
    %1119 = arith.addf %1113, %1118 : vector<8x32xf32>
    %1120 = vector.extract_strided_slice %1084 {offsets = [0, 5], sizes = [8, 1], strides = [1, 1]} : vector<8x128xf32> to vector<8x1xf32>
    %c5_331 = arith.constant 5 : index
    %c0_332 = arith.constant 0 : index
    %c0_333 = arith.constant 0 : index
    %1121 = vector.load %arg18[%c5_331, %c0_332, %c0_333] : memref<8x8x32xf32, #tpu.memory_space<vmem>>, vector<1x8x32xf32>
    %1122 = vector.shape_cast %1121 : vector<1x8x32xf32> to vector<8x32xf32>
    %1123 = vector.broadcast %1120 : vector<8x1xf32> to vector<8x32xf32>
    %1124 = arith.mulf %1123, %1122 : vector<8x32xf32>
    %1125 = arith.addf %1119, %1124 : vector<8x32xf32>
    %1126 = vector.extract_strided_slice %1084 {offsets = [0, 6], sizes = [8, 1], strides = [1, 1]} : vector<8x128xf32> to vector<8x1xf32>
    %c6_334 = arith.constant 6 : index
    %c0_335 = arith.constant 0 : index
    %c0_336 = arith.constant 0 : index
    %1127 = vector.load %arg18[%c6_334, %c0_335, %c0_336] : memref<8x8x32xf32, #tpu.memory_space<vmem>>, vector<1x8x32xf32>
    %1128 = vector.shape_cast %1127 : vector<1x8x32xf32> to vector<8x32xf32>
    %1129 = vector.broadcast %1126 : vector<8x1xf32> to vector<8x32xf32>
    %1130 = arith.mulf %1129, %1128 : vector<8x32xf32>
    %1131 = arith.addf %1125, %1130 : vector<8x32xf32>
    %1132 = vector.extract_strided_slice %1084 {offsets = [0, 7], sizes = [8, 1], strides = [1, 1]} : vector<8x128xf32> to vector<8x1xf32>
    %c7_337 = arith.constant 7 : index
    %c0_338 = arith.constant 0 : index
    %c0_339 = arith.constant 0 : index
    %1133 = vector.load %arg18[%c7_337, %c0_338, %c0_339] : memref<8x8x32xf32, #tpu.memory_space<vmem>>, vector<1x8x32xf32>
    %1134 = vector.shape_cast %1133 : vector<1x8x32xf32> to vector<8x32xf32>
    %1135 = vector.broadcast %1132 : vector<8x1xf32> to vector<8x32xf32>
    %1136 = arith.mulf %1135, %1134 : vector<8x32xf32>
    %1137 = arith.addf %1131, %1136 : vector<8x32xf32>
    %1138 = arith.index_cast %c5_i32_305 : i32 to index
    %c0_340 = arith.constant 0 : index
    %c0_341 = arith.constant 0 : index
    %1139 = vector.load %arg19[%1138, %c0_340, %c0_341] : memref<6x8x32xf32, #tpu.memory_space<vmem>>, vector<1x8x32xf32>
    %1140 = vector.shape_cast %1139 : vector<1x8x32xf32> to vector<8x32xf32>
    %1141 = vector.shape_cast %1137 : vector<8x32xf32> to vector<1x8x32xf32>
    tpu.vector_store %arg19[%1138, %c0_340, %c0_341], %1141 {strides = array<i32>} : memref<6x8x32xf32, #tpu.memory_space<vmem>>, vector<1x8x32xf32>,
    %1142 = arith.truncf %1068 : vector<8x32xf32> to vector<8x32xbf16>
    %1143 = arith.truncf %1137 : vector<8x32xf32> to vector<8x32xbf16>
    %c6_i32_342 = arith.constant 6 : i32
    %c0_343 = arith.constant 0 : index
    %c0_344 = arith.constant 0 : index
    %c0_345 = arith.constant 0 : index
    %1144 = vector.load %arg19[%c0_343, %c0_344, %c0_345] : memref<6x8x32xf32, #tpu.memory_space<vmem>>, vector<6x8x32xf32>
    %1145 = vector.shape_cast %1144 : vector<6x8x32xf32> to vector<48x32xf32>
    %1146 = arith.truncf %1145 : vector<48x32xf32> to vector<48x32xbf16>
    %c0_346 = arith.constant 0 : index
    %c0_347 = arith.constant 0 : index
    %1147 = vector.load %arg13[%c0_346, %c0_347] : memref<32x128xbf16, #tpu.memory_space<vmem>>, vector<32x128xbf16>
    %cst_348 = arith.constant dense<0.000000e+00> : vector<48x128xf32>
    %1148 = tpu.matmul %1146, %1147, %cst_348 {dimension_numbers = #tpu.dot_dimension_numbers<[1], [0], [0], [1], [0, 0, 1, 1], [], []>} : vector<48x32xbf16>, vector<32x128xbf16>, vector<48x128xf32> -> vector<48x128xf32>
    %c0_349 = arith.constant 0 : index
    %c0_350 = arith.constant 0 : index
    %1149 = vector.load %arg14[%c0_349, %c0_350] : memref<1x128xf32, #tpu.memory_space<vmem>>, vector<1x128xf32>
    %1150 = vector.broadcast %1149 : vector<1x128xf32> to vector<48x128xf32>
    %1151 = arith.addf %1148, %1150 : vector<48x128xf32>
    %c0_351 = arith.constant 0 : index
    %c0_352 = arith.constant 0 : index
    %1152 = vector.load %arg15[%c0_351, %c0_352] : memref<48x128xf32, #tpu.memory_space<vmem>>, vector<48x128xf32>
    tpu.vector_store %arg15[%c0_351, %c0_352], %1151 {strides = array<i32>} : memref<48x128xf32, #tpu.memory_space<vmem>>, vector<48x128xf32>,
    return
  }
}

</mosaic_0001>

<llo_original>
// kernel: tpu_custom_call.1
$region0: #{tpu_custom_call.1}
  #allocation0 [shape = 'u32[]', space=smem, size = 0x4, offset = 0x4, fixed_abs, tag = 'smem constant byte address 0x4 - core index']
  #allocation1 [shape = 'u32[144,128]{1,0:T(1,128)}', space=vmem, size = 0x12000, scoped, tag = 'internal scratch']
  #allocation2 [shape = 'f32[8,8,128]{2,1,0:T(8,128)}', space=vmem, size = 0x8000, scoped, tag = 'scratch operand']
  #allocation3 [shape = 'f32[8,8,32]{2,1,0:T(8,128)}', space=vmem, size = 0x8000, scoped, tag = 'scratch operand']
  #allocation4 [shape = 'f32[6,8,32]{2,1,0:T(8,128)}', space=vmem, size = 0x6000, scoped, tag = 'scratch operand']
  #allocation5 [shape = 'f32[1,1]{1,0:T(1,128)S(1)}', space=vmem, size = 0x200, scoped, tag = 'scoped memory for tpu_custom_call.1']
  %s0 = inlined_call_operand.hbm [shape: bf16[64,32], index: 0, kind: input, shape index: {}]
  %s1 = inlined_call_operand.hbm [shape: bf16[32,128], index: 1, kind: input, shape index: {}]
  %s2 = inlined_call_operand.hbm [shape: f32[1,128], index: 2, kind: input, shape index: {}]
  %s3 = inlined_call_operand.hbm [shape: bf16[32,128], index: 3, kind: input, shape index: {}]
  %s4 = inlined_call_operand.hbm [shape: bf16[64,128], index: 4, kind: input, shape index: {}]
  %s5 = inlined_call_operand.hbm [shape: f32[1,128], index: 5, kind: input, shape index: {}]
  %s6 = inlined_call_operand.hbm [shape: bf16[64,128], index: 6, kind: input, shape index: {}]
  %s7 = inlined_call_operand.hbm [shape: f32[1,128], index: 7, kind: input, shape index: {}]
  %s8 = inlined_call_operand.hbm [shape: bf16[64,128], index: 8, kind: input, shape index: {}]
  %s9 = inlined_call_operand.hbm [shape: f32[1,128], index: 9, kind: input, shape index: {}]
  %s10 = inlined_call_operand.hbm [shape: f32[1,32], index: 10, kind: input, shape index: {}]
  %s11 = inlined_call_operand.hbm [shape: f32[1,32], index: 11, kind: input, shape index: {}]
  %s12 = inlined_call_operand.<no memory space> [shape: f32[1,1], index: 12, kind: input, shape index: {}]
  %s13 = inlined_call_operand.hbm [shape: bf16[32,128], index: 13, kind: input, shape index: {}]
  %s14 = inlined_call_operand.hbm [shape: f32[1,128], index: 14, kind: input, shape index: {}]
  %s15 = inlined_call_operand.hbm [shape: f32[48,128], index: 15, kind: output, shape index: {0}]
  %s16 = inlined_call_operand.hbm [shape: f32[6,8,128], index: 16, kind: output, shape index: {1}]
  %17 = xla_tuple %s15, %s16
  %s18 = sld [smem:[#allocation0]]
  $region134: #{tpu_custom_call.1} parent=0
    _
  %s20 = ssub.s32 1, %s18
  %s21 = scalar_select 0, %s20, %s18
  %v22 = vstv %s12
  %23 = vst [vmem:[#allocation5] sm:$0x1] %v22
  $region1: #{tpu_custom_call.1} parent=0
    #allocation6 [shape = 'u8[16384]{0}', space=vmem, size = 0x4000, scoped, tag = 'input window, operand 0, single buffered']
    #allocation7 [shape = 's32[1]{0}', space=sflag, size = 0x4, scoped, tag = 'scoped memory for tpu_custom_call.1']
    #allocation8 [shape = 's32[1]{0}', space=sflag, size = 0x4, scoped, tag = 'scoped memory for tpu_custom_call.1']
    #allocation9 [shape = 'u8[8192]{0}', space=vmem, size = 0x2000, scoped, tag = 'input window, operand 1, single buffered']
    #allocation10 [shape = 's32[1]{0}', space=sflag, size = 0x4, scoped, tag = 'scoped memory for tpu_custom_call.1']
    #allocation11 [shape = 'u8[512]{0}', space=vmem, size = 0x400, scoped, tag = 'input window, operand 2, single buffered']
    #allocation12 [shape = 'u8[8192]{0}', space=vmem, size = 0x2000, scoped, tag = 'input window, operand 3, single buffered']
    #allocation13 [shape = 's32[1]{0}', space=sflag, size = 0x4, scoped, tag = 'scoped memory for tpu_custom_call.1']
    #allocation14 [shape = 'u8[16384]{0}', space=vmem, size = 0x4000, scoped, tag = 'input window, operand 4, single buffered']
    #allocation15 [shape = 'u8[512]{0}', space=vmem, size = 0x400, scoped, tag = 'input window, operand 5, single buffered']
    #allocation16 [shape = 's32[1]{0}', space=sflag, size = 0x4, scoped, tag = 'scoped memory for tpu_custom_call.1']
    #allocation17 [shape = 'u8[16384]{0}', space=vmem, size = 0x4000, scoped, tag = 'input window, operand 6, single buffered']
    #allocation18 [shape = 'u8[512]{0}', space=vmem, size = 0x400, scoped, tag = 'input window, operand 7, single buffered']
    #allocation19 [shape = 's32[1]{0}', space=sflag, size = 0x4, scoped, tag = 'scoped memory for tpu_custom_call.1']
    #allocation20 [shape = 'u8[16384]{0}', space=vmem, size = 0x4000, scoped, tag = 'input window, operand 8, single buffered']
    #allocation21 [shape = 'u8[512]{0}', space=vmem, size = 0x400, scoped, tag = 'input window, operand 9, single buffered']
    #allocation22 [shape = 's32[1]{0}', space=sflag, size = 0x4, scoped, tag = 'scoped memory for tpu_custom_call.1']
    #allocation23 [shape = 'u8[512]{0}', space=vmem, size = 0x400, scoped, tag = 'input window, operand 10, single buffered']
    #allocation24 [shape = 'u8[512]{0}', space=vmem, size = 0x400, scoped, tag = 'input window, operand 11, single buffered']
    #allocation25 [shape = 's32[1]{0}', space=sflag, size = 0x4, scoped, tag = 'scoped memory for tpu_custom_call.1']
    #allocation26 [shape = 'u8[8192]{0}', space=vmem, size = 0x2000, scoped, tag = 'input window, operand 13, single buffered']
    #allocation27 [shape = 'u8[512]{0}', space=vmem, size = 0x400, scoped, tag = 'input window, operand 14, single buffered']
    #allocation28 [shape = 's32[1]{0}', space=sflag, size = 0x4, scoped, tag = 'scoped memory for tpu_custom_call.1']
    #allocation29 [shape = 'u8[24576]{0}', space=vmem, size = 0x6000, scoped, tag = 'output window, operand 0, single buffered']
    #allocation30 [shape = 'u8[24576]{0}', space=vmem, size = 0x6000, scoped, tag = 'output window, operand 1, single buffered']
    #allocation31 [shape = 's32[1]{0}', space=sflag, size = 0x4, scoped, tag = 'scoped memory for tpu_custom_call.1']
    %24 = vsyncpa [#allocation7], 0
    %25 = vsyncpa [#allocation10], 0
    %26 = vsyncpa [#allocation13], 0
    %27 = vsyncpa [#allocation16], 0
    %28 = vsyncpa [#allocation19], 0
    %29 = vsyncpa [#allocation22], 0
    %30 = vsyncpa [#allocation25], 0
    %31 = vsyncpa [#allocation28], 0
    %32 = vsyncpa [#allocation8], 0
    %33 = vsyncpa [#allocation31], 0
    // Predicated region
    $region2: #{tpu_custom_call.1} parent=1 // pred_check
      _
    $region3: #{tpu_custom_call.1} parent=1 // pred_check_branch
      %35 = sbr.rel (0) target = $region5
    $region4: #{tpu_custom_call.1} parent=1 // pred_region
      %s37 = ssub.s32 512, 512
      %38 = vsyncadd [#allocation7], %s37
      %s39 = sshll.u32 [#allocation6], 4
      %s40 = int_to_ptr.vmem [resolvable:$true] %s39
      %45 = dma.hbm_to_vmem [thread:$0]  %s0, 512, %s40, [#allocation7], 64, 64, 4
    $region5: #{tpu_custom_call.1} parent=1 // pred_fallthru
      _
    // Predicated region
    $region6: #{tpu_custom_call.1} parent=1 // pred_check
      _
    $region7: #{tpu_custom_call.1} parent=1 // pred_check_branch
      %47 = sbr.rel (0) target = $region9
    $region8: #{tpu_custom_call.1} parent=1 // pred_region
      %s49 = ssub.s32 256, 256
      %50 = vsyncadd [#allocation10], %s49
      %s51 = sshll.u32 [#allocation9], 4
      %s52 = int_to_ptr.vmem [resolvable:$true] %s51
      %57 = dma.hbm_to_vmem [thread:$0]  %s1, 256, %s52, [#allocation10], 64, 64, 4
    $region9: #{tpu_custom_call.1} parent=1 // pred_fallthru
      _
    // Predicated region
    $region10: #{tpu_custom_call.1} parent=1 // pred_check
      _
    $region11: #{tpu_custom_call.1} parent=1 // pred_check_branch
      %59 = sbr.rel (0) target = $region13
    $region12: #{tpu_custom_call.1} parent=1 // pred_region
      %s61 = ssub.s32 16, 16
      %62 = vsyncadd [#allocation10], %s61
      %s64 = sshll.u32 [#allocation11], 4
      %s65 = int_to_ptr.vmem [resolvable:$true] %s64
      %67 = dma.hbm_to_vmem [thread:$0]  %s2, 16, %s65, [#allocation10]
    $region13: #{tpu_custom_call.1} parent=1 // pred_fallthru
      _
    // Predicated region
    $region14: #{tpu_custom_call.1} parent=1 // pred_check
      _
    $region15: #{tpu_custom_call.1} parent=1 // pred_check_branch
      %69 = sbr.rel (0) target = $region17
    $region16: #{tpu_custom_call.1} parent=1 // pred_region
      %s71 = ssub.s32 256, 256
      %72 = vsyncadd [#allocation13], %s71
      %s73 = sshll.u32 [#allocation12], 4
      %s74 = int_to_ptr.vmem [resolvable:$true] %s73
      %79 = dma.hbm_to_vmem [thread:$0]  %s3, 256, %s74, [#allocation13], 64, 64, 4
    $region17: #{tpu_custom_call.1} parent=1 // pred_fallthru
      _
    // Predicated region
    $region18: #{tpu_custom_call.1} parent=1 // pred_check
      _
    $region19: #{tpu_custom_call.1} parent=1 // pred_check_branch
      %81 = sbr.rel (0) target = $region21
    $region20: #{tpu_custom_call.1} parent=1 // pred_region
      %s83 = ssub.s32 512, 512
      %84 = vsyncadd [#allocation13], %s83
      %s85 = sshll.u32 [#allocation14], 4
      %s86 = int_to_ptr.vmem [resolvable:$true] %s85
      %91 = dma.hbm_to_vmem [thread:$0]  %s4, 512, %s86, [#allocation13], 64, 64, 4
    $region21: #{tpu_custom_call.1} parent=1 // pred_fallthru
      _
    // Predicated region
    $region22: #{tpu_custom_call.1} parent=1 // pred_check
      _
    $region23: #{tpu_custom_call.1} parent=1 // pred_check_branch
      %93 = sbr.rel (0) target = $region25
    $region24: #{tpu_custom_call.1} parent=1 // pred_region
      %s95 = ssub.s32 16, 16
      %96 = vsyncadd [#allocation16], %s95
      %s98 = sshll.u32 [#allocation15], 4
      %s99 = int_to_ptr.vmem [resolvable:$true] %s98
      %101 = dma.hbm_to_vmem [thread:$0]  %s5, 16, %s99, [#allocation16]
    $region25: #{tpu_custom_call.1} parent=1 // pred_fallthru
      _
    // Predicated region
    $region26: #{tpu_custom_call.1} parent=1 // pred_check
      _
    $region27: #{tpu_custom_call.1} parent=1 // pred_check_branch
      %103 = sbr.rel (0) target = $region29
    $region28: #{tpu_custom_call.1} parent=1 // pred_region
      %s105 = ssub.s32 512, 512
      %106 = vsyncadd [#allocation16], %s105
      %s107 = sshll.u32 [#allocation17], 4
      %s108 = int_to_ptr.vmem [resolvable:$true] %s107
      %113 = dma.hbm_to_vmem [thread:$0]  %s6, 512, %s108, [#allocation16], 64, 64, 4
    $region29: #{tpu_custom_call.1} parent=1 // pred_fallthru
      _
    // Predicated region
    $region30: #{tpu_custom_call.1} parent=1 // pred_check
      _
    $region31: #{tpu_custom_call.1} parent=1 // pred_check_branch
      %115 = sbr.rel (0) target = $region33
    $region32: #{tpu_custom_call.1} parent=1 // pred_region
      %s117 = ssub.s32 16, 16
      %118 = vsyncadd [#allocation19], %s117
      %s120 = sshll.u32 [#allocation18], 4
      %s121 = int_to_ptr.vmem [resolvable:$true] %s120
      %123 = dma.hbm_to_vmem [thread:$0]  %s7, 16, %s121, [#allocation19]
    $region33: #{tpu_custom_call.1} parent=1 // pred_fallthru
      _
    // Predicated region
    $region34: #{tpu_custom_call.1} parent=1 // pred_check
      _
    $region35: #{tpu_custom_call.1} parent=1 // pred_check_branch
      %125 = sbr.rel (0) target = $region37
    $region36: #{tpu_custom_call.1} parent=1 // pred_region
      %s127 = ssub.s32 512, 512
      %128 = vsyncadd [#allocation19], %s127
      %s129 = sshll.u32 [#allocation20], 4
      %s130 = int_to_ptr.vmem [resolvable:$true] %s129
      %135 = dma.hbm_to_vmem [thread:$0]  %s8, 512, %s130, [#allocation19], 64, 64, 4
    $region37: #{tpu_custom_call.1} parent=1 // pred_fallthru
      _
    // Predicated region
    $region38: #{tpu_custom_call.1} parent=1 // pred_check
      _
    $region39: #{tpu_custom_call.1} parent=1 // pred_check_branch
      %137 = sbr.rel (0) target = $region41
    $region40: #{tpu_custom_call.1} parent=1 // pred_region
      %s139 = ssub.s32 16, 16
      %140 = vsyncadd [#allocation22], %s139
      %s142 = sshll.u32 [#allocation21], 4
      %s143 = int_to_ptr.vmem [resolvable:$true] %s142
      %145 = dma.hbm_to_vmem [thread:$0]  %s9, 16, %s143, [#allocation22]
    $region41: #{tpu_custom_call.1} parent=1 // pred_fallthru
      _
    // Predicated region
    $region42: #{tpu_custom_call.1} parent=1 // pred_check
      _
    $region43: #{tpu_custom_call.1} parent=1 // pred_check_branch
      %147 = sbr.rel (0) target = $region45
    $region44: #{tpu_custom_call.1} parent=1 // pred_region
      %s149 = ssub.s32 16, 16
      %150 = vsyncadd [#allocation22], %s149
      %s152 = sshll.u32 [#allocation23], 4
      %s153 = int_to_ptr.vmem [resolvable:$true] %s152
      %155 = dma.hbm_to_vmem [thread:$0]  %s10, 16, %s153, [#allocation22]
    $region45: #{tpu_custom_call.1} parent=1 // pred_fallthru
      _
    // Predicated region
    $region46: #{tpu_custom_call.1} parent=1 // pred_check
      _
    $region47: #{tpu_custom_call.1} parent=1 // pred_check_branch
      %157 = sbr.rel (0) target = $region49
    $region48: #{tpu_custom_call.1} parent=1 // pred_region
      %s159 = ssub.s32 16, 16
      %160 = vsyncadd [#allocation25], %s159
      %s162 = sshll.u32 [#allocation24], 4
      %s163 = int_to_ptr.vmem [resolvable:$true] %s162
      %165 = dma.hbm_to_vmem [thread:$0]  %s11, 16, %s163, [#allocation25]
    $region49: #{tpu_custom_call.1} parent=1 // pred_fallthru
      _
    // Predicated region
    $region50: #{tpu_custom_call.1} parent=1 // pred_check
      _
    $region51: #{tpu_custom_call.1} parent=1 // pred_check_branch
      %167 = sbr.rel (0) target = $region53
    $region52: #{tpu_custom_call.1} parent=1 // pred_region
      _
    $region53: #{tpu_custom_call.1} parent=1 // pred_fallthru
      _
    // Predicated region
    $region54: #{tpu_custom_call.1} parent=1 // pred_check
      _
    $region55: #{tpu_custom_call.1} parent=1 // pred_check_branch
      %169 = sbr.rel (0) target = $region57
    $region56: #{tpu_custom_call.1} parent=1 // pred_region
      %s171 = ssub.s32 256, 256
      %172 = vsyncadd [#allocation25], %s171
      %s173 = sshll.u32 [#allocation26], 4
      %s174 = int_to_ptr.vmem [resolvable:$true] %s173
      %179 = dma.hbm_to_vmem [thread:$0]  %s13, 256, %s174, [#allocation25], 64, 64, 4
    $region57: #{tpu_custom_call.1} parent=1 // pred_fallthru
      _
    // Predicated region
    $region58: #{tpu_custom_call.1} parent=1 // pred_check
      _
    $region59: #{tpu_custom_call.1} parent=1 // pred_check_branch
      %181 = sbr.rel (0) target = $region61
    $region60: #{tpu_custom_call.1} parent=1 // pred_region
      %s183 = ssub.s32 16, 16
      %184 = vsyncadd [#allocation28], %s183
      %s186 = sshll.u32 [#allocation27], 4
      %s187 = int_to_ptr.vmem [resolvable:$true] %s186
      %189 = dma.hbm_to_vmem [thread:$0]  %s14, 16, %s187, [#allocation28]
    $region61: #{tpu_custom_call.1} parent=1 // pred_fallthru
      _
    // Predicated region
    $region62: #{tpu_custom_call.1} parent=1 // pred_check
      _
    $region63: #{tpu_custom_call.1} parent=1 // pred_check_branch
      %191 = sbr.rel (0) target = $region65
    $region64: #{tpu_custom_call.1} parent=1 // pred_region
      %192 = dma.done [#allocation7], 512
    $region65: #{tpu_custom_call.1} parent=1 // pred_fallthru
      _
    // Predicated region
    $region66: #{tpu_custom_call.1} parent=1 // pred_check
      _
    $region67: #{tpu_custom_call.1} parent=1 // pred_check_branch
      %194 = sbr.rel (0) target = $region69
    $region68: #{tpu_custom_call.1} parent=1 // pred_region
      %195 = dma.done [#allocation10], 256
    $region69: #{tpu_custom_call.1} parent=1 // pred_fallthru
      _
    // Predicated region
    $region70: #{tpu_custom_call.1} parent=1 // pred_check
      _
    $region71: #{tpu_custom_call.1} parent=1 // pred_check_branch
      %197 = sbr.rel (0) target = $region73
    $region72: #{tpu_custom_call.1} parent=1 // pred_region
      %198 = dma.done [#allocation10], 16
    $region73: #{tpu_custom_call.1} parent=1 // pred_fallthru
      _
    // Predicated region
    $region74: #{tpu_custom_call.1} parent=1 // pred_check
      _
    $region75: #{tpu_custom_call.1} parent=1 // pred_check_branch
      %200 = sbr.rel (0) target = $region77
    $region76: #{tpu_custom_call.1} parent=1 // pred_region
      %201 = dma.done [#allocation13], 256
    $region77: #{tpu_custom_call.1} parent=1 // pred_fallthru
      _
    // Predicated region
    $region78: #{tpu_custom_call.1} parent=1 // pred_check
      _
    $region79: #{tpu_custom_call.1} parent=1 // pred_check_branch
      %203 = sbr.rel (0) target = $region81
    $region80: #{tpu_custom_call.1} parent=1 // pred_region
      %204 = dma.done [#allocation13], 512
    $region81: #{tpu_custom_call.1} parent=1 // pred_fallthru
      _
    // Predicated region
    $region82: #{tpu_custom_call.1} parent=1 // pred_check
      _
    $region83: #{tpu_custom_call.1} parent=1 // pred_check_branch
      %206 = sbr.rel (0) target = $region85
    $region84: #{tpu_custom_call.1} parent=1 // pred_region
      %207 = dma.done [#allocation16], 16
    $region85: #{tpu_custom_call.1} parent=1 // pred_fallthru
      _
    // Predicated region
    $region86: #{tpu_custom_call.1} parent=1 // pred_check
      _
    $region87: #{tpu_custom_call.1} parent=1 // pred_check_branch
      %209 = sbr.rel (0) target = $region89
    $region88: #{tpu_custom_call.1} parent=1 // pred_region
      %210 = dma.done [#allocation16], 512
    $region89: #{tpu_custom_call.1} parent=1 // pred_fallthru
      _
    // Predicated region
    $region90: #{tpu_custom_call.1} parent=1 // pred_check
      _
    $region91: #{tpu_custom_call.1} parent=1 // pred_check_branch
      %212 = sbr.rel (0) target = $region93
    $region92: #{tpu_custom_call.1} parent=1 // pred_region
      %213 = dma.done [#allocation19], 16
    $region93: #{tpu_custom_call.1} parent=1 // pred_fallthru
      _
    // Predicated region
    $region94: #{tpu_custom_call.1} parent=1 // pred_check
      _
    $region95: #{tpu_custom_call.1} parent=1 // pred_check_branch
      %215 = sbr.rel (0) target = $region97
    $region96: #{tpu_custom_call.1} parent=1 // pred_region
      %216 = dma.done [#allocation19], 512
    $region97: #{tpu_custom_call.1} parent=1 // pred_fallthru
      _
    // Predicated region
    $region98: #{tpu_custom_call.1} parent=1 // pred_check
      _
    $region99: #{tpu_custom_call.1} parent=1 // pred_check_branch
      %218 = sbr.rel (0) target = $region101
    $region100: #{tpu_custom_call.1} parent=1 // pred_region
      %219 = dma.done [#allocation22], 16
    $region101: #{tpu_custom_call.1} parent=1 // pred_fallthru
      _
    // Predicated region
    $region102: #{tpu_custom_call.1} parent=1 // pred_check
      _
    $region103: #{tpu_custom_call.1} parent=1 // pred_check_branch
      %221 = sbr.rel (0) target = $region105
    $region104: #{tpu_custom_call.1} parent=1 // pred_region
      %222 = dma.done [#allocation22], 16
    $region105: #{tpu_custom_call.1} parent=1 // pred_fallthru
      _
    // Predicated region
    $region106: #{tpu_custom_call.1} parent=1 // pred_check
      _
    $region107: #{tpu_custom_call.1} parent=1 // pred_check_branch
      %224 = sbr.rel (0) target = $region109
    $region108: #{tpu_custom_call.1} parent=1 // pred_region
      %225 = dma.done [#allocation25], 16
    $region109: #{tpu_custom_call.1} parent=1 // pred_fallthru
      _
    // Predicated region
    $region110: #{tpu_custom_call.1} parent=1 // pred_check
      _
    $region111: #{tpu_custom_call.1} parent=1 // pred_check_branch
      %227 = sbr.rel (0) target = $region113
    $region112: #{tpu_custom_call.1} parent=1 // pred_region
      %228 = dma.done [#allocation25], 256
    $region113: #{tpu_custom_call.1} parent=1 // pred_fallthru
      _
    // Predicated region
    $region114: #{tpu_custom_call.1} parent=1 // pred_check
      _
    $region115: #{tpu_custom_call.1} parent=1 // pred_check_branch
      %230 = sbr.rel (0) target = $region117
    $region116: #{tpu_custom_call.1} parent=1 // pred_region
      %231 = dma.done [#allocation28], 16
    $region117: #{tpu_custom_call.1} parent=1 // pred_fallthru
      _
    %v233 = vld [vmem:[#allocation12] sm:$0xf]
    %v234 = vld [vmem:[#allocation12 + $0x4] sm:$0xf]
    %v235 = vld [vmem:[#allocation12 + $0x8] sm:$0xf]
    %v236 = vld [vmem:[#allocation12 + $0xc] sm:$0xf]
    %v237 = vld [vmem:[#allocation14] sm:$0xf]
    %v238 = vld [vmem:[#allocation14 + $0x4] sm:$0xf]
    %v239 = vld [vmem:[#allocation14 + $0x8] sm:$0xf]
    %v240 = vld [vmem:[#allocation14 + $0xc] sm:$0xf]
    %v241 = vld [vmem:[#allocation14 + $0x10] sm:$0xf]
    %v242 = vld [vmem:[#allocation14 + $0x14] sm:$0xf]
    %v243 = vld [vmem:[#allocation14 + $0x18] sm:$0xf]
    %v244 = vld [vmem:[#allocation14 + $0x1c] sm:$0xf]
    %v245 = vld [vmem:[#allocation15] sm:$0x1]
    %v246 = vld [vmem:[#allocation17] sm:$0xf]
    %v247 = vld [vmem:[#allocation17 + $0x4] sm:$0xf]
    %v248 = vld [vmem:[#allocation17 + $0x8] sm:$0xf]
    %v249 = vld [vmem:[#allocation17 + $0xc] sm:$0xf]
    %v250 = vld [vmem:[#allocation17 + $0x10] sm:$0xf]
    %v251 = vld [vmem:[#allocation17 + $0x14] sm:$0xf]
    %v252 = vld [vmem:[#allocation17 + $0x18] sm:$0xf]
    %v253 = vld [vmem:[#allocation17 + $0x1c] sm:$0xf]
    %v254 = vld [vmem:[#allocation18] sm:$0x1]
    %v255 = vld [vmem:[#allocation20] sm:$0xf]
    %v256 = vld [vmem:[#allocation20 + $0x4] sm:$0xf]
    %v257 = vld [vmem:[#allocation20 + $0x8] sm:$0xf]
    %v258 = vld [vmem:[#allocation20 + $0xc] sm:$0xf]
    %v259 = vld [vmem:[#allocation20 + $0x10] sm:$0xf]
    %v260 = vld [vmem:[#allocation20 + $0x14] sm:$0xf]
    %v261 = vld [vmem:[#allocation20 + $0x18] sm:$0xf]
    %v262 = vld [vmem:[#allocation20 + $0x1c] sm:$0xf]
    %v263 = vld [vmem:[#allocation21] sm:$0x1]
    %v264 = vld [vmem:[#allocation23] sm:$0x1]
    %v265 = vld [vmem:[#allocation24] sm:$0x1]
    %v266 = vld [vmem:[#allocation5] sm:$0x1]
    %v267 = vld [vmem:[#allocation6] sm:$0xf]
    %v268 = vld [vmem:[#allocation6 + $0x4] sm:$0xf]
    %v269 = vld [vmem:[#allocation6 + $0x8] sm:$0xf]
    %v270 = vld [vmem:[#allocation6 + $0xc] sm:$0xf]
    %v271 = vld [vmem:[#allocation6 + $0x10] sm:$0xf]
    %v272 = vld [vmem:[#allocation6 + $0x14] sm:$0xf]
    %v273 = vld [vmem:[#allocation6 + $0x18] sm:$0xf]
    %v274 = vld [vmem:[#allocation6 + $0x1c] sm:$0xf]
    %v275 = vld [vmem:[#allocation9] sm:$0xf]
    %v276 = vld [vmem:[#allocation9 + $0x4] sm:$0xf]
    %v277 = vld [vmem:[#allocation9 + $0x8] sm:$0xf]
    %v278 = vld [vmem:[#allocation9 + $0xc] sm:$0xf]
    %v279 = vld [vmem:[#allocation11] sm:$0x1]
    %v281 = vlaneseq
    %v282 = vshrl.u32 %v281, 7
    %v283 = vsub.s32 0, %v282
    %v284 = vrot.slane %v279, %v283
    %v294 = vunpack.c.l.b16 %v267
    %v295 = vunpack.c.l.b16 %v268
    %v296 = vunpack.c.l.b16 %v269
    %v297 = vunpack.c.l.b16 %v270
    %v298 = vunpack.c.l.b16 %v271
    %v299 = vunpack.c.l.b16 %v272
    %v300 = vunpack.c.l.b16 %v273
    %v301 = vunpack.c.l.b16 %v274
    %v302 = vpack.c.b16 %v295, %v294
    %v303 = vpack.c.b16 %v297, %v296
    %v304 = vpack.c.b16 %v299, %v298
    %v305 = vpack.c.b16 %v301, %v300
    %v310 = vunpack.c.l.b16 %v275
    %v311 = vunpack.c.l.b16 %v276
    %v312 = vunpack.c.l.b16 %v277
    %v313 = vunpack.c.l.b16 %v278
    %v314 = vpack.c.b16 %v311, %v310
    %v315 = vpack.c.b16 %v313, %v312
    %vm318 = vcmask 261120
    %v320 = vsel %vm318, %v302, 0
    %v323 = vsel %vm318, %v303, 0
    %v326 = vsel %vm318, %v304, 0
    %v329 = vsel %vm318, %v305, 0
    %331 = vmatprep.subr.bf16.mxu0 0
    %332 = vmatpush1.bf16.msra.mxu0 %v314
    %333 = vmatprep.subr.bf16.mxu0 0
    %334 = vmatpush1.bf16.msra.mxu0 %v315
    %335 = vmatprep.subr.bf16.mxu0 0
    %336 = vmatpush1.bf16.msra.mxu0 0
    %337 = vmatprep.subr.bf16.mxu0 0
    %338 = vmatpush1.bf16.msra.mxu0 0
    %339 = vmatprep.subr.bf16.mxu0 0
    %340 = vmatpush1.bf16.msra.mxu0 0
    %341 = vmatprep.subr.bf16.mxu0 0
    %342 = vmatpush1.bf16.msra.mxu0 0
    %343 = vmatprep.subr.bf16.mxu0 0
    %344 = vmatpush1.bf16.msra.mxu0 0
    %345 = vmatprep.subr.bf16.mxu0 0
    %346 = vmatpush1.bf16.msra.mxu0 0
    %347 = vmatprep.subr.bf16.mxu0 0
    %348 = vmatpush1.bf16.msra.mxu0 0
    %349 = vmatprep.subr.bf16.mxu0 0
    %350 = vmatpush1.bf16.msra.mxu0 0
    %351 = vmatprep.subr.bf16.mxu0 0
    %352 = vmatpush1.bf16.msra.mxu0 0
    %353 = vmatprep.subr.bf16.mxu0 0
    %354 = vmatpush1.bf16.msra.mxu0 0
    %355 = vmatprep.subr.bf16.mxu0 0
    %356 = vmatpush1.bf16.msra.mxu0 0
    %357 = vmatprep.subr.bf16.mxu0 0
    %358 = vmatpush1.bf16.msra.mxu0 0
    %359 = vmatprep.subr.bf16.mxu0 0
    %360 = vmatpush1.bf16.msra.mxu0 0
    %361 = vmatprep.subr.bf16.mxu0 0
    %362 = vmatpush1.bf16.msra.mxu0 0
    %363 = vmatprep.mubr.bf16.mxu0 0
    %364 = vmatmul.mubr.bf16.gmra.mrb[0].mxu0 %v320
    %v365 = vpop.f32.mrb[0].mxu0
    %v366 = vadd.f32 %v284, %v365
    %v367 = vpop.f32.mrb[0].mxu0
    %v368 = vpop.f32.mrb[0].mxu0
    %v369 = vadd.f32 %v284, %v368
    %v370 = vpop.f32.mrb[0].mxu0
    %371 = vmatprep.mubr.bf16.mxu0 0
    %372 = vmatmul.mubr.bf16.gmra.mrb[0].mxu0 %v323
    %v373 = vpop.f32.mrb[0].mxu0
    %v374 = vadd.f32 %v284, %v373
    %v375 = vpop.f32.mrb[0].mxu0
    %v376 = vpop.f32.mrb[0].mxu0
    %v377 = vadd.f32 %v284, %v376
    %v378 = vpop.f32.mrb[0].mxu0
    %379 = vmatprep.mubr.bf16.mxu0 0
    %380 = vmatmul.mubr.bf16.gmra.mrb[0].mxu0 %v326
    %v381 = vpop.f32.mrb[0].mxu0
    %v382 = vadd.f32 %v284, %v381
    %v383 = vpop.f32.mrb[0].mxu0
    %v384 = vpop.f32.mrb[0].mxu0
    %v385 = vadd.f32 %v284, %v384
    %v386 = vpop.f32.mrb[0].mxu0
    %387 = vmatprep.mubr.bf16.mxu0 0
    %388 = vmatmul.mubr.bf16.gmra.mrb[0].mxu0 %v329
    %v389 = vpop.f32.mrb[0].mxu0
    %v390 = vadd.f32 %v284, %v389
    %v391 = vpop.f32.mrb[0].mxu0
    %v392 = vpop.f32.mrb[0].mxu0
    %v393 = vadd.f32 %v284, %v392
    %v394 = vpop.f32.mrb[0].mxu0
    %395 = vdwg.mxu0
    %396 = vst [vmem:[#allocation2] sm:$0xff] %v366
    %397 = vst [vmem:[#allocation2 + $0x8] sm:$0xff] %v369
    %398 = vst [vmem:[#allocation2 + $0x10] sm:$0xff] %v374
    %399 = vst [vmem:[#allocation2 + $0x18] sm:$0xff] %v377
    %400 = vst [vmem:[#allocation2 + $0x20] sm:$0xff] %v382
    %401 = vst [vmem:[#allocation2 + $0x28] sm:$0xff] %v385
    %402 = vst [vmem:[#allocation2 + $0x30] sm:$0xff] %v390
    %403 = vst [vmem:[#allocation2 + $0x38] sm:$0xff] %v393
    %v404 = vld [vmem:[#allocation2] sm:$0xff]
    %v409 = vunpack.c.l.b16 %v233
    %v410 = vunpack.c.l.b16 %v234
    %v411 = vunpack.c.l.b16 %v235
    %v412 = vunpack.c.l.b16 %v236
    %v413 = vpack.c.b16 %v410, %v409
    %v414 = vpack.c.b16 %v412, %v411
    %v418 = vsel %vm318, 0, 0
    %420 = vmatprep.subr.bf16.mxu0 0
    %421 = vmatpush1.bf16.msra.mxu0 %v413
    %422 = vmatprep.subr.bf16.mxu0 0
    %423 = vmatpush1.bf16.msra.mxu0 %v414
    %424 = vmatprep.subr.bf16.mxu0 0
    %425 = vmatpush1.bf16.msra.mxu0 0
    %426 = vmatprep.subr.bf16.mxu0 0
    %427 = vmatpush1.bf16.msra.mxu0 0
    %428 = vmatprep.subr.bf16.mxu0 0
    %429 = vmatpush1.bf16.msra.mxu0 0
    %430 = vmatprep.subr.bf16.mxu0 0
    %431 = vmatpush1.bf16.msra.mxu0 0
    %432 = vmatprep.subr.bf16.mxu0 0
    %433 = vmatpush1.bf16.msra.mxu0 0
    %434 = vmatprep.subr.bf16.mxu0 0
    %435 = vmatpush1.bf16.msra.mxu0 0
    %436 = vmatprep.subr.bf16.mxu0 0
    %437 = vmatpush1.bf16.msra.mxu0 0
    %438 = vmatprep.subr.bf16.mxu0 0
    %439 = vmatpush1.bf16.msra.mxu0 0
    %440 = vmatprep.subr.bf16.mxu0 0
    %441 = vmatpush1.bf16.msra.mxu0 0
    %442 = vmatprep.subr.bf16.mxu0 0
    %443 = vmatpush1.bf16.msra.mxu0 0
    %444 = vmatprep.subr.bf16.mxu0 0
    %445 = vmatpush1.bf16.msra.mxu0 0
    %446 = vmatprep.subr.bf16.mxu0 0
    %447 = vmatpush1.bf16.msra.mxu0 0
    %448 = vmatprep.subr.bf16.mxu0 0
    %449 = vmatpush1.bf16.msra.mxu0 0
    %450 = vmatprep.subr.bf16.mxu0 0
    %451 = vmatpush1.bf16.msra.mxu0 0
    %452 = vmatprep.mubr.bf16.mxu0 0
    %453 = vmatmul.mubr.bf16.gmra.mrb[0].mxu0 %v418
    %v454 = vpop.f32.mrb[0].mxu0
    %v455 = vadd.f32 0.0, %v454
    %v456 = vpop.f32.mrb[0].mxu0
    %v457 = vpop.f32.mrb[0].mxu0
    %v458 = vpop.f32.mrb[0].mxu0
    %459 = vdwg.mxu0
    %v460 = vadd.f32 %v404, %v455
    %v461 = vxor.u32 %v460, 2147483648
    %v462 = vmul.f32 %v461, 1.442695
    %v463 = vpow.pop %v462
    %v464 = vadd.f32 %v463, 1.0
    %v465 = vrcp.pop %v464
    %v466 = vmul.f32 1.0, %v465
    %v467 = vtanh.pop %v460
    %v468 = vmul.f32 %v466, 0.0
    %470 = vrot.lane.b32.xlu0 %v467, 32
    %v471 = vpop.permute.xlu0 %470
    %v473 = vmul.f32 %v466, %v471
    %475 = vrot.lane.b32.xlu0 %v473, 32
    %v476 = vpop.permute.xlu0 %475
    %v478 = vadd.f32 %v468, %v476
    %v479 = vtanh.pop %v478
    %481 = vrot.lane.b32.xlu0 %v479, 32
    %v482 = vpop.permute.xlu0 %481
    %v484 = vmul.f32 %v466, %v482
    %v485 = vpack.c.bf16 %v484, %v484
    %487 = vrot.lane.b32.xlu0 %v485, 64
    %v488 = vpop.permute.xlu0 %487
    %v490 = vsel %vm318, %v488, 0
    %v492 = vlaneseq
    %v493 = vshrl.u32 %v492, 7
    %v494 = vsub.s32 0, %v493
    %v495 = vrot.slane %v245, %v494
    %v505 = vunpack.c.l.b16 %v237
    %v506 = vunpack.c.l.b16 %v238
    %v507 = vunpack.c.l.b16 %v239
    %v508 = vunpack.c.l.b16 %v240
    %v509 = vunpack.c.l.b16 %v241
    %v510 = vunpack.c.l.b16 %v242
    %v511 = vunpack.c.l.b16 %v243
    %v512 = vunpack.c.l.b16 %v244
    %v513 = vpack.c.b16 %v506, %v505
    %v514 = vpack.c.b16 %v508, %v507
    %v515 = vpack.c.b16 %v510, %v509
    %v516 = vpack.c.b16 %v512, %v511
    %vm521 = vcmask 523264
    %v522 = vsel %vm521, %v490, 0
    %524 = vmatprep.subr.bf16.mxu0 0
    %525 = vmatpush1.bf16.msra.mxu0 %v513
    %526 = vmatprep.subr.bf16.mxu0 0
    %527 = vmatpush1.bf16.msra.mxu0 %v514
    %528 = vmatprep.subr.bf16.mxu0 0
    %529 = vmatpush1.bf16.msra.mxu0 %v515
    %530 = vmatprep.subr.bf16.mxu0 0
    %531 = vmatpush1.bf16.msra.mxu0 %v516
    %532 = vmatprep.subr.bf16.mxu0 0
    %533 = vmatpush1.bf16.msra.mxu0 0
    %534 = vmatprep.subr.bf16.mxu0 0
    %535 = vmatpush1.bf16.msra.mxu0 0
    %536 = vmatprep.subr.bf16.mxu0 0
    %537 = vmatpush1.bf16.msra.mxu0 0
    %538 = vmatprep.subr.bf16.mxu0 0
    %539 = vmatpush1.bf16.msra.mxu0 0
    %540 = vmatprep.subr.bf16.mxu0 0
    %541 = vmatpush1.bf16.msra.mxu0 0
    %542 = vmatprep.subr.bf16.mxu0 0
    %543 = vmatpush1.bf16.msra.mxu0 0
    %544 = vmatprep.subr.bf16.mxu0 0
    %545 = vmatpush1.bf16.msra.mxu0 0
    %546 = vmatprep.subr.bf16.mxu0 0
    %547 = vmatpush1.bf16.msra.mxu0 0
    %548 = vmatprep.subr.bf16.mxu0 0
    %549 = vmatpush1.bf16.msra.mxu0 0
    %550 = vmatprep.subr.bf16.mxu0 0
    %551 = vmatpush1.bf16.msra.mxu0 0
    %552 = vmatprep.subr.bf16.mxu0 0
    %553 = vmatpush1.bf16.msra.mxu0 0
    %554 = vmatprep.subr.bf16.mxu0 0
    %555 = vmatpush1.bf16.msra.mxu0 0
    %556 = vmatprep.mubr.bf16.mxu0 0
    %557 = vmatmul.mubr.bf16.gmra.mrb[0].mxu0 %v522
    %v558 = vpop.f32.mrb[0].mxu0
    %v559 = vadd.f32 %v495, %v558
    %v560 = vpop.f32.mrb[0].mxu0
    %v561 = vpop.f32.mrb[0].mxu0
    %v562 = vpop.f32.mrb[0].mxu0
    %563 = vdwg.mxu0
    %v564 = vxor.u32 %v559, 2147483648
    %v565 = vmul.f32 %v564, 1.442695
    %v566 = vpow.pop %v565
    %v567 = vadd.f32 %v566, 1.0
    %v568 = vrcp.pop %v567
    %v569 = vmul.f32 1.0, %v568
    %v570 = vtanh.pop %v559
    %v571 = vmul.f32 %v569, 0.0
    %573 = vrot.lane.b32.xlu0 %v570, 32
    %v574 = vpop.permute.xlu0 %573
    %v576 = vmul.f32 %v569, %v574
    %578 = vrot.lane.b32.xlu0 %v576, 32
    %v579 = vpop.permute.xlu0 %578
    %v581 = vadd.f32 %v571, %v579
    %v582 = vtanh.pop %v581
    %584 = vrot.lane.b32.xlu0 %v582, 32
    %v585 = vpop.permute.xlu0 %584
    %v587 = vmul.f32 %v569, %v585
    %589 = vrot.lane.b32.xlu0 %v587, 64
    %v590 = vpop.permute.xlu0 %589
    %592 = vst.msk [vmem:[#allocation3] sm:$0xff] %vm318, %v590
    %v593 = vpack.c.bf16 %v587, %v587
    %s594 = scalar_lea.vmem [#allocation2], 8
    %v595 = vld [vmem:[%s594] sm:$0xff]
    %v596 = vsel %vm318, %v488, 0
    %598 = vmatprep.subr.bf16.mxu0 0
    %599 = vmatpush1.bf16.msra.mxu0 %v413
    %600 = vmatprep.subr.bf16.mxu0 0
    %601 = vmatpush1.bf16.msra.mxu0 %v414
    %602 = vmatprep.subr.bf16.mxu0 0
    %603 = vmatpush1.bf16.msra.mxu0 0
    %604 = vmatprep.subr.bf16.mxu0 0
    %605 = vmatpush1.bf16.msra.mxu0 0
    %606 = vmatprep.subr.bf16.mxu0 0
    %607 = vmatpush1.bf16.msra.mxu0 0
    %608 = vmatprep.subr.bf16.mxu0 0
    %609 = vmatpush1.bf16.msra.mxu0 0
    %610 = vmatprep.subr.bf16.mxu0 0
    %611 = vmatpush1.bf16.msra.mxu0 0
    %612 = vmatprep.subr.bf16.mxu0 0
    %613 = vmatpush1.bf16.msra.mxu0 0
    %614 = vmatprep.subr.bf16.mxu0 0
    %615 = vmatpush1.bf16.msra.mxu0 0
    %616 = vmatprep.subr.bf16.mxu0 0
    %617 = vmatpush1.bf16.msra.mxu0 0
    %618 = vmatprep.subr.bf16.mxu0 0
    %619 = vmatpush1.bf16.msra.mxu0 0
    %620 = vmatprep.subr.bf16.mxu0 0
    %621 = vmatpush1.bf16.msra.mxu0 0
    %622 = vmatprep.subr.bf16.mxu0 0
    %623 = vmatpush1.bf16.msra.mxu0 0
    %624 = vmatprep.subr.bf16.mxu0 0
    %625 = vmatpush1.bf16.msra.mxu0 0
    %626 = vmatprep.subr.bf16.mxu0 0
    %627 = vmatpush1.bf16.msra.mxu0 0
    %628 = vmatprep.subr.bf16.mxu0 0
    %629 = vmatpush1.bf16.msra.mxu0 0
    %630 = vmatprep.mubr.bf16.mxu0 0
    %631 = vmatmul.mubr.bf16.gmra.mrb[0].mxu0 %v596
    %v632 = vpop.f32.mrb[0].mxu0
    %v633 = vadd.f32 0.0, %v632
    %v634 = vpop.f32.mrb[0].mxu0
    %v635 = vpop.f32.mrb[0].mxu0
    %v636 = vpop.f32.mrb[0].mxu0
    %637 = vdwg.mxu0
    %v638 = vadd.f32 %v595, %v633
    %v639 = vxor.u32 %v638, 2147483648
    %v640 = vmul.f32 %v639, 1.442695
    %v641 = vpow.pop %v640
    %v642 = vadd.f32 %v641, 1.0
    %v643 = vrcp.pop %v642
    %v644 = vmul.f32 1.0, %v643
    %v645 = vtanh.pop %v638
    %v646 = vmul.f32 %v644, %v478
    %648 = vrot.lane.b32.xlu0 %v645, 32
    %v649 = vpop.permute.xlu0 %648
    %v651 = vmul.f32 %v644, %v649
    %653 = vrot.lane.b32.xlu0 %v651, 32
    %v654 = vpop.permute.xlu0 %653
    %v656 = vadd.f32 %v646, %v654
    %v657 = vtanh.pop %v656
    %659 = vrot.lane.b32.xlu0 %v657, 32
    %v660 = vpop.permute.xlu0 %659
    %v662 = vmul.f32 %v644, %v660
    %v663 = vpack.c.bf16 %v662, %v662
    %665 = vrot.lane.b32.xlu0 %v663, 64
    %v666 = vpop.permute.xlu0 %665
    %668 = vrot.lane.b32.xlu0 %v593, 96
    %v669 = vpop.permute.xlu0 %668
    %v672 = vsel %vm318, %v666, %v669
    %v673 = vsel %vm521, %v672, 0
    %675 = vmatprep.subr.bf16.mxu0 0
    %676 = vmatpush1.bf16.msra.mxu0 %v513
    %677 = vmatprep.subr.bf16.mxu0 0
    %678 = vmatpush1.bf16.msra.mxu0 %v514
    %679 = vmatprep.subr.bf16.mxu0 0
    %680 = vmatpush1.bf16.msra.mxu0 %v515
    %681 = vmatprep.subr.bf16.mxu0 0
    %682 = vmatpush1.bf16.msra.mxu0 %v516
    %683 = vmatprep.subr.bf16.mxu0 0
    %684 = vmatpush1.bf16.msra.mxu0 0
    %685 = vmatprep.subr.bf16.mxu0 0
    %686 = vmatpush1.bf16.msra.mxu0 0
    %687 = vmatprep.subr.bf16.mxu0 0
    %688 = vmatpush1.bf16.msra.mxu0 0
    %689 = vmatprep.subr.bf16.mxu0 0
    %690 = vmatpush1.bf16.msra.mxu0 0
    %691 = vmatprep.subr.bf16.mxu0 0
    %692 = vmatpush1.bf16.msra.mxu0 0
    %693 = vmatprep.subr.bf16.mxu0 0
    %694 = vmatpush1.bf16.msra.mxu0 0
    %695 = vmatprep.subr.bf16.mxu0 0
    %696 = vmatpush1.bf16.msra.mxu0 0
    %697 = vmatprep.subr.bf16.mxu0 0
    %698 = vmatpush1.bf16.msra.mxu0 0
    %699 = vmatprep.subr.bf16.mxu0 0
    %700 = vmatpush1.bf16.msra.mxu0 0
    %701 = vmatprep.subr.bf16.mxu0 0
    %702 = vmatpush1.bf16.msra.mxu0 0
    %703 = vmatprep.subr.bf16.mxu0 0
    %704 = vmatpush1.bf16.msra.mxu0 0
    %705 = vmatprep.subr.bf16.mxu0 0
    %706 = vmatpush1.bf16.msra.mxu0 0
    %707 = vmatprep.mubr.bf16.mxu0 0
    %708 = vmatmul.mubr.bf16.gmra.mrb[0].mxu0 %v673
    %v709 = vpop.f32.mrb[0].mxu0
    %v710 = vadd.f32 %v495, %v709
    %v711 = vpop.f32.mrb[0].mxu0
    %v712 = vpop.f32.mrb[0].mxu0
    %v713 = vpop.f32.mrb[0].mxu0
    %714 = vdwg.mxu0
    %v715 = vxor.u32 %v710, 2147483648
    %v716 = vmul.f32 %v715, 1.442695
    %v717 = vpow.pop %v716
    %v718 = vadd.f32 %v717, 1.0
    %v719 = vrcp.pop %v718
    %v720 = vmul.f32 1.0, %v719
    %v721 = vtanh.pop %v710
    %v722 = vmul.f32 %v720, %v581
    %724 = vrot.lane.b32.xlu0 %v721, 32
    %v725 = vpop.permute.xlu0 %724
    %v727 = vmul.f32 %v720, %v725
    %729 = vrot.lane.b32.xlu0 %v727, 32
    %v730 = vpop.permute.xlu0 %729
    %v732 = vadd.f32 %v722, %v730
    %v733 = vtanh.pop %v732
    %735 = vrot.lane.b32.xlu0 %v733, 32
    %v736 = vpop.permute.xlu0 %735
    %v738 = vmul.f32 %v720, %v736
    %740 = vrot.lane.b32.xlu0 %v738, 64
    %v741 = vpop.permute.xlu0 %740
    %s743 = scalar_lea.vmem [#allocation3], 8
    %744 = vst.msk [vmem:[%s743] sm:$0xff] %vm318, %v741
    %v745 = vpack.c.bf16 %v738, %v738
    %s746 = scalar_lea.vmem [#allocation2], 16
    %v747 = vld [vmem:[%s746] sm:$0xff]
    %v748 = vsel %vm318, %v666, 0
    %750 = vmatprep.subr.bf16.mxu0 0
    %751 = vmatpush1.bf16.msra.mxu0 %v413
    %752 = vmatprep.subr.bf16.mxu0 0
    %753 = vmatpush1.bf16.msra.mxu0 %v414
    %754 = vmatprep.subr.bf16.mxu0 0
    %755 = vmatpush1.bf16.msra.mxu0 0
    %756 = vmatprep.subr.bf16.mxu0 0
    %757 = vmatpush1.bf16.msra.mxu0 0
    %758 = vmatprep.subr.bf16.mxu0 0
    %759 = vmatpush1.bf16.msra.mxu0 0
    %760 = vmatprep.subr.bf16.mxu0 0
    %761 = vmatpush1.bf16.msra.mxu0 0
    %762 = vmatprep.subr.bf16.mxu0 0
    %763 = vmatpush1.bf16.msra.mxu0 0
    %764 = vmatprep.subr.bf16.mxu0 0
    %765 = vmatpush1.bf16.msra.mxu0 0
    %766 = vmatprep.subr.bf16.mxu0 0
    %767 = vmatpush1.bf16.msra.mxu0 0
    %768 = vmatprep.subr.bf16.mxu0 0
    %769 = vmatpush1.bf16.msra.mxu0 0
    %770 = vmatprep.subr.bf16.mxu0 0
    %771 = vmatpush1.bf16.msra.mxu0 0
    %772 = vmatprep.subr.bf16.mxu0 0
    %773 = vmatpush1.bf16.msra.mxu0 0
    %774 = vmatprep.subr.bf16.mxu0 0
    %775 = vmatpush1.bf16.msra.mxu0 0
    %776 = vmatprep.subr.bf16.mxu0 0
    %777 = vmatpush1.bf16.msra.mxu0 0
    %778 = vmatprep.subr.bf16.mxu0 0
    %779 = vmatpush1.bf16.msra.mxu0 0
    %780 = vmatprep.subr.bf16.mxu0 0
    %781 = vmatpush1.bf16.msra.mxu0 0
    %782 = vmatprep.mubr.bf16.mxu0 0
    %783 = vmatmul.mubr.bf16.gmra.mrb[0].mxu0 %v748
    %v784 = vpop.f32.mrb[0].mxu0
    %v785 = vadd.f32 0.0, %v784
    %v786 = vpop.f32.mrb[0].mxu0
    %v787 = vpop.f32.mrb[0].mxu0
    %v788 = vpop.f32.mrb[0].mxu0
    %789 = vdwg.mxu0
    %v790 = vadd.f32 %v747, %v785
    %v791 = vxor.u32 %v790, 2147483648
    %v792 = vmul.f32 %v791, 1.442695
    %v793 = vpow.pop %v792
    %v794 = vadd.f32 %v793, 1.0
    %v795 = vrcp.pop %v794
    %v796 = vmul.f32 1.0, %v795
    %v797 = vtanh.pop %v790
    %v798 = vmul.f32 %v796, %v656
    %800 = vrot.lane.b32.xlu0 %v797, 32
    %v801 = vpop.permute.xlu0 %800
    %v803 = vmul.f32 %v796, %v801
    %805 = vrot.lane.b32.xlu0 %v803, 32
    %v806 = vpop.permute.xlu0 %805
    %v808 = vadd.f32 %v798, %v806
    %v809 = vtanh.pop %v808
    %811 = vrot.lane.b32.xlu0 %v809, 32
    %v812 = vpop.permute.xlu0 %811
    %v814 = vmul.f32 %v796, %v812
    %v815 = vpack.c.bf16 %v814, %v814
    %817 = vrot.lane.b32.xlu0 %v815, 64
    %v818 = vpop.permute.xlu0 %817
    %820 = vrot.lane.b32.xlu0 %v745, 96
    %v821 = vpop.permute.xlu0 %820
    %v824 = vsel %vm318, %v818, %v821
    %v825 = vsel %vm521, %v824, 0
    %827 = vmatprep.subr.bf16.mxu0 0
    %828 = vmatpush1.bf16.msra.mxu0 %v513
    %829 = vmatprep.subr.bf16.mxu0 0
    %830 = vmatpush1.bf16.msra.mxu0 %v514
    %831 = vmatprep.subr.bf16.mxu0 0
    %832 = vmatpush1.bf16.msra.mxu0 %v515
    %833 = vmatprep.subr.bf16.mxu0 0
    %834 = vmatpush1.bf16.msra.mxu0 %v516
    %835 = vmatprep.subr.bf16.mxu0 0
    %836 = vmatpush1.bf16.msra.mxu0 0
    %837 = vmatprep.subr.bf16.mxu0 0
    %838 = vmatpush1.bf16.msra.mxu0 0
    %839 = vmatprep.subr.bf16.mxu0 0
    %840 = vmatpush1.bf16.msra.mxu0 0
    %841 = vmatprep.subr.bf16.mxu0 0
    %842 = vmatpush1.bf16.msra.mxu0 0
    %843 = vmatprep.subr.bf16.mxu0 0
    %844 = vmatpush1.bf16.msra.mxu0 0
    %845 = vmatprep.subr.bf16.mxu0 0
    %846 = vmatpush1.bf16.msra.mxu0 0
    %847 = vmatprep.subr.bf16.mxu0 0
    %848 = vmatpush1.bf16.msra.mxu0 0
    %849 = vmatprep.subr.bf16.mxu0 0
    %850 = vmatpush1.bf16.msra.mxu0 0
    %851 = vmatprep.subr.bf16.mxu0 0
    %852 = vmatpush1.bf16.msra.mxu0 0
    %853 = vmatprep.subr.bf16.mxu0 0
    %854 = vmatpush1.bf16.msra.mxu0 0
    %855 = vmatprep.subr.bf16.mxu0 0
    %856 = vmatpush1.bf16.msra.mxu0 0
    %857 = vmatprep.subr.bf16.mxu0 0
    %858 = vmatpush1.bf16.msra.mxu0 0
    %859 = vmatprep.mubr.bf16.mxu0 0
    %860 = vmatmul.mubr.bf16.gmra.mrb[0].mxu0 %v825
    %v861 = vpop.f32.mrb[0].mxu0
    %v862 = vadd.f32 %v495, %v861
    %v863 = vpop.f32.mrb[0].mxu0
    %v864 = vpop.f32.mrb[0].mxu0
    %v865 = vpop.f32.mrb[0].mxu0
    %866 = vdwg.mxu0
    %v867 = vxor.u32 %v862, 2147483648
    %v868 = vmul.f32 %v867, 1.442695
    %v869 = vpow.pop %v868
    %v870 = vadd.f32 %v869, 1.0
    %v871 = vrcp.pop %v870
    %v872 = vmul.f32 1.0, %v871
    %v873 = vtanh.pop %v862
    %v874 = vmul.f32 %v872, %v732
    %876 = vrot.lane.b32.xlu0 %v873, 32
    %v877 = vpop.permute.xlu0 %876
    %v879 = vmul.f32 %v872, %v877
    %881 = vrot.lane.b32.xlu0 %v879, 32
    %v882 = vpop.permute.xlu0 %881
    %v884 = vadd.f32 %v874, %v882
    %v885 = vtanh.pop %v884
    %887 = vrot.lane.b32.xlu0 %v885, 32
    %v888 = vpop.permute.xlu0 %887
    %v890 = vmul.f32 %v872, %v888
    %892 = vrot.lane.b32.xlu0 %v890, 64
    %v893 = vpop.permute.xlu0 %892
    %s895 = scalar_lea.vmem [#allocation3], 16
    %896 = vst.msk [vmem:[%s895] sm:$0xff] %vm318, %v893
    %v897 = vpack.c.bf16 %v890, %v890
    %s898 = scalar_lea.vmem [#allocation2], 24
    %v899 = vld [vmem:[%s898] sm:$0xff]
    %v900 = vsel %vm318, %v818, 0
    %902 = vmatprep.subr.bf16.mxu0 0
    %903 = vmatpush1.bf16.msra.mxu0 %v413
    %904 = vmatprep.subr.bf16.mxu0 0
    %905 = vmatpush1.bf16.msra.mxu0 %v414
    %906 = vmatprep.subr.bf16.mxu0 0
    %907 = vmatpush1.bf16.msra.mxu0 0
    %908 = vmatprep.subr.bf16.mxu0 0
    %909 = vmatpush1.bf16.msra.mxu0 0
    %910 = vmatprep.subr.bf16.mxu0 0
    %911 = vmatpush1.bf16.msra.mxu0 0
    %912 = vmatprep.subr.bf16.mxu0 0
    %913 = vmatpush1.bf16.msra.mxu0 0
    %914 = vmatprep.subr.bf16.mxu0 0
    %915 = vmatpush1.bf16.msra.mxu0 0
    %916 = vmatprep.subr.bf16.mxu0 0
    %917 = vmatpush1.bf16.msra.mxu0 0
    %918 = vmatprep.subr.bf16.mxu0 0
    %919 = vmatpush1.bf16.msra.mxu0 0
    %920 = vmatprep.subr.bf16.mxu0 0
    %921 = vmatpush1.bf16.msra.mxu0 0
    %922 = vmatprep.subr.bf16.mxu0 0
    %923 = vmatpush1.bf16.msra.mxu0 0
    %924 = vmatprep.subr.bf16.mxu0 0
    %925 = vmatpush1.bf16.msra.mxu0 0
    %926 = vmatprep.subr.bf16.mxu0 0
    %927 = vmatpush1.bf16.msra.mxu0 0
    %928 = vmatprep.subr.bf16.mxu0 0
    %929 = vmatpush1.bf16.msra.mxu0 0
    %930 = vmatprep.subr.bf16.mxu0 0
    %931 = vmatpush1.bf16.msra.mxu0 0
    %932 = vmatprep.subr.bf16.mxu0 0
    %933 = vmatpush1.bf16.msra.mxu0 0
    %934 = vmatprep.mubr.bf16.mxu0 0
    %935 = vmatmul.mubr.bf16.gmra.mrb[0].mxu0 %v900
    %v936 = vpop.f32.mrb[0].mxu0
    %v937 = vadd.f32 0.0, %v936
    %v938 = vpop.f32.mrb[0].mxu0
    %v939 = vpop.f32.mrb[0].mxu0
    %v940 = vpop.f32.mrb[0].mxu0
    %941 = vdwg.mxu0
    %v942 = vadd.f32 %v899, %v937
    %v943 = vxor.u32 %v942, 2147483648
    %v944 = vmul.f32 %v943, 1.442695
    %v945 = vpow.pop %v944
    %v946 = vadd.f32 %v945, 1.0
    %v947 = vrcp.pop %v946
    %v948 = vmul.f32 1.0, %v947
    %v949 = vtanh.pop %v942
    %v950 = vmul.f32 %v948, %v808
    %952 = vrot.lane.b32.xlu0 %v949, 32
    %v953 = vpop.permute.xlu0 %952
    %v955 = vmul.f32 %v948, %v953
    %957 = vrot.lane.b32.xlu0 %v955, 32
    %v958 = vpop.permute.xlu0 %957
    %v960 = vadd.f32 %v950, %v958
    %v961 = vtanh.pop %v960
    %963 = vrot.lane.b32.xlu0 %v961, 32
    %v964 = vpop.permute.xlu0 %963
    %v966 = vmul.f32 %v948, %v964
    %v967 = vpack.c.bf16 %v966, %v966
    %969 = vrot.lane.b32.xlu0 %v967, 64
    %v970 = vpop.permute.xlu0 %969
    %972 = vrot.lane.b32.xlu0 %v897, 96
    %v973 = vpop.permute.xlu0 %972
    %v976 = vsel %vm318, %v970, %v973
    %v977 = vsel %vm521, %v976, 0
    %979 = vmatprep.subr.bf16.mxu0 0
    %980 = vmatpush1.bf16.msra.mxu0 %v513
    %981 = vmatprep.subr.bf16.mxu0 0
    %982 = vmatpush1.bf16.msra.mxu0 %v514
    %983 = vmatprep.subr.bf16.mxu0 0
    %984 = vmatpush1.bf16.msra.mxu0 %v515
    %985 = vmatprep.subr.bf16.mxu0 0
    %986 = vmatpush1.bf16.msra.mxu0 %v516
    %987 = vmatprep.subr.bf16.mxu0 0
    %988 = vmatpush1.bf16.msra.mxu0 0
    %989 = vmatprep.subr.bf16.mxu0 0
    %990 = vmatpush1.bf16.msra.mxu0 0
    %991 = vmatprep.subr.bf16.mxu0 0
    %992 = vmatpush1.bf16.msra.mxu0 0
    %993 = vmatprep.subr.bf16.mxu0 0
    %994 = vmatpush1.bf16.msra.mxu0 0
    %995 = vmatprep.subr.bf16.mxu0 0
    %996 = vmatpush1.bf16.msra.mxu0 0
    %997 = vmatprep.subr.bf16.mxu0 0
    %998 = vmatpush1.bf16.msra.mxu0 0
    %999 = vmatprep.subr.bf16.mxu0 0
    %1000 = vmatpush1.bf16.msra.mxu0 0
    %1001 = vmatprep.subr.bf16.mxu0 0
    %1002 = vmatpush1.bf16.msra.mxu0 0
    %1003 = vmatprep.subr.bf16.mxu0 0
    %1004 = vmatpush1.bf16.msra.mxu0 0
    %1005 = vmatprep.subr.bf16.mxu0 0
    %1006 = vmatpush1.bf16.msra.mxu0 0
    %1007 = vmatprep.subr.bf16.mxu0 0
    %1008 = vmatpush1.bf16.msra.mxu0 0
    %1009 = vmatprep.subr.bf16.mxu0 0
    %1010 = vmatpush1.bf16.msra.mxu0 0
    %1011 = vmatprep.mubr.bf16.mxu0 0
    %1012 = vmatmul.mubr.bf16.gmra.mrb[0].mxu0 %v977
    %v1013 = vpop.f32.mrb[0].mxu0
    %v1014 = vadd.f32 %v495, %v1013
    %v1015 = vpop.f32.mrb[0].mxu0
    %v1016 = vpop.f32.mrb[0].mxu0
    %v1017 = vpop.f32.mrb[0].mxu0
    %1018 = vdwg.mxu0
    %v1019 = vxor.u32 %v1014, 2147483648
    %v1020 = vmul.f32 %v1019, 1.442695
    %v1021 = vpow.pop %v1020
    %v1022 = vadd.f32 %v1021, 1.0
    %v1023 = vrcp.pop %v1022
    %v1024 = vmul.f32 1.0, %v1023
    %v1025 = vtanh.pop %v1014
    %v1026 = vmul.f32 %v1024, %v884
    %1028 = vrot.lane.b32.xlu0 %v1025, 32
    %v1029 = vpop.permute.xlu0 %1028
    %v1031 = vmul.f32 %v1024, %v1029
    %1033 = vrot.lane.b32.xlu0 %v1031, 32
    %v1034 = vpop.permute.xlu0 %1033
    %v1036 = vadd.f32 %v1026, %v1034
    %v1037 = vtanh.pop %v1036
    %1039 = vrot.lane.b32.xlu0 %v1037, 32
    %v1040 = vpop.permute.xlu0 %1039
    %v1042 = vmul.f32 %v1024, %v1040
    %1044 = vrot.lane.b32.xlu0 %v1042, 64
    %v1045 = vpop.permute.xlu0 %1044
    %s1047 = scalar_lea.vmem [#allocation3], 24
    %1048 = vst.msk [vmem:[%s1047] sm:$0xff] %vm318, %v1045
    %v1049 = vpack.c.bf16 %v1042, %v1042
    %s1050 = scalar_lea.vmem [#allocation2], 32
    %v1051 = vld [vmem:[%s1050] sm:$0xff]
    %v1052 = vsel %vm318, %v970, 0
    %1054 = vmatprep.subr.bf16.mxu0 0
    %1055 = vmatpush1.bf16.msra.mxu0 %v413
    %1056 = vmatprep.subr.bf16.mxu0 0
    %1057 = vmatpush1.bf16.msra.mxu0 %v414
    %1058 = vmatprep.subr.bf16.mxu0 0
    %1059 = vmatpush1.bf16.msra.mxu0 0
    %1060 = vmatprep.subr.bf16.mxu0 0
    %1061 = vmatpush1.bf16.msra.mxu0 0
    %1062 = vmatprep.subr.bf16.mxu0 0
    %1063 = vmatpush1.bf16.msra.mxu0 0
    %1064 = vmatprep.subr.bf16.mxu0 0
    %1065 = vmatpush1.bf16.msra.mxu0 0
    %1066 = vmatprep.subr.bf16.mxu0 0
    %1067 = vmatpush1.bf16.msra.mxu0 0
    %1068 = vmatprep.subr.bf16.mxu0 0
    %1069 = vmatpush1.bf16.msra.mxu0 0
    %1070 = vmatprep.subr.bf16.mxu0 0
    %1071 = vmatpush1.bf16.msra.mxu0 0
    %1072 = vmatprep.subr.bf16.mxu0 0
    %1073 = vmatpush1.bf16.msra.mxu0 0
    %1074 = vmatprep.subr.bf16.mxu0 0
    %1075 = vmatpush1.bf16.msra.mxu0 0
    %1076 = vmatprep.subr.bf16.mxu0 0
    %1077 = vmatpush1.bf16.msra.mxu0 0
    %1078 = vmatprep.subr.bf16.mxu0 0
    %1079 = vmatpush1.bf16.msra.mxu0 0
    %1080 = vmatprep.subr.bf16.mxu0 0
    %1081 = vmatpush1.bf16.msra.mxu0 0
    %1082 = vmatprep.subr.bf16.mxu0 0
    %1083 = vmatpush1.bf16.msra.mxu0 0
    %1084 = vmatprep.subr.bf16.mxu0 0
    %1085 = vmatpush1.bf16.msra.mxu0 0
    %1086 = vmatprep.mubr.bf16.mxu0 0
    %1087 = vmatmul.mubr.bf16.gmra.mrb[0].mxu0 %v1052
    %v1088 = vpop.f32.mrb[0].mxu0
    %v1089 = vadd.f32 0.0, %v1088
    %v1090 = vpop.f32.mrb[0].mxu0
    %v1091 = vpop.f32.mrb[0].mxu0
    %v1092 = vpop.f32.mrb[0].mxu0
    %1093 = vdwg.mxu0
    %v1094 = vadd.f32 %v1051, %v1089
    %v1095 = vxor.u32 %v1094, 2147483648
    %v1096 = vmul.f32 %v1095, 1.442695
    %v1097 = vpow.pop %v1096
    %v1098 = vadd.f32 %v1097, 1.0
    %v1099 = vrcp.pop %v1098
    %v1100 = vmul.f32 1.0, %v1099
    %v1101 = vtanh.pop %v1094
    %v1102 = vmul.f32 %v1100, %v960
    %1104 = vrot.lane.b32.xlu0 %v1101, 32
    %v1105 = vpop.permute.xlu0 %1104
    %v1107 = vmul.f32 %v1100, %v1105
    %1109 = vrot.lane.b32.xlu0 %v1107, 32
    %v1110 = vpop.permute.xlu0 %1109
    %v1112 = vadd.f32 %v1102, %v1110
    %v1113 = vtanh.pop %v1112
    %1115 = vrot.lane.b32.xlu0 %v1113, 32
    %v1116 = vpop.permute.xlu0 %1115
    %v1118 = vmul.f32 %v1100, %v1116
    %v1119 = vpack.c.bf16 %v1118, %v1118
    %1121 = vrot.lane.b32.xlu0 %v1119, 64
    %v1122 = vpop.permute.xlu0 %1121
    %1124 = vrot.lane.b32.xlu0 %v1049, 96
    %v1125 = vpop.permute.xlu0 %1124
    %v1128 = vsel %vm318, %v1122, %v1125
    %v1129 = vsel %vm521, %v1128, 0
    %1131 = vmatprep.subr.bf16.mxu0 0
    %1132 = vmatpush1.bf16.msra.mxu0 %v513
    %1133 = vmatprep.subr.bf16.mxu0 0
    %1134 = vmatpush1.bf16.msra.mxu0 %v514
    %1135 = vmatprep.subr.bf16.mxu0 0
    %1136 = vmatpush1.bf16.msra.mxu0 %v515
    %1137 = vmatprep.subr.bf16.mxu0 0
    %1138 = vmatpush1.bf16.msra.mxu0 %v516
    %1139 = vmatprep.subr.bf16.mxu0 0
    %1140 = vmatpush1.bf16.msra.mxu0 0
    %1141 = vmatprep.subr.bf16.mxu0 0
    %1142 = vmatpush1.bf16.msra.mxu0 0
    %1143 = vmatprep.subr.bf16.mxu0 0
    %1144 = vmatpush1.bf16.msra.mxu0 0
    %1145 = vmatprep.subr.bf16.mxu0 0
    %1146 = vmatpush1.bf16.msra.mxu0 0
    %1147 = vmatprep.subr.bf16.mxu0 0
    %1148 = vmatpush1.bf16.msra.mxu0 0
    %1149 = vmatprep.subr.bf16.mxu0 0
    %1150 = vmatpush1.bf16.msra.mxu0 0
    %1151 = vmatprep.subr.bf16.mxu0 0
    %1152 = vmatpush1.bf16.msra.mxu0 0
    %1153 = vmatprep.subr.bf16.mxu0 0
    %1154 = vmatpush1.bf16.msra.mxu0 0
    %1155 = vmatprep.subr.bf16.mxu0 0
    %1156 = vmatpush1.bf16.msra.mxu0 0
    %1157 = vmatprep.subr.bf16.mxu0 0
    %1158 = vmatpush1.bf16.msra.mxu0 0
    %1159 = vmatprep.subr.bf16.mxu0 0
    %1160 = vmatpush1.bf16.msra.mxu0 0
    %1161 = vmatprep.subr.bf16.mxu0 0
    %1162 = vmatpush1.bf16.msra.mxu0 0
    %1163 = vmatprep.mubr.bf16.mxu0 0
    %1164 = vmatmul.mubr.bf16.gmra.mrb[0].mxu0 %v1129
    %v1165 = vpop.f32.mrb[0].mxu0
    %v1166 = vadd.f32 %v495, %v1165
    %v1167 = vpop.f32.mrb[0].mxu0
    %v1168 = vpop.f32.mrb[0].mxu0
    %v1169 = vpop.f32.mrb[0].mxu0
    %1170 = vdwg.mxu0
    %v1171 = vxor.u32 %v1166, 2147483648
    %v1172 = vmul.f32 %v1171, 1.442695
    %v1173 = vpow.pop %v1172
    %v1174 = vadd.f32 %v1173, 1.0
    %v1175 = vrcp.pop %v1174
    %v1176 = vmul.f32 1.0, %v1175
    %v1177 = vtanh.pop %v1166
    %v1178 = vmul.f32 %v1176, %v1036
    %1180 = vrot.lane.b32.xlu0 %v1177, 32
    %v1181 = vpop.permute.xlu0 %1180
    %v1183 = vmul.f32 %v1176, %v1181
    %1185 = vrot.lane.b32.xlu0 %v1183, 32
    %v1186 = vpop.permute.xlu0 %1185
    %v1188 = vadd.f32 %v1178, %v1186
    %v1189 = vtanh.pop %v1188
    %1191 = vrot.lane.b32.xlu0 %v1189, 32
    %v1192 = vpop.permute.xlu0 %1191
    %v1194 = vmul.f32 %v1176, %v1192
    %1196 = vrot.lane.b32.xlu0 %v1194, 64
    %v1197 = vpop.permute.xlu0 %1196
    %s1199 = scalar_lea.vmem [#allocation3], 32
    %1200 = vst.msk [vmem:[%s1199] sm:$0xff] %vm318, %v1197
    %v1201 = vpack.c.bf16 %v1194, %v1194
    %s1202 = scalar_lea.vmem [#allocation2], 40
    %v1203 = vld [vmem:[%s1202] sm:$0xff]
    %v1204 = vsel %vm318, %v1122, 0
    %1206 = vmatprep.subr.bf16.mxu0 0
    %1207 = vmatpush1.bf16.msra.mxu0 %v413
    %1208 = vmatprep.subr.bf16.mxu0 0
    %1209 = vmatpush1.bf16.msra.mxu0 %v414
    %1210 = vmatprep.subr.bf16.mxu0 0
    %1211 = vmatpush1.bf16.msra.mxu0 0
    %1212 = vmatprep.subr.bf16.mxu0 0
    %1213 = vmatpush1.bf16.msra.mxu0 0
    %1214 = vmatprep.subr.bf16.mxu0 0
    %1215 = vmatpush1.bf16.msra.mxu0 0
    %1216 = vmatprep.subr.bf16.mxu0 0
    %1217 = vmatpush1.bf16.msra.mxu0 0
    %1218 = vmatprep.subr.bf16.mxu0 0
    %1219 = vmatpush1.bf16.msra.mxu0 0
    %1220 = vmatprep.subr.bf16.mxu0 0
    %1221 = vmatpush1.bf16.msra.mxu0 0
    %1222 = vmatprep.subr.bf16.mxu0 0
    %1223 = vmatpush1.bf16.msra.mxu0 0
    %1224 = vmatprep.subr.bf16.mxu0 0
    %1225 = vmatpush1.bf16.msra.mxu0 0
    %1226 = vmatprep.subr.bf16.mxu0 0
    %1227 = vmatpush1.bf16.msra.mxu0 0
    %1228 = vmatprep.subr.bf16.mxu0 0
    %1229 = vmatpush1.bf16.msra.mxu0 0
    %1230 = vmatprep.subr.bf16.mxu0 0
    %1231 = vmatpush1.bf16.msra.mxu0 0
    %1232 = vmatprep.subr.bf16.mxu0 0
    %1233 = vmatpush1.bf16.msra.mxu0 0
    %1234 = vmatprep.subr.bf16.mxu0 0
    %1235 = vmatpush1.bf16.msra.mxu0 0
    %1236 = vmatprep.subr.bf16.mxu0 0
    %1237 = vmatpush1.bf16.msra.mxu0 0
    %1238 = vmatprep.mubr.bf16.mxu0 0
    %1239 = vmatmul.mubr.bf16.gmra.mrb[0].mxu0 %v1204
    %v1240 = vpop.f32.mrb[0].mxu0
    %v1241 = vadd.f32 0.0, %v1240
    %v1242 = vpop.f32.mrb[0].mxu0
    %v1243 = vpop.f32.mrb[0].mxu0
    %v1244 = vpop.f32.mrb[0].mxu0
    %1245 = vdwg.mxu0
    %v1246 = vadd.f32 %v1203, %v1241
    %v1247 = vxor.u32 %v1246, 2147483648
    %v1248 = vmul.f32 %v1247, 1.442695
    %v1249 = vpow.pop %v1248
    %v1250 = vadd.f32 %v1249, 1.0
    %v1251 = vrcp.pop %v1250
    %v1252 = vmul.f32 1.0, %v1251
    %v1253 = vtanh.pop %v1246
    %v1254 = vmul.f32 %v1252, %v1112
    %1256 = vrot.lane.b32.xlu0 %v1253, 32
    %v1257 = vpop.permute.xlu0 %1256
    %v1259 = vmul.f32 %v1252, %v1257
    %1261 = vrot.lane.b32.xlu0 %v1259, 32
    %v1262 = vpop.permute.xlu0 %1261
    %v1264 = vadd.f32 %v1254, %v1262
    %v1265 = vtanh.pop %v1264
    %1267 = vrot.lane.b32.xlu0 %v1265, 32
    %v1268 = vpop.permute.xlu0 %1267
    %v1270 = vmul.f32 %v1252, %v1268
    %v1271 = vpack.c.bf16 %v1270, %v1270
    %1273 = vrot.lane.b32.xlu0 %v1271, 64
    %v1274 = vpop.permute.xlu0 %1273
    %1276 = vrot.lane.b32.xlu0 %v1201, 96
    %v1277 = vpop.permute.xlu0 %1276
    %v1280 = vsel %vm318, %v1274, %v1277
    %v1281 = vsel %vm521, %v1280, 0
    %1283 = vmatprep.subr.bf16.mxu0 0
    %1284 = vmatpush1.bf16.msra.mxu0 %v513
    %1285 = vmatprep.subr.bf16.mxu0 0
    %1286 = vmatpush1.bf16.msra.mxu0 %v514
    %1287 = vmatprep.subr.bf16.mxu0 0
    %1288 = vmatpush1.bf16.msra.mxu0 %v515
    %1289 = vmatprep.subr.bf16.mxu0 0
    %1290 = vmatpush1.bf16.msra.mxu0 %v516
    %1291 = vmatprep.subr.bf16.mxu0 0
    %1292 = vmatpush1.bf16.msra.mxu0 0
    %1293 = vmatprep.subr.bf16.mxu0 0
    %1294 = vmatpush1.bf16.msra.mxu0 0
    %1295 = vmatprep.subr.bf16.mxu0 0
    %1296 = vmatpush1.bf16.msra.mxu0 0
    %1297 = vmatprep.subr.bf16.mxu0 0
    %1298 = vmatpush1.bf16.msra.mxu0 0
    %1299 = vmatprep.subr.bf16.mxu0 0
    %1300 = vmatpush1.bf16.msra.mxu0 0
    %1301 = vmatprep.subr.bf16.mxu0 0
    %1302 = vmatpush1.bf16.msra.mxu0 0
    %1303 = vmatprep.subr.bf16.mxu0 0
    %1304 = vmatpush1.bf16.msra.mxu0 0
    %1305 = vmatprep.subr.bf16.mxu0 0
    %1306 = vmatpush1.bf16.msra.mxu0 0
    %1307 = vmatprep.subr.bf16.mxu0 0
    %1308 = vmatpush1.bf16.msra.mxu0 0
    %1309 = vmatprep.subr.bf16.mxu0 0
    %1310 = vmatpush1.bf16.msra.mxu0 0
    %1311 = vmatprep.subr.bf16.mxu0 0
    %1312 = vmatpush1.bf16.msra.mxu0 0
    %1313 = vmatprep.subr.bf16.mxu0 0
    %1314 = vmatpush1.bf16.msra.mxu0 0
    %1315 = vmatprep.mubr.bf16.mxu0 0
    %1316 = vmatmul.mubr.bf16.gmra.mrb[0].mxu0 %v1281
    %v1317 = vpop.f32.mrb[0].mxu0
    %v1318 = vadd.f32 %v495, %v1317
    %v1319 = vpop.f32.mrb[0].mxu0
    %v1320 = vpop.f32.mrb[0].mxu0
    %v1321 = vpop.f32.mrb[0].mxu0
    %1322 = vdwg.mxu0
    %v1323 = vxor.u32 %v1318, 2147483648
    %v1324 = vmul.f32 %v1323, 1.442695
    %v1325 = vpow.pop %v1324
    %v1326 = vadd.f32 %v1325, 1.0
    %v1327 = vrcp.pop %v1326
    %v1328 = vmul.f32 1.0, %v1327
    %v1329 = vtanh.pop %v1318
    %v1330 = vmul.f32 %v1328, %v1188
    %1332 = vrot.lane.b32.xlu0 %v1329, 32
    %v1333 = vpop.permute.xlu0 %1332
    %v1335 = vmul.f32 %v1328, %v1333
    %1337 = vrot.lane.b32.xlu0 %v1335, 32
    %v1338 = vpop.permute.xlu0 %1337
    %v1340 = vadd.f32 %v1330, %v1338
    %v1341 = vtanh.pop %v1340
    %1343 = vrot.lane.b32.xlu0 %v1341, 32
    %v1344 = vpop.permute.xlu0 %1343
    %v1346 = vmul.f32 %v1328, %v1344
    %1348 = vrot.lane.b32.xlu0 %v1346, 64
    %v1349 = vpop.permute.xlu0 %1348
    %s1351 = scalar_lea.vmem [#allocation3], 40
    %1352 = vst.msk [vmem:[%s1351] sm:$0xff] %vm318, %v1349
    %v1353 = vpack.c.bf16 %v1346, %v1346
    %s1354 = scalar_lea.vmem [#allocation2], 48
    %v1355 = vld [vmem:[%s1354] sm:$0xff]
    %v1356 = vsel %vm318, %v1274, 0
    %1358 = vmatprep.subr.bf16.mxu0 0
    %1359 = vmatpush1.bf16.msra.mxu0 %v413
    %1360 = vmatprep.subr.bf16.mxu0 0
    %1361 = vmatpush1.bf16.msra.mxu0 %v414
    %1362 = vmatprep.subr.bf16.mxu0 0
    %1363 = vmatpush1.bf16.msra.mxu0 0
    %1364 = vmatprep.subr.bf16.mxu0 0
    %1365 = vmatpush1.bf16.msra.mxu0 0
    %1366 = vmatprep.subr.bf16.mxu0 0
    %1367 = vmatpush1.bf16.msra.mxu0 0
    %1368 = vmatprep.subr.bf16.mxu0 0
    %1369 = vmatpush1.bf16.msra.mxu0 0
    %1370 = vmatprep.subr.bf16.mxu0 0
    %1371 = vmatpush1.bf16.msra.mxu0 0
    %1372 = vmatprep.subr.bf16.mxu0 0
    %1373 = vmatpush1.bf16.msra.mxu0 0
    %1374 = vmatprep.subr.bf16.mxu0 0
    %1375 = vmatpush1.bf16.msra.mxu0 0
    %1376 = vmatprep.subr.bf16.mxu0 0
    %1377 = vmatpush1.bf16.msra.mxu0 0
    %1378 = vmatprep.subr.bf16.mxu0 0
    %1379 = vmatpush1.bf16.msra.mxu0 0
    %1380 = vmatprep.subr.bf16.mxu0 0
    %1381 = vmatpush1.bf16.msra.mxu0 0
    %1382 = vmatprep.subr.bf16.mxu0 0
    %1383 = vmatpush1.bf16.msra.mxu0 0
    %1384 = vmatprep.subr.bf16.mxu0 0
    %1385 = vmatpush1.bf16.msra.mxu0 0
    %1386 = vmatprep.subr.bf16.mxu0 0
    %1387 = vmatpush1.bf16.msra.mxu0 0
    %1388 = vmatprep.subr.bf16.mxu0 0
    %1389 = vmatpush1.bf16.msra.mxu0 0
    %1390 = vmatprep.mubr.bf16.mxu0 0
    %1391 = vmatmul.mubr.bf16.gmra.mrb[0].mxu0 %v1356
    %v1392 = vpop.f32.mrb[0].mxu0
    %v1393 = vadd.f32 0.0, %v1392
    %v1394 = vpop.f32.mrb[0].mxu0
    %v1395 = vpop.f32.mrb[0].mxu0
    %v1396 = vpop.f32.mrb[0].mxu0
    %1397 = vdwg.mxu0
    %v1398 = vadd.f32 %v1355, %v1393
    %v1399 = vxor.u32 %v1398, 2147483648
    %v1400 = vmul.f32 %v1399, 1.442695
    %v1401 = vpow.pop %v1400
    %v1402 = vadd.f32 %v1401, 1.0
    %v1403 = vrcp.pop %v1402
    %v1404 = vmul.f32 1.0, %v1403
    %v1405 = vtanh.pop %v1398
    %v1406 = vmul.f32 %v1404, %v1264
    %1408 = vrot.lane.b32.xlu0 %v1405, 32
    %v1409 = vpop.permute.xlu0 %1408
    %v1411 = vmul.f32 %v1404, %v1409
    %1413 = vrot.lane.b32.xlu0 %v1411, 32
    %v1414 = vpop.permute.xlu0 %1413
    %v1416 = vadd.f32 %v1406, %v1414
    %v1417 = vtanh.pop %v1416
    %1419 = vrot.lane.b32.xlu0 %v1417, 32
    %v1420 = vpop.permute.xlu0 %1419
    %v1422 = vmul.f32 %v1404, %v1420
    %v1423 = vpack.c.bf16 %v1422, %v1422
    %1425 = vrot.lane.b32.xlu0 %v1423, 64
    %v1426 = vpop.permute.xlu0 %1425
    %1428 = vrot.lane.b32.xlu0 %v1353, 96
    %v1429 = vpop.permute.xlu0 %1428
    %v1432 = vsel %vm318, %v1426, %v1429
    %v1433 = vsel %vm521, %v1432, 0
    %1435 = vmatprep.subr.bf16.mxu0 0
    %1436 = vmatpush1.bf16.msra.mxu0 %v513
    %1437 = vmatprep.subr.bf16.mxu0 0
    %1438 = vmatpush1.bf16.msra.mxu0 %v514
    %1439 = vmatprep.subr.bf16.mxu0 0
    %1440 = vmatpush1.bf16.msra.mxu0 %v515
    %1441 = vmatprep.subr.bf16.mxu0 0
    %1442 = vmatpush1.bf16.msra.mxu0 %v516
    %1443 = vmatprep.subr.bf16.mxu0 0
    %1444 = vmatpush1.bf16.msra.mxu0 0
    %1445 = vmatprep.subr.bf16.mxu0 0
    %1446 = vmatpush1.bf16.msra.mxu0 0
    %1447 = vmatprep.subr.bf16.mxu0 0
    %1448 = vmatpush1.bf16.msra.mxu0 0
    %1449 = vmatprep.subr.bf16.mxu0 0
    %1450 = vmatpush1.bf16.msra.mxu0 0
    %1451 = vmatprep.subr.bf16.mxu0 0
    %1452 = vmatpush1.bf16.msra.mxu0 0
    %1453 = vmatprep.subr.bf16.mxu0 0
    %1454 = vmatpush1.bf16.msra.mxu0 0
    %1455 = vmatprep.subr.bf16.mxu0 0
    %1456 = vmatpush1.bf16.msra.mxu0 0
    %1457 = vmatprep.subr.bf16.mxu0 0
    %1458 = vmatpush1.bf16.msra.mxu0 0
    %1459 = vmatprep.subr.bf16.mxu0 0
    %1460 = vmatpush1.bf16.msra.mxu0 0
    %1461 = vmatprep.subr.bf16.mxu0 0
    %1462 = vmatpush1.bf16.msra.mxu0 0
    %1463 = vmatprep.subr.bf16.mxu0 0
    %1464 = vmatpush1.bf16.msra.mxu0 0
    %1465 = vmatprep.subr.bf16.mxu0 0
    %1466 = vmatpush1.bf16.msra.mxu0 0
    %1467 = vmatprep.mubr.bf16.mxu0 0
    %1468 = vmatmul.mubr.bf16.gmra.mrb[0].mxu0 %v1433
    %v1469 = vpop.f32.mrb[0].mxu0
    %v1470 = vadd.f32 %v495, %v1469
    %v1471 = vpop.f32.mrb[0].mxu0
    %v1472 = vpop.f32.mrb[0].mxu0
    %v1473 = vpop.f32.mrb[0].mxu0
    %1474 = vdwg.mxu0
    %v1475 = vxor.u32 %v1470, 2147483648
    %v1476 = vmul.f32 %v1475, 1.442695
    %v1477 = vpow.pop %v1476
    %v1478 = vadd.f32 %v1477, 1.0
    %v1479 = vrcp.pop %v1478
    %v1480 = vmul.f32 1.0, %v1479
    %v1481 = vtanh.pop %v1470
    %v1482 = vmul.f32 %v1480, %v1340
    %1484 = vrot.lane.b32.xlu0 %v1481, 32
    %v1485 = vpop.permute.xlu0 %1484
    %v1487 = vmul.f32 %v1480, %v1485
    %1489 = vrot.lane.b32.xlu0 %v1487, 32
    %v1490 = vpop.permute.xlu0 %1489
    %v1492 = vadd.f32 %v1482, %v1490
    %v1493 = vtanh.pop %v1492
    %1495 = vrot.lane.b32.xlu0 %v1493, 32
    %v1496 = vpop.permute.xlu0 %1495
    %v1498 = vmul.f32 %v1480, %v1496
    %1500 = vrot.lane.b32.xlu0 %v1498, 64
    %v1501 = vpop.permute.xlu0 %1500
    %s1503 = scalar_lea.vmem [#allocation3], 48
    %1504 = vst.msk [vmem:[%s1503] sm:$0xff] %vm318, %v1501
    %v1505 = vpack.c.bf16 %v1498, %v1498
    %s1506 = scalar_lea.vmem [#allocation2], 56
    %v1507 = vld [vmem:[%s1506] sm:$0xff]
    %v1508 = vsel %vm318, %v1426, 0
    %1510 = vmatprep.subr.bf16.mxu0 0
    %1511 = vmatpush1.bf16.msra.mxu0 %v413
    %1512 = vmatprep.subr.bf16.mxu0 0
    %1513 = vmatpush1.bf16.msra.mxu0 %v414
    %1514 = vmatprep.subr.bf16.mxu0 0
    %1515 = vmatpush1.bf16.msra.mxu0 0
    %1516 = vmatprep.subr.bf16.mxu0 0
    %1517 = vmatpush1.bf16.msra.mxu0 0
    %1518 = vmatprep.subr.bf16.mxu0 0
    %1519 = vmatpush1.bf16.msra.mxu0 0
    %1520 = vmatprep.subr.bf16.mxu0 0
    %1521 = vmatpush1.bf16.msra.mxu0 0
    %1522 = vmatprep.subr.bf16.mxu0 0
    %1523 = vmatpush1.bf16.msra.mxu0 0
    %1524 = vmatprep.subr.bf16.mxu0 0
    %1525 = vmatpush1.bf16.msra.mxu0 0
    %1526 = vmatprep.subr.bf16.mxu0 0
    %1527 = vmatpush1.bf16.msra.mxu0 0
    %1528 = vmatprep.subr.bf16.mxu0 0
    %1529 = vmatpush1.bf16.msra.mxu0 0
    %1530 = vmatprep.subr.bf16.mxu0 0
    %1531 = vmatpush1.bf16.msra.mxu0 0
    %1532 = vmatprep.subr.bf16.mxu0 0
    %1533 = vmatpush1.bf16.msra.mxu0 0
    %1534 = vmatprep.subr.bf16.mxu0 0
    %1535 = vmatpush1.bf16.msra.mxu0 0
    %1536 = vmatprep.subr.bf16.mxu0 0
    %1537 = vmatpush1.bf16.msra.mxu0 0
    %1538 = vmatprep.subr.bf16.mxu0 0
    %1539 = vmatpush1.bf16.msra.mxu0 0
    %1540 = vmatprep.subr.bf16.mxu0 0
    %1541 = vmatpush1.bf16.msra.mxu0 0
    %1542 = vmatprep.mubr.bf16.mxu0 0
    %1543 = vmatmul.mubr.bf16.gmra.mrb[0].mxu0 %v1508
    %v1544 = vpop.f32.mrb[0].mxu0
    %v1545 = vadd.f32 0.0, %v1544
    %v1546 = vpop.f32.mrb[0].mxu0
    %v1547 = vpop.f32.mrb[0].mxu0
    %v1548 = vpop.f32.mrb[0].mxu0
    %1549 = vdwg.mxu0
    %v1550 = vadd.f32 %v1507, %v1545
    %v1551 = vxor.u32 %v1550, 2147483648
    %v1552 = vmul.f32 %v1551, 1.442695
    %v1553 = vpow.pop %v1552
    %v1554 = vadd.f32 %v1553, 1.0
    %v1555 = vrcp.pop %v1554
    %v1556 = vmul.f32 1.0, %v1555
    %v1557 = vtanh.pop %v1550
    %v1558 = vmul.f32 %v1556, %v1416
    %1560 = vrot.lane.b32.xlu0 %v1557, 32
    %v1561 = vpop.permute.xlu0 %1560
    %v1563 = vmul.f32 %v1556, %v1561
    %1565 = vrot.lane.b32.xlu0 %v1563, 32
    %v1566 = vpop.permute.xlu0 %1565
    %v1568 = vadd.f32 %v1558, %v1566
    %v1569 = vtanh.pop %v1568
    %1571 = vrot.lane.b32.xlu0 %v1569, 32
    %v1572 = vpop.permute.xlu0 %1571
    %v1574 = vmul.f32 %v1556, %v1572
    %v1575 = vpack.c.bf16 %v1574, %v1574
    %1577 = vrot.lane.b32.xlu0 %v1575, 64
    %v1578 = vpop.permute.xlu0 %1577
    %1580 = vrot.lane.b32.xlu0 %v1505, 96
    %v1581 = vpop.permute.xlu0 %1580
    %v1584 = vsel %vm318, %v1578, %v1581
    %v1585 = vsel %vm521, %v1584, 0
    %1587 = vmatprep.subr.bf16.mxu0 0
    %1588 = vmatpush1.bf16.msra.mxu0 %v513
    %1589 = vmatprep.subr.bf16.mxu0 0
    %1590 = vmatpush1.bf16.msra.mxu0 %v514
    %1591 = vmatprep.subr.bf16.mxu0 0
    %1592 = vmatpush1.bf16.msra.mxu0 %v515
    %1593 = vmatprep.subr.bf16.mxu0 0
    %1594 = vmatpush1.bf16.msra.mxu0 %v516
    %1595 = vmatprep.subr.bf16.mxu0 0
    %1596 = vmatpush1.bf16.msra.mxu0 0
    %1597 = vmatprep.subr.bf16.mxu0 0
    %1598 = vmatpush1.bf16.msra.mxu0 0
    %1599 = vmatprep.subr.bf16.mxu0 0
    %1600 = vmatpush1.bf16.msra.mxu0 0
    %1601 = vmatprep.subr.bf16.mxu0 0
    %1602 = vmatpush1.bf16.msra.mxu0 0
    %1603 = vmatprep.subr.bf16.mxu0 0
    %1604 = vmatpush1.bf16.msra.mxu0 0
    %1605 = vmatprep.subr.bf16.mxu0 0
    %1606 = vmatpush1.bf16.msra.mxu0 0
    %1607 = vmatprep.subr.bf16.mxu0 0
    %1608 = vmatpush1.bf16.msra.mxu0 0
    %1609 = vmatprep.subr.bf16.mxu0 0
    %1610 = vmatpush1.bf16.msra.mxu0 0
    %1611 = vmatprep.subr.bf16.mxu0 0
    %1612 = vmatpush1.bf16.msra.mxu0 0
    %1613 = vmatprep.subr.bf16.mxu0 0
    %1614 = vmatpush1.bf16.msra.mxu0 0
    %1615 = vmatprep.subr.bf16.mxu0 0
    %1616 = vmatpush1.bf16.msra.mxu0 0
    %1617 = vmatprep.subr.bf16.mxu0 0
    %1618 = vmatpush1.bf16.msra.mxu0 0
    %1619 = vmatprep.mubr.bf16.mxu0 0
    %1620 = vmatmul.mubr.bf16.gmra.mrb[0].mxu0 %v1585
    %v1621 = vpop.f32.mrb[0].mxu0
    %v1622 = vadd.f32 %v495, %v1621
    %v1623 = vpop.f32.mrb[0].mxu0
    %v1624 = vpop.f32.mrb[0].mxu0
    %v1625 = vpop.f32.mrb[0].mxu0
    %1626 = vdwg.mxu0
    %v1627 = vxor.u32 %v1622, 2147483648
    %v1628 = vmul.f32 %v1627, 1.442695
    %v1629 = vpow.pop %v1628
    %v1630 = vadd.f32 %v1629, 1.0
    %v1631 = vrcp.pop %v1630
    %v1632 = vmul.f32 1.0, %v1631
    %v1633 = vtanh.pop %v1622
    %v1634 = vmul.f32 %v1632, %v1492
    %1636 = vrot.lane.b32.xlu0 %v1633, 32
    %v1637 = vpop.permute.xlu0 %1636
    %v1639 = vmul.f32 %v1632, %v1637
    %1641 = vrot.lane.b32.xlu0 %v1639, 32
    %v1642 = vpop.permute.xlu0 %1641
    %v1644 = vadd.f32 %v1634, %v1642
    %v1645 = vtanh.pop %v1644
    %1647 = vrot.lane.b32.xlu0 %v1645, 32
    %v1648 = vpop.permute.xlu0 %1647
    %v1650 = vmul.f32 %v1632, %v1648
    %1652 = vrot.lane.b32.xlu0 %v1650, 64
    %v1653 = vpop.permute.xlu0 %1652
    %s1655 = scalar_lea.vmem [#allocation3], 56
    %1656 = vst.msk [vmem:[%s1655] sm:$0xff] %vm318, %v1653
    %v1657 = vld [vmem:[#allocation3] sm:$0xff]
    %v1659 = vlaneseq
    %v1660 = vshrl.u32 %v1659, 7
    %v1661 = vsub.s32 0, %v1660
    %v1662 = vrot.slane %v265, %v1661
    %v1664 = vmul.f32 %v1657, %v1662
    %v1665 = vsel %vm318, %v1664, 0.0
    %1666 = vadd.xlane.f32.xlu0 %v1665
    %v1667 = vpop.xlane.xlu0 %1666
    %v1668 = vld [vmem:[%s743] sm:$0xff]
    %v1669 = vmul.f32 %v1668, %v1662
    %v1670 = vsel %vm318, %v1669, 0.0
    %1671 = vadd.xlane.f32.xlu0 %v1670
    %v1672 = vpop.xlane.xlu0 %1671
    %v1673 = vld [vmem:[%s895] sm:$0xff]
    %v1674 = vmul.f32 %v1673, %v1662
    %v1675 = vsel %vm318, %v1674, 0.0
    %1676 = vadd.xlane.f32.xlu0 %v1675
    %v1677 = vpop.xlane.xlu0 %1676
    %v1678 = vld [vmem:[%s1047] sm:$0xff]
    %v1679 = vmul.f32 %v1678, %v1662
    %v1680 = vsel %vm318, %v1679, 0.0
    %1681 = vadd.xlane.f32.xlu0 %v1680
    %v1682 = vpop.xlane.xlu0 %1681
    %v1683 = vld [vmem:[%s1199] sm:$0xff]
    %v1684 = vmul.f32 %v1683, %v1662
    %v1685 = vsel %vm318, %v1684, 0.0
    %1686 = vadd.xlane.f32.xlu0 %v1685
    %v1687 = vpop.xlane.xlu0 %1686
    %v1688 = vld [vmem:[%s1351] sm:$0xff]
    %v1689 = vmul.f32 %v1688, %v1662
    %v1690 = vsel %vm318, %v1689, 0.0
    %1691 = vadd.xlane.f32.xlu0 %v1690
    %v1692 = vpop.xlane.xlu0 %1691
    %v1693 = vld [vmem:[%s1503] sm:$0xff]
    %v1694 = vmul.f32 %v1693, %v1662
    %v1695 = vsel %vm318, %v1694, 0.0
    %1696 = vadd.xlane.f32.xlu0 %v1695
    %v1697 = vpop.xlane.xlu0 %1696
    %v1698 = vld [vmem:[%s1655] sm:$0xff]
    %v1699 = vmul.f32 %v1698, %v1662
    %v1700 = vsel %vm318, %v1699, 0.0
    %1701 = vadd.xlane.f32.xlu0 %v1700
    %v1702 = vpop.xlane.xlu0 %1701
    %vm1703 = vcmask 7168
    %v1704 = vsel %vm1703, %v1667, %v1672
    %vm1705 = vcmask 15360
    %v1706 = vsel %vm1705, %v1704, %v1677
    %vm1707 = vcmask 23552
    %v1708 = vsel %vm1707, %v1706, %v1682
    %vm1709 = vcmask 31744
    %v1710 = vsel %vm1709, %v1708, %v1687
    %vm1711 = vcmask 39936
    %v1712 = vsel %vm1711, %v1710, %v1692
    %vm1713 = vcmask 48128
    %v1714 = vsel %vm1713, %v1712, %v1697
    %vm1715 = vcmask 56320
    %v1716 = vsel %vm1715, %v1714, %v1702
    %vm1717 = vcmask 64512
    %v1718 = vsel %vm1717, %v1716, -1e+30
    %v1720 = vlaneseq
    %v1721 = vshrl.u32 %v1720, 7
    %v1722 = vsub.s32 0, %v1721
    %v1723 = vrot.slane %v266, %v1722
    %1724 = vset.pattern.permute.xlu0 0
    %1725 = vperm.xlu0 %1724, %v1723
    %v1726 = vpop.permute.xlu0 %1725
    %v1728 = vadd.f32 %v1718, %v1726
    %v1730 = vlaneseq
    %v1731 = vshrl.u32 %v1730, 7
    %v1732 = vsub.s32 0, %v1731
    %v1733 = vrot.slane %v254, %v1732
    %v1743 = vunpack.c.l.b16 %v246
    %v1744 = vunpack.c.l.b16 %v247
    %v1745 = vunpack.c.l.b16 %v248
    %v1746 = vunpack.c.l.b16 %v249
    %v1747 = vunpack.c.l.b16 %v250
    %v1748 = vunpack.c.l.b16 %v251
    %v1749 = vunpack.c.l.b16 %v252
    %v1750 = vunpack.c.l.b16 %v253
    %v1751 = vpack.c.b16 %v1744, %v1743
    %v1752 = vpack.c.b16 %v1746, %v1745
    %v1753 = vpack.c.b16 %v1748, %v1747
    %v1754 = vpack.c.b16 %v1750, %v1749
    %v1759 = vsel %vm521, 0, 0
    %1761 = vmatprep.subr.bf16.mxu0 0
    %1762 = vmatpush1.bf16.msra.mxu0 %v1751
    %1763 = vmatprep.subr.bf16.mxu0 0
    %1764 = vmatpush1.bf16.msra.mxu0 %v1752
    %1765 = vmatprep.subr.bf16.mxu0 0
    %1766 = vmatpush1.bf16.msra.mxu0 %v1753
    %1767 = vmatprep.subr.bf16.mxu0 0
    %1768 = vmatpush1.bf16.msra.mxu0 %v1754
    %1769 = vmatprep.subr.bf16.mxu0 0
    %1770 = vmatpush1.bf16.msra.mxu0 0
    %1771 = vmatprep.subr.bf16.mxu0 0
    %1772 = vmatpush1.bf16.msra.mxu0 0
    %1773 = vmatprep.subr.bf16.mxu0 0
    %1774 = vmatpush1.bf16.msra.mxu0 0
    %1775 = vmatprep.subr.bf16.mxu0 0
    %1776 = vmatpush1.bf16.msra.mxu0 0
    %1777 = vmatprep.subr.bf16.mxu0 0
    %1778 = vmatpush1.bf16.msra.mxu0 0
    %1779 = vmatprep.subr.bf16.mxu0 0
    %1780 = vmatpush1.bf16.msra.mxu0 0
    %1781 = vmatprep.subr.bf16.mxu0 0
    %1782 = vmatpush1.bf16.msra.mxu0 0
    %1783 = vmatprep.subr.bf16.mxu0 0
    %1784 = vmatpush1.bf16.msra.mxu0 0
    %1785 = vmatprep.subr.bf16.mxu0 0
    %1786 = vmatpush1.bf16.msra.mxu0 0
    %1787 = vmatprep.subr.bf16.mxu0 0
    %1788 = vmatpush1.bf16.msra.mxu0 0
    %1789 = vmatprep.subr.bf16.mxu0 0
    %1790 = vmatpush1.bf16.msra.mxu0 0
    %1791 = vmatprep.subr.bf16.mxu0 0
    %1792 = vmatpush1.bf16.msra.mxu0 0
    %1793 = vmatprep.mubr.bf16.mxu0 0
    %1794 = vmatmul.mubr.bf16.gmra.mrb[0].mxu0 %v1759
    %v1795 = vpop.f32.mrb[0].mxu0
    %v1796 = vadd.f32 %v1733, %v1795
    %v1797 = vpop.f32.mrb[0].mxu0
    %v1798 = vpop.f32.mrb[0].mxu0
    %v1799 = vpop.f32.mrb[0].mxu0
    %1800 = vdwg.mxu0
    %v1801 = vxor.u32 %v1796, 2147483648
    %v1802 = vmul.f32 %v1801, 1.442695
    %v1803 = vpow.pop %v1802
    %v1804 = vadd.f32 %v1803, 1.0
    %v1805 = vrcp.pop %v1804
    %v1806 = vmul.f32 1.0, %v1805
    %v1807 = vtanh.pop %v1796
    %v1808 = vmul.f32 %v1806, 0.0
    %1810 = vrot.lane.b32.xlu0 %v1807, 32
    %v1811 = vpop.permute.xlu0 %1810
    %v1813 = vmul.f32 %v1806, %v1811
    %1815 = vrot.lane.b32.xlu0 %v1813, 32
    %v1816 = vpop.permute.xlu0 %1815
    %v1818 = vadd.f32 %v1808, %v1816
    %v1819 = vtanh.pop %v1818
    %1821 = vrot.lane.b32.xlu0 %v1819, 32
    %v1822 = vpop.permute.xlu0 %1821
    %v1824 = vmul.f32 %v1806, %v1822
    %v1825 = vpack.c.bf16 %v1824, %v1824
    %1827 = vrot.lane.b32.xlu0 %v1825, 64
    %v1828 = vpop.permute.xlu0 %1827
    %v1830 = vsel %vm318, %v1828, 0
    %v1832 = vlaneseq
    %v1833 = vshrl.u32 %v1832, 7
    %v1834 = vsub.s32 0, %v1833
    %v1835 = vrot.slane %v263, %v1834
    %v1845 = vunpack.c.l.b16 %v255
    %v1846 = vunpack.c.l.b16 %v256
    %v1847 = vunpack.c.l.b16 %v257
    %v1848 = vunpack.c.l.b16 %v258
    %v1849 = vunpack.c.l.b16 %v259
    %v1850 = vunpack.c.l.b16 %v260
    %v1851 = vunpack.c.l.b16 %v261
    %v1852 = vunpack.c.l.b16 %v262
    %v1853 = vpack.c.b16 %v1846, %v1845
    %v1854 = vpack.c.b16 %v1848, %v1847
    %v1855 = vpack.c.b16 %v1850, %v1849
    %v1856 = vpack.c.b16 %v1852, %v1851
    %v1861 = vsel %vm521, %v1830, 0
    %1863 = vmatprep.subr.bf16.mxu0 0
    %1864 = vmatpush1.bf16.msra.mxu0 %v1853
    %1865 = vmatprep.subr.bf16.mxu0 0
    %1866 = vmatpush1.bf16.msra.mxu0 %v1854
    %1867 = vmatprep.subr.bf16.mxu0 0
    %1868 = vmatpush1.bf16.msra.mxu0 %v1855
    %1869 = vmatprep.subr.bf16.mxu0 0
    %1870 = vmatpush1.bf16.msra.mxu0 %v1856
    %1871 = vmatprep.subr.bf16.mxu0 0
    %1872 = vmatpush1.bf16.msra.mxu0 0
    %1873 = vmatprep.subr.bf16.mxu0 0
    %1874 = vmatpush1.bf16.msra.mxu0 0
    %1875 = vmatprep.subr.bf16.mxu0 0
    %1876 = vmatpush1.bf16.msra.mxu0 0
    %1877 = vmatprep.subr.bf16.mxu0 0
    %1878 = vmatpush1.bf16.msra.mxu0 0
    %1879 = vmatprep.subr.bf16.mxu0 0
    %1880 = vmatpush1.bf16.msra.mxu0 0
    %1881 = vmatprep.subr.bf16.mxu0 0
    %1882 = vmatpush1.bf16.msra.mxu0 0
    %1883 = vmatprep.subr.bf16.mxu0 0
    %1884 = vmatpush1.bf16.msra.mxu0 0
    %1885 = vmatprep.subr.bf16.mxu0 0
    %1886 = vmatpush1.bf16.msra.mxu0 0
    %1887 = vmatprep.subr.bf16.mxu0 0
    %1888 = vmatpush1.bf16.msra.mxu0 0
    %1889 = vmatprep.subr.bf16.mxu0 0
    %1890 = vmatpush1.bf16.msra.mxu0 0
    %1891 = vmatprep.subr.bf16.mxu0 0
    %1892 = vmatpush1.bf16.msra.mxu0 0
    %1893 = vmatprep.subr.bf16.mxu0 0
    %1894 = vmatpush1.bf16.msra.mxu0 0
    %1895 = vmatprep.mubr.bf16.mxu0 0
    %1896 = vmatmul.mubr.bf16.gmra.mrb[0].mxu0 %v1861
    %v1897 = vpop.f32.mrb[0].mxu0
    %v1898 = vadd.f32 %v1835, %v1897
    %v1899 = vpop.f32.mrb[0].mxu0
    %v1900 = vpop.f32.mrb[0].mxu0
    %v1901 = vpop.f32.mrb[0].mxu0
    %1902 = vdwg.mxu0
    %v1903 = vxor.u32 %v1898, 2147483648
    %v1904 = vmul.f32 %v1903, 1.442695
    %v1905 = vpow.pop %v1904
    %v1906 = vadd.f32 %v1905, 1.0
    %v1907 = vrcp.pop %v1906
    %v1908 = vmul.f32 1.0, %v1907
    %v1909 = vtanh.pop %v1898
    %v1910 = vmul.f32 %v1908, 0.0
    %1912 = vrot.lane.b32.xlu0 %v1909, 32
    %v1913 = vpop.permute.xlu0 %1912
    %v1915 = vmul.f32 %v1908, %v1913
    %1917 = vrot.lane.b32.xlu0 %v1915, 32
    %v1918 = vpop.permute.xlu0 %1917
    %v1920 = vadd.f32 %v1910, %v1918
    %v1921 = vtanh.pop %v1920
    %1923 = vrot.lane.b32.xlu0 %v1921, 32
    %v1924 = vpop.permute.xlu0 %1923
    %v1926 = vmul.f32 %v1908, %v1924
    %v1928 = vlaneseq
    %v1929 = vshrl.u32 %v1928, 7
    %v1930 = vsub.s32 0, %v1929
    %v1931 = vrot.slane %v264, %v1930
    %1932 = vrot.lane.b32.xlu0 %v1931, 64
    %v1933 = vpop.permute.xlu0 %1932
    %v1935 = vmul.f32 %v1926, %v1933
    %1937 = vrot.lane.b32.xlu0 %v1935, 64
    %v1938 = vpop.permute.xlu0 %1937
    %v1940 = vsel %vm318, %v1938, 0.0
    %1941 = vadd.xlane.f32.xlu0 %v1940
    %v1942 = vpop.xlane.xlu0 %1941
    %v1943 = vadd.f32 %v1728, %v1942
    %1944 = vmax.xlane.f32.xlu0 %v1943
    %v1945 = vpop.xlane.xlu0 %1944
    %v1946 = vsub.f32 %v1943, %v1945
    %v1947 = vmul.f32 %v1946, 1.442695
    %v1948 = vpow.pop %v1947
    %1949 = vadd.xlane.f32.xlu0 %v1948
    %v1950 = vpop.xlane.xlu0 %1949
    %v1951 = vrcp.pop %v1950
    %v1952 = vmul.f32 %v1948, %v1951
    %1953 = vst [vmem:[#allocation30] sm:$0xff] %v1952
    %v1954 = vld [vmem:[#allocation3] sm:$0xff]
    %1956 = vset.pattern.permute.xlu0 0
    %1957 = vperm.xlu0 %1956, %v1952
    %v1958 = vpop.permute.xlu0 %1957
    %v1960 = vmul.f32 %v1958, %v1954
    %v1961 = vadd.f32 %v1960, 0.0
    %v1962 = vld [vmem:[%s743] sm:$0xff]
    %1963 = vset.pattern.permute.xlu0 1
    %1964 = vperm.xlu0 %1963, %v1952
    %v1965 = vpop.permute.xlu0 %1964
    %v1967 = vmul.f32 %v1965, %v1962
    %v1968 = vadd.f32 %v1961, %v1967
    %v1969 = vld [vmem:[%s895] sm:$0xff]
    %1970 = vset.pattern.permute.xlu0 2
    %1971 = vperm.xlu0 %1970, %v1952
    %v1972 = vpop.permute.xlu0 %1971
    %v1974 = vmul.f32 %v1972, %v1969
    %v1975 = vadd.f32 %v1968, %v1974
    %v1976 = vld [vmem:[%s1047] sm:$0xff]
    %1977 = vset.pattern.permute.xlu0 3
    %1978 = vperm.xlu0 %1977, %v1952
    %v1979 = vpop.permute.xlu0 %1978
    %v1981 = vmul.f32 %v1979, %v1976
    %v1982 = vadd.f32 %v1975, %v1981
    %v1983 = vld [vmem:[%s1199] sm:$0xff]
    %1984 = vset.pattern.permute.xlu0 4
    %1985 = vperm.xlu0 %1984, %v1952
    %v1986 = vpop.permute.xlu0 %1985
    %v1988 = vmul.f32 %v1986, %v1983
    %v1989 = vadd.f32 %v1982, %v1988
    %v1990 = vld [vmem:[%s1351] sm:$0xff]
    %1991 = vset.pattern.permute.xlu0 5
    %1992 = vperm.xlu0 %1991, %v1952
    %v1993 = vpop.permute.xlu0 %1992
    %v1995 = vmul.f32 %v1993, %v1990
    %v1996 = vadd.f32 %v1989, %v1995
    %v1997 = vld [vmem:[%s1503] sm:$0xff]
    %1998 = vset.pattern.permute.xlu0 6
    %1999 = vperm.xlu0 %1998, %v1952
    %v2000 = vpop.permute.xlu0 %1999
    %v2002 = vmul.f32 %v2000, %v1997
    %v2003 = vadd.f32 %v1996, %v2002
    %v2004 = vld [vmem:[%s1655] sm:$0xff]
    %2005 = vset.pattern.permute.xlu0 7
    %2006 = vperm.xlu0 %2005, %v1952
    %v2007 = vpop.permute.xlu0 %2006
    %v2009 = vmul.f32 %v2007, %v2004
    %v2010 = vadd.f32 %v2003, %v2009
    %2011 = vst.msk [vmem:[#allocation4] sm:$0xff] %vm318, %v2010
    %v2012 = vpack.c.bf16 %v1926, %v1926
    %v2013 = vpack.c.bf16 %v2010, %v2010
    %2014 = vrot.lane.b32.xlu0 %v1825, 96
    %v2015 = vpop.permute.xlu0 %2014
    %v2018 = vsel %vm318, %v2013, %v2015
    %v2019 = vsel %vm521, %v2018, 0
    %2021 = vmatprep.subr.bf16.mxu0 0
    %2022 = vmatpush1.bf16.msra.mxu0 %v1751
    %2023 = vmatprep.subr.bf16.mxu0 0
    %2024 = vmatpush1.bf16.msra.mxu0 %v1752
    %2025 = vmatprep.subr.bf16.mxu0 0
    %2026 = vmatpush1.bf16.msra.mxu0 %v1753
    %2027 = vmatprep.subr.bf16.mxu0 0
    %2028 = vmatpush1.bf16.msra.mxu0 %v1754
    %2029 = vmatprep.subr.bf16.mxu0 0
    %2030 = vmatpush1.bf16.msra.mxu0 0
    %2031 = vmatprep.subr.bf16.mxu0 0
    %2032 = vmatpush1.bf16.msra.mxu0 0
    %2033 = vmatprep.subr.bf16.mxu0 0
    %2034 = vmatpush1.bf16.msra.mxu0 0
    %2035 = vmatprep.subr.bf16.mxu0 0
    %2036 = vmatpush1.bf16.msra.mxu0 0
    %2037 = vmatprep.subr.bf16.mxu0 0
    %2038 = vmatpush1.bf16.msra.mxu0 0
    %2039 = vmatprep.subr.bf16.mxu0 0
    %2040 = vmatpush1.bf16.msra.mxu0 0
    %2041 = vmatprep.subr.bf16.mxu0 0
    %2042 = vmatpush1.bf16.msra.mxu0 0
    %2043 = vmatprep.subr.bf16.mxu0 0
    %2044 = vmatpush1.bf16.msra.mxu0 0
    %2045 = vmatprep.subr.bf16.mxu0 0
    %2046 = vmatpush1.bf16.msra.mxu0 0
    %2047 = vmatprep.subr.bf16.mxu0 0
    %2048 = vmatpush1.bf16.msra.mxu0 0
    %2049 = vmatprep.subr.bf16.mxu0 0
    %2050 = vmatpush1.bf16.msra.mxu0 0
    %2051 = vmatprep.subr.bf16.mxu0 0
    %2052 = vmatpush1.bf16.msra.mxu0 0
    %2053 = vmatprep.mubr.bf16.mxu0 0
    %2054 = vmatmul.mubr.bf16.gmra.mrb[0].mxu0 %v2019
    %v2055 = vpop.f32.mrb[0].mxu0
    %v2056 = vadd.f32 %v1733, %v2055
    %v2057 = vpop.f32.mrb[0].mxu0
    %v2058 = vpop.f32.mrb[0].mxu0
    %v2059 = vpop.f32.mrb[0].mxu0
    %2060 = vdwg.mxu0
    %v2061 = vxor.u32 %v2056, 2147483648
    %v2062 = vmul.f32 %v2061, 1.442695
    %v2063 = vpow.pop %v2062
    %v2064 = vadd.f32 %v2063, 1.0
    %v2065 = vrcp.pop %v2064
    %v2066 = vmul.f32 1.0, %v2065
    %v2067 = vtanh.pop %v2056
    %v2068 = vmul.f32 %v2066, %v1818
    %2070 = vrot.lane.b32.xlu0 %v2067, 32
    %v2071 = vpop.permute.xlu0 %2070
    %v2073 = vmul.f32 %v2066, %v2071
    %2075 = vrot.lane.b32.xlu0 %v2073, 32
    %v2076 = vpop.permute.xlu0 %2075
    %v2078 = vadd.f32 %v2068, %v2076
    %v2079 = vtanh.pop %v2078
    %2081 = vrot.lane.b32.xlu0 %v2079, 32
    %v2082 = vpop.permute.xlu0 %2081
    %v2084 = vmul.f32 %v2066, %v2082
    %v2085 = vpack.c.bf16 %v2084, %v2084
    %2087 = vrot.lane.b32.xlu0 %v2085, 64
    %v2088 = vpop.permute.xlu0 %2087
    %2090 = vrot.lane.b32.xlu0 %v2012, 96
    %v2091 = vpop.permute.xlu0 %2090
    %v2094 = vsel %vm318, %v2088, %v2091
    %v2095 = vsel %vm521, %v2094, 0
    %2097 = vmatprep.subr.bf16.mxu0 0
    %2098 = vmatpush1.bf16.msra.mxu0 %v1853
    %2099 = vmatprep.subr.bf16.mxu0 0
    %2100 = vmatpush1.bf16.msra.mxu0 %v1854
    %2101 = vmatprep.subr.bf16.mxu0 0
    %2102 = vmatpush1.bf16.msra.mxu0 %v1855
    %2103 = vmatprep.subr.bf16.mxu0 0
    %2104 = vmatpush1.bf16.msra.mxu0 %v1856
    %2105 = vmatprep.subr.bf16.mxu0 0
    %2106 = vmatpush1.bf16.msra.mxu0 0
    %2107 = vmatprep.subr.bf16.mxu0 0
    %2108 = vmatpush1.bf16.msra.mxu0 0
    %2109 = vmatprep.subr.bf16.mxu0 0
    %2110 = vmatpush1.bf16.msra.mxu0 0
    %2111 = vmatprep.subr.bf16.mxu0 0
    %2112 = vmatpush1.bf16.msra.mxu0 0
    %2113 = vmatprep.subr.bf16.mxu0 0
    %2114 = vmatpush1.bf16.msra.mxu0 0
    %2115 = vmatprep.subr.bf16.mxu0 0
    %2116 = vmatpush1.bf16.msra.mxu0 0
    %2117 = vmatprep.subr.bf16.mxu0 0
    %2118 = vmatpush1.bf16.msra.mxu0 0
    %2119 = vmatprep.subr.bf16.mxu0 0
    %2120 = vmatpush1.bf16.msra.mxu0 0
    %2121 = vmatprep.subr.bf16.mxu0 0
    %2122 = vmatpush1.bf16.msra.mxu0 0
    %2123 = vmatprep.subr.bf16.mxu0 0
    %2124 = vmatpush1.bf16.msra.mxu0 0
    %2125 = vmatprep.subr.bf16.mxu0 0
    %2126 = vmatpush1.bf16.msra.mxu0 0
    %2127 = vmatprep.subr.bf16.mxu0 0
    %2128 = vmatpush1.bf16.msra.mxu0 0
    %2129 = vmatprep.mubr.bf16.mxu0 0
    %2130 = vmatmul.mubr.bf16.gmra.mrb[0].mxu0 %v2095
    %v2131 = vpop.f32.mrb[0].mxu0
    %v2132 = vadd.f32 %v1835, %v2131
    %v2133 = vpop.f32.mrb[0].mxu0
    %v2134 = vpop.f32.mrb[0].mxu0
    %v2135 = vpop.f32.mrb[0].mxu0
    %2136 = vdwg.mxu0
    %v2137 = vxor.u32 %v2132, 2147483648
    %v2138 = vmul.f32 %v2137, 1.442695
    %v2139 = vpow.pop %v2138
    %v2140 = vadd.f32 %v2139, 1.0
    %v2141 = vrcp.pop %v2140
    %v2142 = vmul.f32 1.0, %v2141
    %v2143 = vtanh.pop %v2132
    %v2144 = vmul.f32 %v2142, %v1920
    %2146 = vrot.lane.b32.xlu0 %v2143, 32
    %v2147 = vpop.permute.xlu0 %2146
    %v2149 = vmul.f32 %v2142, %v2147
    %2151 = vrot.lane.b32.xlu0 %v2149, 32
    %v2152 = vpop.permute.xlu0 %2151
    %v2154 = vadd.f32 %v2144, %v2152
    %v2155 = vtanh.pop %v2154
    %2157 = vrot.lane.b32.xlu0 %v2155, 32
    %v2158 = vpop.permute.xlu0 %2157
    %v2160 = vmul.f32 %v2142, %v2158
    %v2161 = vmul.f32 %v2160, %v1933
    %2163 = vrot.lane.b32.xlu0 %v2161, 64
    %v2164 = vpop.permute.xlu0 %2163
    %v2166 = vsel %vm318, %v2164, 0.0
    %2167 = vadd.xlane.f32.xlu0 %v2166
    %v2168 = vpop.xlane.xlu0 %2167
    %v2169 = vadd.f32 %v1728, %v2168
    %2170 = vmax.xlane.f32.xlu0 %v2169
    %v2171 = vpop.xlane.xlu0 %2170
    %v2172 = vsub.f32 %v2169, %v2171
    %v2173 = vmul.f32 %v2172, 1.442695
    %v2174 = vpow.pop %v2173
    %2175 = vadd.xlane.f32.xlu0 %v2174
    %v2176 = vpop.xlane.xlu0 %2175
    %v2177 = vrcp.pop %v2176
    %v2178 = vmul.f32 %v2174, %v2177
    %s2179 = scalar_lea.vmem [#allocation30], 8
    %2180 = vst [vmem:[%s2179] sm:$0xff] %v2178
    %v2181 = vld [vmem:[#allocation3] sm:$0xff]
    %2183 = vset.pattern.permute.xlu0 0
    %2184 = vperm.xlu0 %2183, %v2178
    %v2185 = vpop.permute.xlu0 %2184
    %v2187 = vmul.f32 %v2185, %v2181
    %v2188 = vadd.f32 %v2187, 0.0
    %v2189 = vld [vmem:[%s743] sm:$0xff]
    %2190 = vset.pattern.permute.xlu0 1
    %2191 = vperm.xlu0 %2190, %v2178
    %v2192 = vpop.permute.xlu0 %2191
    %v2194 = vmul.f32 %v2192, %v2189
    %v2195 = vadd.f32 %v2188, %v2194
    %v2196 = vld [vmem:[%s895] sm:$0xff]
    %2197 = vset.pattern.permute.xlu0 2
    %2198 = vperm.xlu0 %2197, %v2178
    %v2199 = vpop.permute.xlu0 %2198
    %v2201 = vmul.f32 %v2199, %v2196
    %v2202 = vadd.f32 %v2195, %v2201
    %v2203 = vld [vmem:[%s1047] sm:$0xff]
    %2204 = vset.pattern.permute.xlu0 3
    %2205 = vperm.xlu0 %2204, %v2178
    %v2206 = vpop.permute.xlu0 %2205
    %v2208 = vmul.f32 %v2206, %v2203
    %v2209 = vadd.f32 %v2202, %v2208
    %v2210 = vld [vmem:[%s1199] sm:$0xff]
    %2211 = vset.pattern.permute.xlu0 4
    %2212 = vperm.xlu0 %2211, %v2178
    %v2213 = vpop.permute.xlu0 %2212
    %v2215 = vmul.f32 %v2213, %v2210
    %v2216 = vadd.f32 %v2209, %v2215
    %v2217 = vld [vmem:[%s1351] sm:$0xff]
    %2218 = vset.pattern.permute.xlu0 5
    %2219 = vperm.xlu0 %2218, %v2178
    %v2220 = vpop.permute.xlu0 %2219
    %v2222 = vmul.f32 %v2220, %v2217
    %v2223 = vadd.f32 %v2216, %v2222
    %v2224 = vld [vmem:[%s1503] sm:$0xff]
    %2225 = vset.pattern.permute.xlu0 6
    %2226 = vperm.xlu0 %2225, %v2178
    %v2227 = vpop.permute.xlu0 %2226
    %v2229 = vmul.f32 %v2227, %v2224
    %v2230 = vadd.f32 %v2223, %v2229
    %v2231 = vld [vmem:[%s1655] sm:$0xff]
    %2232 = vset.pattern.permute.xlu0 7
    %2233 = vperm.xlu0 %2232, %v2178
    %v2234 = vpop.permute.xlu0 %2233
    %v2236 = vmul.f32 %v2234, %v2231
    %v2237 = vadd.f32 %v2230, %v2236
    %s2238 = scalar_lea.vmem [#allocation4], 8
    %2239 = vst.msk [vmem:[%s2238] sm:$0xff] %vm318, %v2237
    %v2240 = vpack.c.bf16 %v2160, %v2160
    %v2241 = vpack.c.bf16 %v2237, %v2237
    %2242 = vrot.lane.b32.xlu0 %v2085, 96
    %v2243 = vpop.permute.xlu0 %2242
    %v2246 = vsel %vm318, %v2241, %v2243
    %v2247 = vsel %vm521, %v2246, 0
    %2249 = vmatprep.subr.bf16.mxu0 0
    %2250 = vmatpush1.bf16.msra.mxu0 %v1751
    %2251 = vmatprep.subr.bf16.mxu0 0
    %2252 = vmatpush1.bf16.msra.mxu0 %v1752
    %2253 = vmatprep.subr.bf16.mxu0 0
    %2254 = vmatpush1.bf16.msra.mxu0 %v1753
    %2255 = vmatprep.subr.bf16.mxu0 0
    %2256 = vmatpush1.bf16.msra.mxu0 %v1754
    %2257 = vmatprep.subr.bf16.mxu0 0
    %2258 = vmatpush1.bf16.msra.mxu0 0
    %2259 = vmatprep.subr.bf16.mxu0 0
    %2260 = vmatpush1.bf16.msra.mxu0 0
    %2261 = vmatprep.subr.bf16.mxu0 0
    %2262 = vmatpush1.bf16.msra.mxu0 0
    %2263 = vmatprep.subr.bf16.mxu0 0
    %2264 = vmatpush1.bf16.msra.mxu0 0
    %2265 = vmatprep.subr.bf16.mxu0 0
    %2266 = vmatpush1.bf16.msra.mxu0 0
    %2267 = vmatprep.subr.bf16.mxu0 0
    %2268 = vmatpush1.bf16.msra.mxu0 0
    %2269 = vmatprep.subr.bf16.mxu0 0
    %2270 = vmatpush1.bf16.msra.mxu0 0
    %2271 = vmatprep.subr.bf16.mxu0 0
    %2272 = vmatpush1.bf16.msra.mxu0 0
    %2273 = vmatprep.subr.bf16.mxu0 0
    %2274 = vmatpush1.bf16.msra.mxu0 0
    %2275 = vmatprep.subr.bf16.mxu0 0
    %2276 = vmatpush1.bf16.msra.mxu0 0
    %2277 = vmatprep.subr.bf16.mxu0 0
    %2278 = vmatpush1.bf16.msra.mxu0 0
    %2279 = vmatprep.subr.bf16.mxu0 0
    %2280 = vmatpush1.bf16.msra.mxu0 0
    %2281 = vmatprep.mubr.bf16.mxu0 0
    %2282 = vmatmul.mubr.bf16.gmra.mrb[0].mxu0 %v2247
    %v2283 = vpop.f32.mrb[0].mxu0
    %v2284 = vadd.f32 %v1733, %v2283
    %v2285 = vpop.f32.mrb[0].mxu0
    %v2286 = vpop.f32.mrb[0].mxu0
    %v2287 = vpop.f32.mrb[0].mxu0
    %2288 = vdwg.mxu0
    %v2289 = vxor.u32 %v2284, 2147483648
    %v2290 = vmul.f32 %v2289, 1.442695
    %v2291 = vpow.pop %v2290
    %v2292 = vadd.f32 %v2291, 1.0
    %v2293 = vrcp.pop %v2292
    %v2294 = vmul.f32 1.0, %v2293
    %v2295 = vtanh.pop %v2284
    %v2296 = vmul.f32 %v2294, %v2078
    %2298 = vrot.lane.b32.xlu0 %v2295, 32
    %v2299 = vpop.permute.xlu0 %2298
    %v2301 = vmul.f32 %v2294, %v2299
    %2303 = vrot.lane.b32.xlu0 %v2301, 32
    %v2304 = vpop.permute.xlu0 %2303
    %v2306 = vadd.f32 %v2296, %v2304
    %v2307 = vtanh.pop %v2306
    %2309 = vrot.lane.b32.xlu0 %v2307, 32
    %v2310 = vpop.permute.xlu0 %2309
    %v2312 = vmul.f32 %v2294, %v2310
    %v2313 = vpack.c.bf16 %v2312, %v2312
    %2315 = vrot.lane.b32.xlu0 %v2313, 64
    %v2316 = vpop.permute.xlu0 %2315
    %2318 = vrot.lane.b32.xlu0 %v2240, 96
    %v2319 = vpop.permute.xlu0 %2318
    %v2322 = vsel %vm318, %v2316, %v2319
    %v2323 = vsel %vm521, %v2322, 0
    %2325 = vmatprep.subr.bf16.mxu0 0
    %2326 = vmatpush1.bf16.msra.mxu0 %v1853
    %2327 = vmatprep.subr.bf16.mxu0 0
    %2328 = vmatpush1.bf16.msra.mxu0 %v1854
    %2329 = vmatprep.subr.bf16.mxu0 0
    %2330 = vmatpush1.bf16.msra.mxu0 %v1855
    %2331 = vmatprep.subr.bf16.mxu0 0
    %2332 = vmatpush1.bf16.msra.mxu0 %v1856
    %2333 = vmatprep.subr.bf16.mxu0 0
    %2334 = vmatpush1.bf16.msra.mxu0 0
    %2335 = vmatprep.subr.bf16.mxu0 0
    %2336 = vmatpush1.bf16.msra.mxu0 0
    %2337 = vmatprep.subr.bf16.mxu0 0
    %2338 = vmatpush1.bf16.msra.mxu0 0
    %2339 = vmatprep.subr.bf16.mxu0 0
    %2340 = vmatpush1.bf16.msra.mxu0 0
    %2341 = vmatprep.subr.bf16.mxu0 0
    %2342 = vmatpush1.bf16.msra.mxu0 0
    %2343 = vmatprep.subr.bf16.mxu0 0
    %2344 = vmatpush1.bf16.msra.mxu0 0
    %2345 = vmatprep.subr.bf16.mxu0 0
    %2346 = vmatpush1.bf16.msra.mxu0 0
    %2347 = vmatprep.subr.bf16.mxu0 0
    %2348 = vmatpush1.bf16.msra.mxu0 0
    %2349 = vmatprep.subr.bf16.mxu0 0
    %2350 = vmatpush1.bf16.msra.mxu0 0
    %2351 = vmatprep.subr.bf16.mxu0 0
    %2352 = vmatpush1.bf16.msra.mxu0 0
    %2353 = vmatprep.subr.bf16.mxu0 0
    %2354 = vmatpush1.bf16.msra.mxu0 0
    %2355 = vmatprep.subr.bf16.mxu0 0
    %2356 = vmatpush1.bf16.msra.mxu0 0
    %2357 = vmatprep.mubr.bf16.mxu0 0
    %2358 = vmatmul.mubr.bf16.gmra.mrb[0].mxu0 %v2323
    %v2359 = vpop.f32.mrb[0].mxu0
    %v2360 = vadd.f32 %v1835, %v2359
    %v2361 = vpop.f32.mrb[0].mxu0
    %v2362 = vpop.f32.mrb[0].mxu0
    %v2363 = vpop.f32.mrb[0].mxu0
    %2364 = vdwg.mxu0
    %v2365 = vxor.u32 %v2360, 2147483648
    %v2366 = vmul.f32 %v2365, 1.442695
    %v2367 = vpow.pop %v2366
    %v2368 = vadd.f32 %v2367, 1.0
    %v2369 = vrcp.pop %v2368
    %v2370 = vmul.f32 1.0, %v2369
    %v2371 = vtanh.pop %v2360
    %v2372 = vmul.f32 %v2370, %v2154
    %2374 = vrot.lane.b32.xlu0 %v2371, 32
    %v2375 = vpop.permute.xlu0 %2374
    %v2377 = vmul.f32 %v2370, %v2375
    %2379 = vrot.lane.b32.xlu0 %v2377, 32
    %v2380 = vpop.permute.xlu0 %2379
    %v2382 = vadd.f32 %v2372, %v2380
    %v2383 = vtanh.pop %v2382
    %2385 = vrot.lane.b32.xlu0 %v2383, 32
    %v2386 = vpop.permute.xlu0 %2385
    %v2388 = vmul.f32 %v2370, %v2386
    %v2389 = vmul.f32 %v2388, %v1933
    %2391 = vrot.lane.b32.xlu0 %v2389, 64
    %v2392 = vpop.permute.xlu0 %2391
    %v2394 = vsel %vm318, %v2392, 0.0
    %2395 = vadd.xlane.f32.xlu0 %v2394
    %v2396 = vpop.xlane.xlu0 %2395
    %v2397 = vadd.f32 %v1728, %v2396
    %2398 = vmax.xlane.f32.xlu0 %v2397
    %v2399 = vpop.xlane.xlu0 %2398
    %v2400 = vsub.f32 %v2397, %v2399
    %v2401 = vmul.f32 %v2400, 1.442695
    %v2402 = vpow.pop %v2401
    %2403 = vadd.xlane.f32.xlu0 %v2402
    %v2404 = vpop.xlane.xlu0 %2403
    %v2405 = vrcp.pop %v2404
    %v2406 = vmul.f32 %v2402, %v2405
    %s2407 = scalar_lea.vmem [#allocation30], 16
    %2408 = vst [vmem:[%s2407] sm:$0xff] %v2406
    %v2409 = vld [vmem:[#allocation3] sm:$0xff]
    %2411 = vset.pattern.permute.xlu0 0
    %2412 = vperm.xlu0 %2411, %v2406
    %v2413 = vpop.permute.xlu0 %2412
    %v2415 = vmul.f32 %v2413, %v2409
    %v2416 = vadd.f32 %v2415, 0.0
    %v2417 = vld [vmem:[%s743] sm:$0xff]
    %2418 = vset.pattern.permute.xlu0 1
    %2419 = vperm.xlu0 %2418, %v2406
    %v2420 = vpop.permute.xlu0 %2419
    %v2422 = vmul.f32 %v2420, %v2417
    %v2423 = vadd.f32 %v2416, %v2422
    %v2424 = vld [vmem:[%s895] sm:$0xff]
    %2425 = vset.pattern.permute.xlu0 2
    %2426 = vperm.xlu0 %2425, %v2406
    %v2427 = vpop.permute.xlu0 %2426
    %v2429 = vmul.f32 %v2427, %v2424
    %v2430 = vadd.f32 %v2423, %v2429
    %v2431 = vld [vmem:[%s1047] sm:$0xff]
    %2432 = vset.pattern.permute.xlu0 3
    %2433 = vperm.xlu0 %2432, %v2406
    %v2434 = vpop.permute.xlu0 %2433
    %v2436 = vmul.f32 %v2434, %v2431
    %v2437 = vadd.f32 %v2430, %v2436
    %v2438 = vld [vmem:[%s1199] sm:$0xff]
    %2439 = vset.pattern.permute.xlu0 4
    %2440 = vperm.xlu0 %2439, %v2406
    %v2441 = vpop.permute.xlu0 %2440
    %v2443 = vmul.f32 %v2441, %v2438
    %v2444 = vadd.f32 %v2437, %v2443
    %v2445 = vld [vmem:[%s1351] sm:$0xff]
    %2446 = vset.pattern.permute.xlu0 5
    %2447 = vperm.xlu0 %2446, %v2406
    %v2448 = vpop.permute.xlu0 %2447
    %v2450 = vmul.f32 %v2448, %v2445
    %v2451 = vadd.f32 %v2444, %v2450
    %v2452 = vld [vmem:[%s1503] sm:$0xff]
    %2453 = vset.pattern.permute.xlu0 6
    %2454 = vperm.xlu0 %2453, %v2406
    %v2455 = vpop.permute.xlu0 %2454
    %v2457 = vmul.f32 %v2455, %v2452
    %v2458 = vadd.f32 %v2451, %v2457
    %v2459 = vld [vmem:[%s1655] sm:$0xff]
    %2460 = vset.pattern.permute.xlu0 7
    %2461 = vperm.xlu0 %2460, %v2406
    %v2462 = vpop.permute.xlu0 %2461
    %v2464 = vmul.f32 %v2462, %v2459
    %v2465 = vadd.f32 %v2458, %v2464
    %s2466 = scalar_lea.vmem [#allocation4], 16
    %2467 = vst.msk [vmem:[%s2466] sm:$0xff] %vm318, %v2465
    %v2468 = vpack.c.bf16 %v2388, %v2388
    %v2469 = vpack.c.bf16 %v2465, %v2465
    %2470 = vrot.lane.b32.xlu0 %v2313, 96
    %v2471 = vpop.permute.xlu0 %2470
    %v2474 = vsel %vm318, %v2469, %v2471
    %v2475 = vsel %vm521, %v2474, 0
    %2477 = vmatprep.subr.bf16.mxu0 0
    %2478 = vmatpush1.bf16.msra.mxu0 %v1751
    %2479 = vmatprep.subr.bf16.mxu0 0
    %2480 = vmatpush1.bf16.msra.mxu0 %v1752
    %2481 = vmatprep.subr.bf16.mxu0 0
    %2482 = vmatpush1.bf16.msra.mxu0 %v1753
    %2483 = vmatprep.subr.bf16.mxu0 0
    %2484 = vmatpush1.bf16.msra.mxu0 %v1754
    %2485 = vmatprep.subr.bf16.mxu0 0
    %2486 = vmatpush1.bf16.msra.mxu0 0
    %2487 = vmatprep.subr.bf16.mxu0 0
    %2488 = vmatpush1.bf16.msra.mxu0 0
    %2489 = vmatprep.subr.bf16.mxu0 0
    %2490 = vmatpush1.bf16.msra.mxu0 0
    %2491 = vmatprep.subr.bf16.mxu0 0
    %2492 = vmatpush1.bf16.msra.mxu0 0
    %2493 = vmatprep.subr.bf16.mxu0 0
    %2494 = vmatpush1.bf16.msra.mxu0 0
    %2495 = vmatprep.subr.bf16.mxu0 0
    %2496 = vmatpush1.bf16.msra.mxu0 0
    %2497 = vmatprep.subr.bf16.mxu0 0
    %2498 = vmatpush1.bf16.msra.mxu0 0
    %2499 = vmatprep.subr.bf16.mxu0 0
    %2500 = vmatpush1.bf16.msra.mxu0 0
    %2501 = vmatprep.subr.bf16.mxu0 0
    %2502 = vmatpush1.bf16.msra.mxu0 0
    %2503 = vmatprep.subr.bf16.mxu0 0
    %2504 = vmatpush1.bf16.msra.mxu0 0
    %2505 = vmatprep.subr.bf16.mxu0 0
    %2506 = vmatpush1.bf16.msra.mxu0 0
    %2507 = vmatprep.subr.bf16.mxu0 0
    %2508 = vmatpush1.bf16.msra.mxu0 0
    %2509 = vmatprep.mubr.bf16.mxu0 0
    %2510 = vmatmul.mubr.bf16.gmra.mrb[0].mxu0 %v2475
    %v2511 = vpop.f32.mrb[0].mxu0
    %v2512 = vadd.f32 %v1733, %v2511
    %v2513 = vpop.f32.mrb[0].mxu0
    %v2514 = vpop.f32.mrb[0].mxu0
    %v2515 = vpop.f32.mrb[0].mxu0
    %2516 = vdwg.mxu0
    %v2517 = vxor.u32 %v2512, 2147483648
    %v2518 = vmul.f32 %v2517, 1.442695
    %v2519 = vpow.pop %v2518
    %v2520 = vadd.f32 %v2519, 1.0
    %v2521 = vrcp.pop %v2520
    %v2522 = vmul.f32 1.0, %v2521
    %v2523 = vtanh.pop %v2512
    %v2524 = vmul.f32 %v2522, %v2306
    %2526 = vrot.lane.b32.xlu0 %v2523, 32
    %v2527 = vpop.permute.xlu0 %2526
    %v2529 = vmul.f32 %v2522, %v2527
    %2531 = vrot.lane.b32.xlu0 %v2529, 32
    %v2532 = vpop.permute.xlu0 %2531
    %v2534 = vadd.f32 %v2524, %v2532
    %v2535 = vtanh.pop %v2534
    %2537 = vrot.lane.b32.xlu0 %v2535, 32
    %v2538 = vpop.permute.xlu0 %2537
    %v2540 = vmul.f32 %v2522, %v2538
    %v2541 = vpack.c.bf16 %v2540, %v2540
    %2543 = vrot.lane.b32.xlu0 %v2541, 64
    %v2544 = vpop.permute.xlu0 %2543
    %2546 = vrot.lane.b32.xlu0 %v2468, 96
    %v2547 = vpop.permute.xlu0 %2546
    %v2550 = vsel %vm318, %v2544, %v2547
    %v2551 = vsel %vm521, %v2550, 0
    %2553 = vmatprep.subr.bf16.mxu0 0
    %2554 = vmatpush1.bf16.msra.mxu0 %v1853
    %2555 = vmatprep.subr.bf16.mxu0 0
    %2556 = vmatpush1.bf16.msra.mxu0 %v1854
    %2557 = vmatprep.subr.bf16.mxu0 0
    %2558 = vmatpush1.bf16.msra.mxu0 %v1855
    %2559 = vmatprep.subr.bf16.mxu0 0
    %2560 = vmatpush1.bf16.msra.mxu0 %v1856
    %2561 = vmatprep.subr.bf16.mxu0 0
    %2562 = vmatpush1.bf16.msra.mxu0 0
    %2563 = vmatprep.subr.bf16.mxu0 0
    %2564 = vmatpush1.bf16.msra.mxu0 0
    %2565 = vmatprep.subr.bf16.mxu0 0
    %2566 = vmatpush1.bf16.msra.mxu0 0
    %2567 = vmatprep.subr.bf16.mxu0 0
    %2568 = vmatpush1.bf16.msra.mxu0 0
    %2569 = vmatprep.subr.bf16.mxu0 0
    %2570 = vmatpush1.bf16.msra.mxu0 0
    %2571 = vmatprep.subr.bf16.mxu0 0
    %2572 = vmatpush1.bf16.msra.mxu0 0
    %2573 = vmatprep.subr.bf16.mxu0 0
    %2574 = vmatpush1.bf16.msra.mxu0 0
    %2575 = vmatprep.subr.bf16.mxu0 0
    %2576 = vmatpush1.bf16.msra.mxu0 0
    %2577 = vmatprep.subr.bf16.mxu0 0
    %2578 = vmatpush1.bf16.msra.mxu0 0
    %2579 = vmatprep.subr.bf16.mxu0 0
    %2580 = vmatpush1.bf16.msra.mxu0 0
    %2581 = vmatprep.subr.bf16.mxu0 0
    %2582 = vmatpush1.bf16.msra.mxu0 0
    %2583 = vmatprep.subr.bf16.mxu0 0
    %2584 = vmatpush1.bf16.msra.mxu0 0
    %2585 = vmatprep.mubr.bf16.mxu0 0
    %2586 = vmatmul.mubr.bf16.gmra.mrb[0].mxu0 %v2551
    %v2587 = vpop.f32.mrb[0].mxu0
    %v2588 = vadd.f32 %v1835, %v2587
    %v2589 = vpop.f32.mrb[0].mxu0
    %v2590 = vpop.f32.mrb[0].mxu0
    %v2591 = vpop.f32.mrb[0].mxu0
    %2592 = vdwg.mxu0
    %v2593 = vxor.u32 %v2588, 2147483648
    %v2594 = vmul.f32 %v2593, 1.442695
    %v2595 = vpow.pop %v2594
    %v2596 = vadd.f32 %v2595, 1.0
    %v2597 = vrcp.pop %v2596
    %v2598 = vmul.f32 1.0, %v2597
    %v2599 = vtanh.pop %v2588
    %v2600 = vmul.f32 %v2598, %v2382
    %2602 = vrot.lane.b32.xlu0 %v2599, 32
    %v2603 = vpop.permute.xlu0 %2602
    %v2605 = vmul.f32 %v2598, %v2603
    %2607 = vrot.lane.b32.xlu0 %v2605, 32
    %v2608 = vpop.permute.xlu0 %2607
    %v2610 = vadd.f32 %v2600, %v2608
    %v2611 = vtanh.pop %v2610
    %2613 = vrot.lane.b32.xlu0 %v2611, 32
    %v2614 = vpop.permute.xlu0 %2613
    %v2616 = vmul.f32 %v2598, %v2614
    %v2617 = vmul.f32 %v2616, %v1933
    %2619 = vrot.lane.b32.xlu0 %v2617, 64
    %v2620 = vpop.permute.xlu0 %2619
    %v2622 = vsel %vm318, %v2620, 0.0
    %2623 = vadd.xlane.f32.xlu0 %v2622
    %v2624 = vpop.xlane.xlu0 %2623
    %v2625 = vadd.f32 %v1728, %v2624
    %2626 = vmax.xlane.f32.xlu0 %v2625
    %v2627 = vpop.xlane.xlu0 %2626
    %v2628 = vsub.f32 %v2625, %v2627
    %v2629 = vmul.f32 %v2628, 1.442695
    %v2630 = vpow.pop %v2629
    %2631 = vadd.xlane.f32.xlu0 %v2630
    %v2632 = vpop.xlane.xlu0 %2631
    %v2633 = vrcp.pop %v2632
    %v2634 = vmul.f32 %v2630, %v2633
    %s2635 = scalar_lea.vmem [#allocation30], 24
    %2636 = vst [vmem:[%s2635] sm:$0xff] %v2634
    %v2637 = vld [vmem:[#allocation3] sm:$0xff]
    %2639 = vset.pattern.permute.xlu0 0
    %2640 = vperm.xlu0 %2639, %v2634
    %v2641 = vpop.permute.xlu0 %2640
    %v2643 = vmul.f32 %v2641, %v2637
    %v2644 = vadd.f32 %v2643, 0.0
    %v2645 = vld [vmem:[%s743] sm:$0xff]
    %2646 = vset.pattern.permute.xlu0 1
    %2647 = vperm.xlu0 %2646, %v2634
    %v2648 = vpop.permute.xlu0 %2647
    %v2650 = vmul.f32 %v2648, %v2645
    %v2651 = vadd.f32 %v2644, %v2650
    %v2652 = vld [vmem:[%s895] sm:$0xff]
    %2653 = vset.pattern.permute.xlu0 2
    %2654 = vperm.xlu0 %2653, %v2634
    %v2655 = vpop.permute.xlu0 %2654
    %v2657 = vmul.f32 %v2655, %v2652
    %v2658 = vadd.f32 %v2651, %v2657
    %v2659 = vld [vmem:[%s1047] sm:$0xff]
    %2660 = vset.pattern.permute.xlu0 3
    %2661 = vperm.xlu0 %2660, %v2634
    %v2662 = vpop.permute.xlu0 %2661
    %v2664 = vmul.f32 %v2662, %v2659
    %v2665 = vadd.f32 %v2658, %v2664
    %v2666 = vld [vmem:[%s1199] sm:$0xff]
    %2667 = vset.pattern.permute.xlu0 4
    %2668 = vperm.xlu0 %2667, %v2634
    %v2669 = vpop.permute.xlu0 %2668
    %v2671 = vmul.f32 %v2669, %v2666
    %v2672 = vadd.f32 %v2665, %v2671
    %v2673 = vld [vmem:[%s1351] sm:$0xff]
    %2674 = vset.pattern.permute.xlu0 5
    %2675 = vperm.xlu0 %2674, %v2634
    %v2676 = vpop.permute.xlu0 %2675
    %v2678 = vmul.f32 %v2676, %v2673
    %v2679 = vadd.f32 %v2672, %v2678
    %v2680 = vld [vmem:[%s1503] sm:$0xff]
    %2681 = vset.pattern.permute.xlu0 6
    %2682 = vperm.xlu0 %2681, %v2634
    %v2683 = vpop.permute.xlu0 %2682
    %v2685 = vmul.f32 %v2683, %v2680
    %v2686 = vadd.f32 %v2679, %v2685
    %v2687 = vld [vmem:[%s1655] sm:$0xff]
    %2688 = vset.pattern.permute.xlu0 7
    %2689 = vperm.xlu0 %2688, %v2634
    %v2690 = vpop.permute.xlu0 %2689
    %v2692 = vmul.f32 %v2690, %v2687
    %v2693 = vadd.f32 %v2686, %v2692
    %s2694 = scalar_lea.vmem [#allocation4], 24
    %2695 = vst.msk [vmem:[%s2694] sm:$0xff] %vm318, %v2693
    %v2696 = vpack.c.bf16 %v2616, %v2616
    %v2697 = vpack.c.bf16 %v2693, %v2693
    %2698 = vrot.lane.b32.xlu0 %v2541, 96
    %v2699 = vpop.permute.xlu0 %2698
    %v2702 = vsel %vm318, %v2697, %v2699
    %v2703 = vsel %vm521, %v2702, 0
    %2705 = vmatprep.subr.bf16.mxu0 0
    %2706 = vmatpush1.bf16.msra.mxu0 %v1751
    %2707 = vmatprep.subr.bf16.mxu0 0
    %2708 = vmatpush1.bf16.msra.mxu0 %v1752
    %2709 = vmatprep.subr.bf16.mxu0 0
    %2710 = vmatpush1.bf16.msra.mxu0 %v1753
    %2711 = vmatprep.subr.bf16.mxu0 0
    %2712 = vmatpush1.bf16.msra.mxu0 %v1754
    %2713 = vmatprep.subr.bf16.mxu0 0
    %2714 = vmatpush1.bf16.msra.mxu0 0
    %2715 = vmatprep.subr.bf16.mxu0 0
    %2716 = vmatpush1.bf16.msra.mxu0 0
    %2717 = vmatprep.subr.bf16.mxu0 0
    %2718 = vmatpush1.bf16.msra.mxu0 0
    %2719 = vmatprep.subr.bf16.mxu0 0
    %2720 = vmatpush1.bf16.msra.mxu0 0
    %2721 = vmatprep.subr.bf16.mxu0 0
    %2722 = vmatpush1.bf16.msra.mxu0 0
    %2723 = vmatprep.subr.bf16.mxu0 0
    %2724 = vmatpush1.bf16.msra.mxu0 0
    %2725 = vmatprep.subr.bf16.mxu0 0
    %2726 = vmatpush1.bf16.msra.mxu0 0
    %2727 = vmatprep.subr.bf16.mxu0 0
    %2728 = vmatpush1.bf16.msra.mxu0 0
    %2729 = vmatprep.subr.bf16.mxu0 0
    %2730 = vmatpush1.bf16.msra.mxu0 0
    %2731 = vmatprep.subr.bf16.mxu0 0
    %2732 = vmatpush1.bf16.msra.mxu0 0
    %2733 = vmatprep.subr.bf16.mxu0 0
    %2734 = vmatpush1.bf16.msra.mxu0 0
    %2735 = vmatprep.subr.bf16.mxu0 0
    %2736 = vmatpush1.bf16.msra.mxu0 0
    %2737 = vmatprep.mubr.bf16.mxu0 0
    %2738 = vmatmul.mubr.bf16.gmra.mrb[0].mxu0 %v2703
    %v2739 = vpop.f32.mrb[0].mxu0
    %v2740 = vadd.f32 %v1733, %v2739
    %v2741 = vpop.f32.mrb[0].mxu0
    %v2742 = vpop.f32.mrb[0].mxu0
    %v2743 = vpop.f32.mrb[0].mxu0
    %2744 = vdwg.mxu0
    %v2745 = vxor.u32 %v2740, 2147483648
    %v2746 = vmul.f32 %v2745, 1.442695
    %v2747 = vpow.pop %v2746
    %v2748 = vadd.f32 %v2747, 1.0
    %v2749 = vrcp.pop %v2748
    %v2750 = vmul.f32 1.0, %v2749
    %v2751 = vtanh.pop %v2740
    %v2752 = vmul.f32 %v2750, %v2534
    %2754 = vrot.lane.b32.xlu0 %v2751, 32
    %v2755 = vpop.permute.xlu0 %2754
    %v2757 = vmul.f32 %v2750, %v2755
    %2759 = vrot.lane.b32.xlu0 %v2757, 32
    %v2760 = vpop.permute.xlu0 %2759
    %v2762 = vadd.f32 %v2752, %v2760
    %v2763 = vtanh.pop %v2762
    %2765 = vrot.lane.b32.xlu0 %v2763, 32
    %v2766 = vpop.permute.xlu0 %2765
    %v2768 = vmul.f32 %v2750, %v2766
    %v2769 = vpack.c.bf16 %v2768, %v2768
    %2771 = vrot.lane.b32.xlu0 %v2769, 64
    %v2772 = vpop.permute.xlu0 %2771
    %2774 = vrot.lane.b32.xlu0 %v2696, 96
    %v2775 = vpop.permute.xlu0 %2774
    %v2778 = vsel %vm318, %v2772, %v2775
    %v2779 = vsel %vm521, %v2778, 0
    %2781 = vmatprep.subr.bf16.mxu0 0
    %2782 = vmatpush1.bf16.msra.mxu0 %v1853
    %2783 = vmatprep.subr.bf16.mxu0 0
    %2784 = vmatpush1.bf16.msra.mxu0 %v1854
    %2785 = vmatprep.subr.bf16.mxu0 0
    %2786 = vmatpush1.bf16.msra.mxu0 %v1855
    %2787 = vmatprep.subr.bf16.mxu0 0
    %2788 = vmatpush1.bf16.msra.mxu0 %v1856
    %2789 = vmatprep.subr.bf16.mxu0 0
    %2790 = vmatpush1.bf16.msra.mxu0 0
    %2791 = vmatprep.subr.bf16.mxu0 0
    %2792 = vmatpush1.bf16.msra.mxu0 0
    %2793 = vmatprep.subr.bf16.mxu0 0
    %2794 = vmatpush1.bf16.msra.mxu0 0
    %2795 = vmatprep.subr.bf16.mxu0 0
    %2796 = vmatpush1.bf16.msra.mxu0 0
    %2797 = vmatprep.subr.bf16.mxu0 0
    %2798 = vmatpush1.bf16.msra.mxu0 0
    %2799 = vmatprep.subr.bf16.mxu0 0
    %2800 = vmatpush1.bf16.msra.mxu0 0
    %2801 = vmatprep.subr.bf16.mxu0 0
    %2802 = vmatpush1.bf16.msra.mxu0 0
    %2803 = vmatprep.subr.bf16.mxu0 0
    %2804 = vmatpush1.bf16.msra.mxu0 0
    %2805 = vmatprep.subr.bf16.mxu0 0
    %2806 = vmatpush1.bf16.msra.mxu0 0
    %2807 = vmatprep.subr.bf16.mxu0 0
    %2808 = vmatpush1.bf16.msra.mxu0 0
    %2809 = vmatprep.subr.bf16.mxu0 0
    %2810 = vmatpush1.bf16.msra.mxu0 0
    %2811 = vmatprep.subr.bf16.mxu0 0
    %2812 = vmatpush1.bf16.msra.mxu0 0
    %2813 = vmatprep.mubr.bf16.mxu0 0
    %2814 = vmatmul.mubr.bf16.gmra.mrb[0].mxu0 %v2779
    %v2815 = vpop.f32.mrb[0].mxu0
    %v2816 = vadd.f32 %v1835, %v2815
    %v2817 = vpop.f32.mrb[0].mxu0
    %v2818 = vpop.f32.mrb[0].mxu0
    %v2819 = vpop.f32.mrb[0].mxu0
    %2820 = vdwg.mxu0
    %v2821 = vxor.u32 %v2816, 2147483648
    %v2822 = vmul.f32 %v2821, 1.442695
    %v2823 = vpow.pop %v2822
    %v2824 = vadd.f32 %v2823, 1.0
    %v2825 = vrcp.pop %v2824
    %v2826 = vmul.f32 1.0, %v2825
    %v2827 = vtanh.pop %v2816
    %v2828 = vmul.f32 %v2826, %v2610
    %2830 = vrot.lane.b32.xlu0 %v2827, 32
    %v2831 = vpop.permute.xlu0 %2830
    %v2833 = vmul.f32 %v2826, %v2831
    %2835 = vrot.lane.b32.xlu0 %v2833, 32
    %v2836 = vpop.permute.xlu0 %2835
    %v2838 = vadd.f32 %v2828, %v2836
    %v2839 = vtanh.pop %v2838
    %2841 = vrot.lane.b32.xlu0 %v2839, 32
    %v2842 = vpop.permute.xlu0 %2841
    %v2844 = vmul.f32 %v2826, %v2842
    %v2845 = vmul.f32 %v2844, %v1933
    %2847 = vrot.lane.b32.xlu0 %v2845, 64
    %v2848 = vpop.permute.xlu0 %2847
    %v2850 = vsel %vm318, %v2848, 0.0
    %2851 = vadd.xlane.f32.xlu0 %v2850
    %v2852 = vpop.xlane.xlu0 %2851
    %v2853 = vadd.f32 %v1728, %v2852
    %2854 = vmax.xlane.f32.xlu0 %v2853
    %v2855 = vpop.xlane.xlu0 %2854
    %v2856 = vsub.f32 %v2853, %v2855
    %v2857 = vmul.f32 %v2856, 1.442695
    %v2858 = vpow.pop %v2857
    %2859 = vadd.xlane.f32.xlu0 %v2858
    %v2860 = vpop.xlane.xlu0 %2859
    %v2861 = vrcp.pop %v2860
    %v2862 = vmul.f32 %v2858, %v2861
    %s2863 = scalar_lea.vmem [#allocation30], 32
    %2864 = vst [vmem:[%s2863] sm:$0xff] %v2862
    %v2865 = vld [vmem:[#allocation3] sm:$0xff]
    %2867 = vset.pattern.permute.xlu0 0
    %2868 = vperm.xlu0 %2867, %v2862
    %v2869 = vpop.permute.xlu0 %2868
    %v2871 = vmul.f32 %v2869, %v2865
    %v2872 = vadd.f32 %v2871, 0.0
    %v2873 = vld [vmem:[%s743] sm:$0xff]
    %2874 = vset.pattern.permute.xlu0 1
    %2875 = vperm.xlu0 %2874, %v2862
    %v2876 = vpop.permute.xlu0 %2875
    %v2878 = vmul.f32 %v2876, %v2873
    %v2879 = vadd.f32 %v2872, %v2878
    %v2880 = vld [vmem:[%s895] sm:$0xff]
    %2881 = vset.pattern.permute.xlu0 2
    %2882 = vperm.xlu0 %2881, %v2862
    %v2883 = vpop.permute.xlu0 %2882
    %v2885 = vmul.f32 %v2883, %v2880
    %v2886 = vadd.f32 %v2879, %v2885
    %v2887 = vld [vmem:[%s1047] sm:$0xff]
    %2888 = vset.pattern.permute.xlu0 3
    %2889 = vperm.xlu0 %2888, %v2862
    %v2890 = vpop.permute.xlu0 %2889
    %v2892 = vmul.f32 %v2890, %v2887
    %v2893 = vadd.f32 %v2886, %v2892
    %v2894 = vld [vmem:[%s1199] sm:$0xff]
    %2895 = vset.pattern.permute.xlu0 4
    %2896 = vperm.xlu0 %2895, %v2862
    %v2897 = vpop.permute.xlu0 %2896
    %v2899 = vmul.f32 %v2897, %v2894
    %v2900 = vadd.f32 %v2893, %v2899
    %v2901 = vld [vmem:[%s1351] sm:$0xff]
    %2902 = vset.pattern.permute.xlu0 5
    %2903 = vperm.xlu0 %2902, %v2862
    %v2904 = vpop.permute.xlu0 %2903
    %v2906 = vmul.f32 %v2904, %v2901
    %v2907 = vadd.f32 %v2900, %v2906
    %v2908 = vld [vmem:[%s1503] sm:$0xff]
    %2909 = vset.pattern.permute.xlu0 6
    %2910 = vperm.xlu0 %2909, %v2862
    %v2911 = vpop.permute.xlu0 %2910
    %v2913 = vmul.f32 %v2911, %v2908
    %v2914 = vadd.f32 %v2907, %v2913
    %v2915 = vld [vmem:[%s1655] sm:$0xff]
    %2916 = vset.pattern.permute.xlu0 7
    %2917 = vperm.xlu0 %2916, %v2862
    %v2918 = vpop.permute.xlu0 %2917
    %v2920 = vmul.f32 %v2918, %v2915
    %v2921 = vadd.f32 %v2914, %v2920
    %s2922 = scalar_lea.vmem [#allocation4], 32
    %2923 = vst.msk [vmem:[%s2922] sm:$0xff] %vm318, %v2921
    %v2924 = vpack.c.bf16 %v2844, %v2844
    %v2925 = vpack.c.bf16 %v2921, %v2921
    %2926 = vrot.lane.b32.xlu0 %v2769, 96
    %v2927 = vpop.permute.xlu0 %2926
    %v2930 = vsel %vm318, %v2925, %v2927
    %v2931 = vsel %vm521, %v2930, 0
    %2933 = vmatprep.subr.bf16.mxu0 0
    %2934 = vmatpush1.bf16.msra.mxu0 %v1751
    %2935 = vmatprep.subr.bf16.mxu0 0
    %2936 = vmatpush1.bf16.msra.mxu0 %v1752
    %2937 = vmatprep.subr.bf16.mxu0 0
    %2938 = vmatpush1.bf16.msra.mxu0 %v1753
    %2939 = vmatprep.subr.bf16.mxu0 0
    %2940 = vmatpush1.bf16.msra.mxu0 %v1754
    %2941 = vmatprep.subr.bf16.mxu0 0
    %2942 = vmatpush1.bf16.msra.mxu0 0
    %2943 = vmatprep.subr.bf16.mxu0 0
    %2944 = vmatpush1.bf16.msra.mxu0 0
    %2945 = vmatprep.subr.bf16.mxu0 0
    %2946 = vmatpush1.bf16.msra.mxu0 0
    %2947 = vmatprep.subr.bf16.mxu0 0
    %2948 = vmatpush1.bf16.msra.mxu0 0
    %2949 = vmatprep.subr.bf16.mxu0 0
    %2950 = vmatpush1.bf16.msra.mxu0 0
    %2951 = vmatprep.subr.bf16.mxu0 0
    %2952 = vmatpush1.bf16.msra.mxu0 0
    %2953 = vmatprep.subr.bf16.mxu0 0
    %2954 = vmatpush1.bf16.msra.mxu0 0
    %2955 = vmatprep.subr.bf16.mxu0 0
    %2956 = vmatpush1.bf16.msra.mxu0 0
    %2957 = vmatprep.subr.bf16.mxu0 0
    %2958 = vmatpush1.bf16.msra.mxu0 0
    %2959 = vmatprep.subr.bf16.mxu0 0
    %2960 = vmatpush1.bf16.msra.mxu0 0
    %2961 = vmatprep.subr.bf16.mxu0 0
    %2962 = vmatpush1.bf16.msra.mxu0 0
    %2963 = vmatprep.subr.bf16.mxu0 0
    %2964 = vmatpush1.bf16.msra.mxu0 0
    %2965 = vmatprep.mubr.bf16.mxu0 0
    %2966 = vmatmul.mubr.bf16.gmra.mrb[0].mxu0 %v2931
    %v2967 = vpop.f32.mrb[0].mxu0
    %v2968 = vadd.f32 %v1733, %v2967
    %v2969 = vpop.f32.mrb[0].mxu0
    %v2970 = vpop.f32.mrb[0].mxu0
    %v2971 = vpop.f32.mrb[0].mxu0
    %2972 = vdwg.mxu0
    %v2973 = vxor.u32 %v2968, 2147483648
    %v2974 = vmul.f32 %v2973, 1.442695
    %v2975 = vpow.pop %v2974
    %v2976 = vadd.f32 %v2975, 1.0
    %v2977 = vrcp.pop %v2976
    %v2978 = vmul.f32 1.0, %v2977
    %v2979 = vtanh.pop %v2968
    %v2980 = vmul.f32 %v2978, %v2762
    %2982 = vrot.lane.b32.xlu0 %v2979, 32
    %v2983 = vpop.permute.xlu0 %2982
    %v2985 = vmul.f32 %v2978, %v2983
    %2987 = vrot.lane.b32.xlu0 %v2985, 32
    %v2988 = vpop.permute.xlu0 %2987
    %v2990 = vadd.f32 %v2980, %v2988
    %v2991 = vtanh.pop %v2990
    %2993 = vrot.lane.b32.xlu0 %v2991, 32
    %v2994 = vpop.permute.xlu0 %2993
    %v2996 = vmul.f32 %v2978, %v2994
    %v2997 = vpack.c.bf16 %v2996, %v2996
    %2999 = vrot.lane.b32.xlu0 %v2997, 64
    %v3000 = vpop.permute.xlu0 %2999
    %3002 = vrot.lane.b32.xlu0 %v2924, 96
    %v3003 = vpop.permute.xlu0 %3002
    %v3006 = vsel %vm318, %v3000, %v3003
    %v3007 = vsel %vm521, %v3006, 0
    %3009 = vmatprep.subr.bf16.mxu0 0
    %3010 = vmatpush1.bf16.msra.mxu0 %v1853
    %3011 = vmatprep.subr.bf16.mxu0 0
    %3012 = vmatpush1.bf16.msra.mxu0 %v1854
    %3013 = vmatprep.subr.bf16.mxu0 0
    %3014 = vmatpush1.bf16.msra.mxu0 %v1855
    %3015 = vmatprep.subr.bf16.mxu0 0
    %3016 = vmatpush1.bf16.msra.mxu0 %v1856
    %3017 = vmatprep.subr.bf16.mxu0 0
    %3018 = vmatpush1.bf16.msra.mxu0 0
    %3019 = vmatprep.subr.bf16.mxu0 0
    %3020 = vmatpush1.bf16.msra.mxu0 0
    %3021 = vmatprep.subr.bf16.mxu0 0
    %3022 = vmatpush1.bf16.msra.mxu0 0
    %3023 = vmatprep.subr.bf16.mxu0 0
    %3024 = vmatpush1.bf16.msra.mxu0 0
    %3025 = vmatprep.subr.bf16.mxu0 0
    %3026 = vmatpush1.bf16.msra.mxu0 0
    %3027 = vmatprep.subr.bf16.mxu0 0
    %3028 = vmatpush1.bf16.msra.mxu0 0
    %3029 = vmatprep.subr.bf16.mxu0 0
    %3030 = vmatpush1.bf16.msra.mxu0 0
    %3031 = vmatprep.subr.bf16.mxu0 0
    %3032 = vmatpush1.bf16.msra.mxu0 0
    %3033 = vmatprep.subr.bf16.mxu0 0
    %3034 = vmatpush1.bf16.msra.mxu0 0
    %3035 = vmatprep.subr.bf16.mxu0 0
    %3036 = vmatpush1.bf16.msra.mxu0 0
    %3037 = vmatprep.subr.bf16.mxu0 0
    %3038 = vmatpush1.bf16.msra.mxu0 0
    %3039 = vmatprep.subr.bf16.mxu0 0
    %3040 = vmatpush1.bf16.msra.mxu0 0
    %3041 = vmatprep.mubr.bf16.mxu0 0
    %3042 = vmatmul.mubr.bf16.gmra.mrb[0].mxu0 %v3007
    %v3043 = vpop.f32.mrb[0].mxu0
    %v3044 = vadd.f32 %v1835, %v3043
    %v3045 = vpop.f32.mrb[0].mxu0
    %v3046 = vpop.f32.mrb[0].mxu0
    %v3047 = vpop.f32.mrb[0].mxu0
    %3048 = vdwg.mxu0
    %v3049 = vxor.u32 %v3044, 2147483648
    %v3050 = vmul.f32 %v3049, 1.442695
    %v3051 = vpow.pop %v3050
    %v3052 = vadd.f32 %v3051, 1.0
    %v3053 = vrcp.pop %v3052
    %v3054 = vmul.f32 1.0, %v3053
    %v3055 = vtanh.pop %v3044
    %v3056 = vmul.f32 %v3054, %v2838
    %3058 = vrot.lane.b32.xlu0 %v3055, 32
    %v3059 = vpop.permute.xlu0 %3058
    %v3061 = vmul.f32 %v3054, %v3059
    %3063 = vrot.lane.b32.xlu0 %v3061, 32
    %v3064 = vpop.permute.xlu0 %3063
    %v3066 = vadd.f32 %v3056, %v3064
    %v3067 = vtanh.pop %v3066
    %3069 = vrot.lane.b32.xlu0 %v3067, 32
    %v3070 = vpop.permute.xlu0 %3069
    %v3072 = vmul.f32 %v3054, %v3070
    %v3073 = vmul.f32 %v3072, %v1933
    %3075 = vrot.lane.b32.xlu0 %v3073, 64
    %v3076 = vpop.permute.xlu0 %3075
    %v3078 = vsel %vm318, %v3076, 0.0
    %3079 = vadd.xlane.f32.xlu0 %v3078
    %v3080 = vpop.xlane.xlu0 %3079
    %v3081 = vadd.f32 %v1728, %v3080
    %3082 = vmax.xlane.f32.xlu0 %v3081
    %v3083 = vpop.xlane.xlu0 %3082
    %v3084 = vsub.f32 %v3081, %v3083
    %v3085 = vmul.f32 %v3084, 1.442695
    %v3086 = vpow.pop %v3085
    %3087 = vadd.xlane.f32.xlu0 %v3086
    %v3088 = vpop.xlane.xlu0 %3087
    %v3089 = vrcp.pop %v3088
    %v3090 = vmul.f32 %v3086, %v3089
    %s3091 = scalar_lea.vmem [#allocation30], 40
    %3092 = vst [vmem:[%s3091] sm:$0xff] %v3090
    %v3093 = vld [vmem:[#allocation3] sm:$0xff]
    %3095 = vset.pattern.permute.xlu0 0
    %3096 = vperm.xlu0 %3095, %v3090
    %v3097 = vpop.permute.xlu0 %3096
    %v3099 = vmul.f32 %v3097, %v3093
    %v3100 = vadd.f32 %v3099, 0.0
    %v3101 = vld [vmem:[%s743] sm:$0xff]
    %3102 = vset.pattern.permute.xlu0 1
    %3103 = vperm.xlu0 %3102, %v3090
    %v3104 = vpop.permute.xlu0 %3103
    %v3106 = vmul.f32 %v3104, %v3101
    %v3107 = vadd.f32 %v3100, %v3106
    %v3108 = vld [vmem:[%s895] sm:$0xff]
    %3109 = vset.pattern.permute.xlu0 2
    %3110 = vperm.xlu0 %3109, %v3090
    %v3111 = vpop.permute.xlu0 %3110
    %v3113 = vmul.f32 %v3111, %v3108
    %v3114 = vadd.f32 %v3107, %v3113
    %v3115 = vld [vmem:[%s1047] sm:$0xff]
    %3116 = vset.pattern.permute.xlu0 3
    %3117 = vperm.xlu0 %3116, %v3090
    %v3118 = vpop.permute.xlu0 %3117
    %v3120 = vmul.f32 %v3118, %v3115
    %v3121 = vadd.f32 %v3114, %v3120
    %v3122 = vld [vmem:[%s1199] sm:$0xff]
    %3123 = vset.pattern.permute.xlu0 4
    %3124 = vperm.xlu0 %3123, %v3090
    %v3125 = vpop.permute.xlu0 %3124
    %v3127 = vmul.f32 %v3125, %v3122
    %v3128 = vadd.f32 %v3121, %v3127
    %v3129 = vld [vmem:[%s1351] sm:$0xff]
    %3130 = vset.pattern.permute.xlu0 5
    %3131 = vperm.xlu0 %3130, %v3090
    %v3132 = vpop.permute.xlu0 %3131
    %v3134 = vmul.f32 %v3132, %v3129
    %v3135 = vadd.f32 %v3128, %v3134
    %v3136 = vld [vmem:[%s1503] sm:$0xff]
    %3137 = vset.pattern.permute.xlu0 6
    %3138 = vperm.xlu0 %3137, %v3090
    %v3139 = vpop.permute.xlu0 %3138
    %v3141 = vmul.f32 %v3139, %v3136
    %v3142 = vadd.f32 %v3135, %v3141
    %v3143 = vld [vmem:[%s1655] sm:$0xff]
    %3144 = vset.pattern.permute.xlu0 7
    %3145 = vperm.xlu0 %3144, %v3090
    %v3146 = vpop.permute.xlu0 %3145
    %v3148 = vmul.f32 %v3146, %v3143
    %v3149 = vadd.f32 %v3142, %v3148
    %s3150 = scalar_lea.vmem [#allocation4], 40
    %3151 = vst.msk [vmem:[%s3150] sm:$0xff] %vm318, %v3149
    %v3152 = vld [vmem:[#allocation4] sm:$0xff]
    %v3153 = vld [vmem:[#allocation4 + $0x8] sm:$0xff]
    %v3154 = vld [vmem:[#allocation4 + $0x10] sm:$0xff]
    %v3155 = vld [vmem:[#allocation4 + $0x18] sm:$0xff]
    %v3156 = vld [vmem:[#allocation4 + $0x20] sm:$0xff]
    %v3157 = vld [vmem:[#allocation4 + $0x28] sm:$0xff]
    %v3158 = vpack.c.bf16 %v3153, %v3152
    %v3159 = vpack.c.bf16 %v3155, %v3154
    %v3160 = vpack.c.bf16 %v3157, %v3156
    %v3161 = vld [vmem:[#allocation26] sm:$0xf]
    %v3162 = vld [vmem:[#allocation26 + $0x4] sm:$0xf]
    %v3163 = vld [vmem:[#allocation26 + $0x8] sm:$0xf]
    %v3164 = vld [vmem:[#allocation26 + $0xc] sm:$0xf]
    %v3165 = vld [vmem:[#allocation27] sm:$0x1]
    %v3167 = vlaneseq
    %v3168 = vshrl.u32 %v3167, 7
    %v3169 = vsub.s32 0, %v3168
    %v3170 = vrot.slane %v3165, %v3169
    %v3176 = vunpack.c.l.b16 %v3161
    %v3177 = vunpack.c.l.b16 %v3162
    %v3178 = vunpack.c.l.b16 %v3163
    %v3179 = vunpack.c.l.b16 %v3164
    %v3180 = vpack.c.b16 %v3177, %v3176
    %v3181 = vpack.c.b16 %v3179, %v3178
    %v3185 = vsel %vm318, %v3158, 0
    %v3188 = vsel %vm318, %v3159, 0
    %v3191 = vsel %vm318, %v3160, 0
    %3193 = vmatprep.subr.bf16.mxu0 0
    %3194 = vmatpush1.bf16.msra.mxu0 %v3180
    %3195 = vmatprep.subr.bf16.mxu0 0
    %3196 = vmatpush1.bf16.msra.mxu0 %v3181
    %3197 = vmatprep.subr.bf16.mxu0 0
    %3198 = vmatpush1.bf16.msra.mxu0 0
    %3199 = vmatprep.subr.bf16.mxu0 0
    %3200 = vmatpush1.bf16.msra.mxu0 0
    %3201 = vmatprep.subr.bf16.mxu0 0
    %3202 = vmatpush1.bf16.msra.mxu0 0
    %3203 = vmatprep.subr.bf16.mxu0 0
    %3204 = vmatpush1.bf16.msra.mxu0 0
    %3205 = vmatprep.subr.bf16.mxu0 0
    %3206 = vmatpush1.bf16.msra.mxu0 0
    %3207 = vmatprep.subr.bf16.mxu0 0
    %3208 = vmatpush1.bf16.msra.mxu0 0
    %3209 = vmatprep.subr.bf16.mxu0 0
    %3210 = vmatpush1.bf16.msra.mxu0 0
    %3211 = vmatprep.subr.bf16.mxu0 0
    %3212 = vmatpush1.bf16.msra.mxu0 0
    %3213 = vmatprep.subr.bf16.mxu0 0
    %3214 = vmatpush1.bf16.msra.mxu0 0
    %3215 = vmatprep.subr.bf16.mxu0 0
    %3216 = vmatpush1.bf16.msra.mxu0 0
    %3217 = vmatprep.subr.bf16.mxu0 0
    %3218 = vmatpush1.bf16.msra.mxu0 0
    %3219 = vmatprep.subr.bf16.mxu0 0
    %3220 = vmatpush1.bf16.msra.mxu0 0
    %3221 = vmatprep.subr.bf16.mxu0 0
    %3222 = vmatpush1.bf16.msra.mxu0 0
    %3223 = vmatprep.subr.bf16.mxu0 0
    %3224 = vmatpush1.bf16.msra.mxu0 0
    %3225 = vmatprep.mubr.bf16.mxu0 0
    %3226 = vmatmul.mubr.bf16.gmra.mrb[0].mxu0 %v3185
    %v3227 = vpop.f32.mrb[0].mxu0
    %v3228 = vadd.f32 %v3170, %v3227
    %v3229 = vpop.f32.mrb[0].mxu0
    %v3230 = vpop.f32.mrb[0].mxu0
    %v3231 = vadd.f32 %v3170, %v3230
    %v3232 = vpop.f32.mrb[0].mxu0
    %3233 = vmatprep.mubr.bf16.mxu0 0
    %3234 = vmatmul.mubr.bf16.gmra.mrb[0].mxu0 %v3188
    %v3235 = vpop.f32.mrb[0].mxu0
    %v3236 = vadd.f32 %v3170, %v3235
    %v3237 = vpop.f32.mrb[0].mxu0
    %v3238 = vpop.f32.mrb[0].mxu0
    %v3239 = vadd.f32 %v3170, %v3238
    %v3240 = vpop.f32.mrb[0].mxu0
    %3241 = vmatprep.mubr.bf16.mxu0 0
    %3242 = vmatmul.mubr.bf16.gmra.mrb[0].mxu0 %v3191
    %v3243 = vpop.f32.mrb[0].mxu0
    %v3244 = vadd.f32 %v3170, %v3243
    %v3245 = vpop.f32.mrb[0].mxu0
    %v3246 = vpop.f32.mrb[0].mxu0
    %v3247 = vadd.f32 %v3170, %v3246
    %v3248 = vpop.f32.mrb[0].mxu0
    %3249 = vdwg.mxu0
    %3250 = vst [vmem:[#allocation29] sm:$0xff] %v3228
    %3251 = vst [vmem:[#allocation29 + $0x8] sm:$0xff] %v3231
    %3252 = vst [vmem:[#allocation29 + $0x10] sm:$0xff] %v3236
    %3253 = vst [vmem:[#allocation29 + $0x18] sm:$0xff] %v3239
    %3254 = vst [vmem:[#allocation29 + $0x20] sm:$0xff] %v3244
    %3255 = vst [vmem:[#allocation29 + $0x28] sm:$0xff] %v3247
    // Predicated region
    $region118: #{tpu_custom_call.1} parent=1 // pred_check
      _
    $region119: #{tpu_custom_call.1} parent=1 // pred_check_branch
      %3257 = sbr.rel (0) target = $region121
    $region120: #{tpu_custom_call.1} parent=1 // pred_region
      %s3259 = ssub.s32 768, 768
      %3260 = vsyncadd [#allocation8], %s3259
      %s3261 = sshll.u32 [#allocation29], 4
      %s3262 = int_to_ptr.vmem [resolvable:$true] %s3261
      %3267 = dma.vmem_to_hbm [thread:$0]  %s3262, 768, %s15, [#allocation8], 128, 128, 8
    $region121: #{tpu_custom_call.1} parent=1 // pred_fallthru
      _
    // Predicated region
    $region122: #{tpu_custom_call.1} parent=1 // pred_check
      _
    $region123: #{tpu_custom_call.1} parent=1 // pred_check_branch
      %3269 = sbr.rel (0) target = $region125
    $region124: #{tpu_custom_call.1} parent=1 // pred_region
      %s3271 = ssub.s32 768, 768
      %3272 = vsyncadd [#allocation31], %s3271
      %s3273 = sshll.u32 [#allocation30], 4
      %s3274 = int_to_ptr.vmem [resolvable:$true] %s3273
      %3279 = dma.vmem_to_hbm [thread:$0]  %s3274, 768, %s16, [#allocation31], 128, 128, 8
    $region125: #{tpu_custom_call.1} parent=1 // pred_fallthru
      _
    // Predicated region
    $region126: #{tpu_custom_call.1} parent=1 // pred_check
      _
    $region127: #{tpu_custom_call.1} parent=1 // pred_check_branch
      %3281 = sbr.rel (0) target = $region129
    $region128: #{tpu_custom_call.1} parent=1 // pred_region
      %3282 = dma.done [#allocation8], 768
    $region129: #{tpu_custom_call.1} parent=1 // pred_fallthru
      _
    // Predicated region
    $region130: #{tpu_custom_call.1} parent=1 // pred_check
      _
    $region131: #{tpu_custom_call.1} parent=1 // pred_check_branch
      %3284 = sbr.rel (0) target = $region133
    $region132: #{tpu_custom_call.1} parent=1 // pred_region
      %3285 = dma.done [#allocation31], 768
    $region133: #{tpu_custom_call.1} parent=1 // pred_fallthru
      _
    %3286 = vsyncpa [#allocation7], 1
    %3287 = vsyncpa [#allocation10], 1
    %3288 = vsyncpa [#allocation13], 1
    %3289 = vsyncpa [#allocation16], 1
    %3290 = vsyncpa [#allocation19], 1
    %3291 = vsyncpa [#allocation22], 1
    %3292 = vsyncpa [#allocation25], 1
    %3293 = vsyncpa [#allocation28], 1
    %3294 = vsyncpa [#allocation8], 1
    %3295 = vsyncpa [#allocation31], 1

</llo_original>
